<compile_context>
chip_gen: v7x
topology: tpu7x:2x2x1
jax: 0.10.0
libtpu: 0.0.40
codegen_flags: <defaults>
</compile_context>

<pallas_src>
import math
import functools

import jax
import jax.numpy as jnp
from jax.experimental import pallas as pl
from jax.experimental.pallas import tpu as pltpu


# ----------------------------------------------------------------------------
# Fused Bottle2neck kernel (one grid step == one batch element).
# ----------------------------------------------------------------------------
def _bottle2neck_kernel(x_ref, w1_ref, b1_ref, s1_ref, t1_ref,
                        wc_ref, bc_ref, sc_ref, tc_ref,
                        w3_ref, b3_ref, s3_ref, t3_ref,
                        wse1_ref, bse1_ref, wse2_ref, bse2_ref,
                        o_ref, *, width, nums, ksize, dilation, t_len,
                        compute_dtype):
    f32 = jnp.float32
    T = t_len
    half = ksize // 2
    pad = half * dilation

    x = x_ref[0]                                  # (T, Cin) in I/O dtype
    xc = x.astype(compute_dtype)

    def conv1_chunk(i):
        # 1x1 conv chunk i + bias + ReLU + BN1 affine (per-channel, so applying
        # it chunk-wise is identical to applying it to the full conv1 output).
        h = jnp.dot(xc, w1_ref[i], preferred_element_type=f32)
        return jnp.maximum(h + b1_ref[i], 0.0) * s1_ref[i] + t1_ref[i]   # (T, width) f32

    zero_rows = jnp.zeros((pad, width), f32)

    ys = []                                       # branch outputs, feed conv3
    sp = None
    for i in range(nums):
        sp = conv1_chunk(i) if i == 0 else sp + conv1_chunk(i)           # (T, width) f32

        # Fused K-tap dilated conv: zero-pad in time, take the K shifted full-T
        # windows, lane-concatenate to (T, K*width), one MXU dot per branch.
        padded = jnp.concatenate([zero_rows, sp, zero_rows], axis=0)      # (T+2*pad, width)
        taps = [padded[k * dilation:k * dilation + T, :] for k in range(ksize)]
        xk = jnp.concatenate(taps, axis=1).astype(compute_dtype)          # (T, K*width)

        y = jnp.dot(xk, wc_ref[i], preferred_element_type=f32)            # (T, width)
        y = jnp.maximum(y + bc_ref[i], 0.0) * sc_ref[i] + tc_ref[i]
        sp = y                                                            # feeds next branch
        ys.append(y)

    ys.append(conv1_chunk(nums))                  # passthrough chunk spx[nums]

    # conv3 (1x1) as a single wide dot over the concatenated branch outputs.
    cat = jnp.concatenate(ys, axis=1).astype(compute_dtype)               # (T, W8)
    z = jnp.dot(cat, w3_ref[...], preferred_element_type=f32)
    z = jnp.maximum(z + b3_ref[...], 0.0) * s3_ref[...] + t3_ref[...]     # (T, planes)

    # ---- SE gate (fused) + residual add ----
    m = jnp.mean(z, axis=0, keepdims=True)        # AdaptiveAvgPool1d(1) -> (1, planes)
    g = jnp.dot(m.astype(compute_dtype), wse1_ref[...],
                preferred_element_type=f32) + bse1_ref[...]
    g = jnp.maximum(g, 0.0)
    g = jnp.dot(g.astype(compute_dtype), wse2_ref[...],
                preferred_element_type=f32) + bse2_ref[...]
    g = jax.nn.sigmoid(g)                         # (1, planes)

    o_ref[0] = (z * g + x.astype(f32)).astype(o_ref.dtype)


# ----------------------------------------------------------------------------
# Parameter repacking (hoisted: run once per parameter set).
# ----------------------------------------------------------------------------
def _bn_affine(prm, n, eps=1e-5):
    gamma, beta, mean, var = prm
    s = gamma / jnp.sqrt(var + eps)
    t = beta - mean * s
    return s.reshape(1, n).astype(jnp.float32), t.reshape(1, n).astype(jnp.float32)


def prepare_params(p, *, compute_dtype=jnp.bfloat16):
    """Repack PyTorch-layout Bottle2neck parameters for the fused kernel."""
    width, nums = p['width'], p['nums']
    scale, K = p['scale'], p['kernel_size']
    Cin = p['conv1_w'].shape[1]
    W8 = width * scale
    planes = p['conv3_w'].shape[0]
    bneck = p['se_w1'].shape[0]
    cdt = compute_dtype

    # conv1 pre-split into per-chunk column blocks (lane-aligned branch inputs).
    w1 = jnp.transpose(p['conv1_w'][:, :, 0])                                 # (Cin, W8)
    w1 = w1.reshape(Cin, scale, width).transpose(1, 0, 2).astype(cdt)         # (scale, Cin, width)
    b1 = p['conv1_b'].reshape(scale, 1, width).astype(jnp.float32)
    s1f, t1f = _bn_affine(p['bn1'], W8)
    s1 = s1f.reshape(scale, 1, width)
    t1 = t1f.reshape(scale, 1, width)

    # Branch convs: per-branch fused tap matrices, row block k = tap k.
    wc = jnp.stack([p['convs'][i][0].transpose(2, 1, 0).reshape(K * width, width)
                    for i in range(nums)]).astype(cdt)                        # (nums, K*width, width)
    bc = jnp.stack([p['convs'][i][1] for i in range(nums)]
                   ).reshape(nums, 1, width).astype(jnp.float32)
    sc_l, tc_l = zip(*[_bn_affine(p['bns'][i], width) for i in range(nums)])
    sc = jnp.stack(sc_l)                                                      # (nums, 1, width)
    tc = jnp.stack(tc_l)

    w3 = jnp.transpose(p['conv3_w'][:, :, 0]).astype(cdt)                     # (W8, planes)
    b3 = p['conv3_b'].reshape(1, planes).astype(jnp.float32)
    s3, t3 = _bn_affine(p['bn3'], planes)

    wse1 = jnp.transpose(p['se_w1'][:, :, 0]).astype(cdt)                     # (planes, bneck)
    bse1 = p['se_b1'].reshape(1, bneck).astype(jnp.float32)
    wse2 = jnp.transpose(p['se_w2'][:, :, 0]).astype(cdt)                     # (bneck, planes)
    bse2 = p['se_b2'].reshape(1, planes).astype(jnp.float32)

    cfg = dict(width=width, nums=nums, scale=scale, kernel_size=K,
               dilation=p['dilation'], Cin=Cin, planes=planes, bneck=bneck,
               compute_dtype=cdt)
    arrays = (w1, b1, s1, t1, wc, bc, sc, tc, w3, b3, s3, t3,
              wse1, bse1, wse2, bse2)
    return cfg, arrays


def _vmem_limit_bytes():
    try:
        cap = int(pltpu.get_tpu_info().vmem_capacity_bytes)
    except Exception:
        cap = 64 * 1024 * 1024
    return max(32 * 1024 * 1024, min((cap * 3) // 4, 112 * 1024 * 1024))


# ----------------------------------------------------------------------------
# Forward pass wrapper.
# ----------------------------------------------------------------------------
def bottle2neck(x_bct, prepped, *, out_dtype=None):
    """Forward pass of Bottle2neck. x_bct: (B, C, T) like the PyTorch module."""
    cfg, w = prepped
    B, Cin, T = x_bct.shape
    width, nums, scale = cfg['width'], cfg['nums'], cfg['scale']
    K, dil = cfg['kernel_size'], cfg['dilation']
    planes, bneck = cfg['planes'], cfg['bneck']
    W8 = width * scale
    cdt = cfg['compute_dtype']
    assert Cin == cfg['Cin']
    assert planes == Cin, "residual add requires planes == inplanes"
    assert K % 2 == 1

    # bf16 boundary I/O in the low-precision configuration halves HBM traffic.
    io_low = jnp.dtype(cdt) != jnp.dtype(jnp.float32)
    in_dtype = jnp.bfloat16 if io_low else jnp.float32
    if out_dtype is None:
        out_dtype = jnp.bfloat16 if io_low else jnp.float32

    x_btc = jnp.transpose(x_bct, (0, 2, 1)).astype(in_dtype)

    kern = functools.partial(_bottle2neck_kernel, width=width, nums=nums,
                             ksize=K, dilation=dil, t_len=T, compute_dtype=cdt)

    const2 = lambda b: (0, 0)
    const3 = lambda b: (0, 0, 0)

    # Advisory cost estimate for XLA's scheduler.
    flops = (2 * B * T * (Cin * W8 + nums * K * width * width + W8 * planes)
             + 4 * B * planes * bneck + 6 * B * T * planes)
    weight_bytes = sum(int(a.size) * a.dtype.itemsize for a in w)
    bytes_accessed = (int(B * T * Cin) * jnp.dtype(in_dtype).itemsize
                      + int(B * T * planes) * jnp.dtype(out_dtype).itemsize
                      + weight_bytes)
    cost = pl.CostEstimate(flops=int(flops),
                           transcendentals=int(B * (planes + bneck)),
                           bytes_accessed=int(bytes_accessed))

    out_btc = pl.pallas_call(
        kern,
        out_shape=jax.ShapeDtypeStruct((B, T, planes), out_dtype),
        grid=(B,),
        in_specs=[
            pl.BlockSpec((1, T, Cin), lambda b: (b, 0, 0)),                 # x (per batch)
            pl.BlockSpec((scale, Cin, width), const3),                      # conv1 W (chunked)
            pl.BlockSpec((scale, 1, width), const3),                        # conv1 b
            pl.BlockSpec((scale, 1, width), const3),                        # bn1 scale
            pl.BlockSpec((scale, 1, width), const3),                        # bn1 shift
            pl.BlockSpec((nums, K * width, width), const3),                 # branch fused taps
            pl.BlockSpec((nums, 1, width), const3),                         # branch biases
            pl.BlockSpec((nums, 1, width), const3),                         # branch bn scale
            pl.BlockSpec((nums, 1, width), const3),                         # branch bn shift
            pl.BlockSpec((W8, planes), const2),                             # conv3 W (wide)
            pl.BlockSpec((1, planes), const2),                              # conv3 b
            pl.BlockSpec((1, planes), const2),                              # bn3 scale
            pl.BlockSpec((1, planes), const2),                              # bn3 shift
            pl.BlockSpec((planes, bneck), const2),                          # SE W1
            pl.BlockSpec((1, bneck), const2),                               # SE b1
            pl.BlockSpec((bneck, planes), const2),                          # SE W2
            pl.BlockSpec((1, planes), const2),                              # SE b2
        ],
        out_specs=pl.BlockSpec((1, T, planes), lambda b: (b, 0, 0)),
        compiler_params=pltpu.CompilerParams(
            dimension_semantics=("parallel",),
            vmem_limit_bytes=_vmem_limit_bytes(),
        ),
        cost_estimate=cost,
    )(x_btc, *w)

    return jnp.transpose(out_btc, (0, 2, 1))                                # back to (B, C, T)


# ----------------------------------------------------------------------------
# Pure-JAX reference (mirrors the PyTorch module, f32, HIGHEST precision).
# ----------------------------------------------------------------------------
def _conv1d_ref(x, w, b, dilation=1):
    B, T, Cin = x.shape
    Cout, _, K = w.shape
    pad = (K // 2) * dilation
    xp = jnp.pad(x, ((0, 0), (pad, pad), (0, 0)))
    y = jnp.zeros((B, T, Cout), jnp.float32)
    for k in range(K):
        y = y + jnp.einsum("btc,oc->bto", xp[:, k * dilation:k * dilation + T, :],
                           w[:, :, k], precision=jax.lax.Precision.HIGHEST)
    return y + b.reshape(1, 1, Cout)


def _bn_eval_ref(x, prm, eps=1e-5):
    gamma, beta, mean, var = prm
    s = gamma / jnp.sqrt(var + eps)
    return x * s + (beta - mean * s)


def bottle2neck_ref(x_bct, p):
    x = jnp.transpose(x_bct, (0, 2, 1)).astype(jnp.float32)
    width, nums, dil = p['width'], p['nums'], p['dilation']
    relu = jax.nn.relu
    h = _bn_eval_ref(relu(_conv1d_ref(x, p['conv1_w'], p['conv1_b'])), p['bn1'])
    outs, sp = [], None
    for i in range(nums):
        chunk = h[..., i * width:(i + 1) * width]
        sp = chunk if i == 0 else sp + chunk
        w, b = p['convs'][i]
        sp = _bn_eval_ref(relu(_conv1d_ref(sp, w, b, dil)), p['bns'][i])
        outs.append(sp)
    cat = jnp.concatenate(outs + [h[..., nums * width:(nums + 1) * width]], axis=-1)
    z = _bn_eval_ref(relu(_conv1d_ref(cat, p['conv3_w'], p['conv3_b'])), p['bn3'])
    m = jnp.mean(z, axis=1, keepdims=True)
    g = relu(jnp.einsum("bxc,oc->bxo", m, p['se_w1'][:, :, 0],
                        precision=jax.lax.Precision.HIGHEST) + p['se_b1'].reshape(1, 1, -1))
    g = jax.nn.sigmoid(jnp.einsum("bxc,oc->bxo", g, p['se_w2'][:, :, 0],
                                  precision=jax.lax.Precision.HIGHEST) + p['se_b2'].reshape(1, 1, -1))
    z = z * g + x
    return jnp.transpose(z, (0, 2, 1))


# ----------------------------------------------------------------------------
# Deterministic parameter construction (PyTorch layouts).
# ----------------------------------------------------------------------------
def make_params(key, inplanes, planes, kernel_size, dilation, scale=8, bottleneck=128):
    width = int(math.floor(planes / scale))
    nums = scale - 1
    keys = iter(jax.random.split(key, 128))

    def conv_w(cout, cin, k):
        return jax.random.normal(next(keys), (cout, cin, k), jnp.float32) / math.sqrt(cin * k)

    def bias(c):
        return 0.02 * jax.random.normal(next(keys), (c,), jnp.float32)

    def bn(c):
        gamma = 1.0 + 0.1 * jax.random.normal(next(keys), (c,), jnp.float32)
        beta = 0.1 * jax.random.normal(next(keys), (c,), jnp.float32)
        mean = 0.1 * jax.random.normal(next(keys), (c,), jnp.float32)
        var = 1.0 + 0.1 * jax.random.uniform(next(keys), (c,), jnp.float32)
        return (gamma, beta, mean, var)

    return {
        'width': width, 'nums': nums, 'scale': scale,
        'kernel_size': kernel_size, 'dilation': dilation,
        'conv1_w': conv_w(width * scale, inplanes, 1),
        'conv1_b': bias(width * scale),
        'bn1': bn(width * scale),
        'convs': [(conv_w(width, width, kernel_size), bias(width)) for _ in range(nums)],
        'bns': [bn(width) for _ in range(nums)],
        'conv3_w': conv_w(planes, width * scale, 1),
        'conv3_b': bias(planes),
        'bn3': bn(planes),
        'se_w1': conv_w(bottleneck, planes, 1), 'se_b1': bias(bottleneck),
        'se_w2': conv_w(planes, bottleneck, 1), 'se_b2': bias(planes),
    }


if __name__ == "__main__":
    key = jax.random.PRNGKey(0)
    kp, kx = jax.random.split(key)
    B, C, T = 2, 64, 16                    # small demo: inplanes = planes = 64
    params = make_params(kp, inplanes=C, planes=C, kernel_size=3, dilation=2,
                         scale=8, bottleneck=128)
    x = jax.random.normal(kx, (B, C, T), jnp.float32)   # PyTorch layout (B, C, T)

    ref = jax.block_until_ready(bottle2neck_ref(x, params))

    # f32 compute path: tight check against the pure-JAX reference.
    prep_f32 = prepare_params(params, compute_dtype=jnp.float32)
    out_f32 = jax.block_until_ready(bottle2neck(x, prep_f32))
    assert out_f32.shape == (B, C, T), out_f32.shape
    err_f32 = float(jnp.max(jnp.abs(out_f32 - ref)))
    assert err_f32 < 5e-2, err_f32

    # bf16 compute path (the performance configuration: bf16 I/O + MXU inputs,
    # f32 accumulation) — loose tolerance check against the f32 reference.
    prep_bf16 = prepare_params(params, compute_dtype=jnp.bfloat16)
    out_bf16 = jax.block_until_ready(bottle2neck(x, prep_bf16))
    assert out_bf16.shape == (B, C, T), out_bf16.shape
    out_bf16_f32 = out_bf16.astype(jnp.float32)
    assert bool(jnp.all(jnp.isfinite(out_bf16_f32)))
    err_bf16 = float(jnp.max(jnp.abs(out_bf16_f32 - ref)))
    assert err_bf16 < 5e-1, err_bf16

    print("KERNEL_OK")
</pallas_src>

<mosaic_0001>
module attributes {stable_mosaic.version = 11 : i64} {
  func.func @_bottle2neck_kernel(%arg0: i32, %arg1: memref<1x16x64xf32, #tpu.memory_space<vmem>>, %arg2: memref<8x64x8xf32, #tpu.memory_space<vmem>>, %arg3: memref<8x1x8xf32, #tpu.memory_space<vmem>>, %arg4: memref<8x1x8xf32, #tpu.memory_space<vmem>>, %arg5: memref<8x1x8xf32, #tpu.memory_space<vmem>>, %arg6: memref<7x24x8xf32, #tpu.memory_space<vmem>>, %arg7: memref<7x1x8xf32, #tpu.memory_space<vmem>>, %arg8: memref<7x1x8xf32, #tpu.memory_space<vmem>>, %arg9: memref<7x1x8xf32, #tpu.memory_space<vmem>>, %arg10: memref<64x64xf32, #tpu.memory_space<vmem>>, %arg11: memref<1x64xf32, #tpu.memory_space<vmem>>, %arg12: memref<1x64xf32, #tpu.memory_space<vmem>>, %arg13: memref<1x64xf32, #tpu.memory_space<vmem>>, %arg14: memref<64x128xf32, #tpu.memory_space<vmem>>, %arg15: memref<1x128xf32, #tpu.memory_space<vmem>>, %arg16: memref<128x64xf32, #tpu.memory_space<vmem>>, %arg17: memref<1x64xf32, #tpu.memory_space<vmem>>, %arg18: memref<1x16x64xf32, #tpu.memory_space<vmem>>) attributes {dimension_semantics = [#tpu.dimension_semantics<parallel>], iteration_bounds = array<i64: 2>, scalar_prefetch = 0 : i64, scratch_operands = 0 : i64, tpu.core_type = #tpu.core_type<tc>, window_params = [{transform_indices = @transform_0, window_bounds = array<i64: 1, 16, 64>}, {pipeline_mode = #tpu.pipeline_mode<synchronous>, transform_indices = @transform_1, window_bounds = array<i64: 8, 64, 8>}, {pipeline_mode = #tpu.pipeline_mode<synchronous>, transform_indices = @transform_2, window_bounds = array<i64: 8, 1, 8>}, {pipeline_mode = #tpu.pipeline_mode<synchronous>, transform_indices = @transform_3, window_bounds = array<i64: 8, 1, 8>}, {pipeline_mode = #tpu.pipeline_mode<synchronous>, transform_indices = @transform_4, window_bounds = array<i64: 8, 1, 8>}, {pipeline_mode = #tpu.pipeline_mode<synchronous>, transform_indices = @transform_5, window_bounds = array<i64: 7, 24, 8>}, {pipeline_mode = #tpu.pipeline_mode<synchronous>, transform_indices = @transform_6, window_bounds = array<i64: 7, 1, 8>}, {pipeline_mode = #tpu.pipeline_mode<synchronous>, transform_indices = @transform_7, window_bounds = array<i64: 7, 1, 8>}, {pipeline_mode = #tpu.pipeline_mode<synchronous>, transform_indices = @transform_8, window_bounds = array<i64: 7, 1, 8>}, {pipeline_mode = #tpu.pipeline_mode<synchronous>, transform_indices = @transform_9, window_bounds = array<i64: 64, 64>}, {pipeline_mode = #tpu.pipeline_mode<synchronous>, transform_indices = @transform_10, window_bounds = array<i64: 1, 64>}, {pipeline_mode = #tpu.pipeline_mode<synchronous>, transform_indices = @transform_11, window_bounds = array<i64: 1, 64>}, {pipeline_mode = #tpu.pipeline_mode<synchronous>, transform_indices = @transform_12, window_bounds = array<i64: 1, 64>}, {pipeline_mode = #tpu.pipeline_mode<synchronous>, transform_indices = @transform_13, window_bounds = array<i64: 64, 128>}, {pipeline_mode = #tpu.pipeline_mode<synchronous>, transform_indices = @transform_14, window_bounds = array<i64: 1, 128>}, {pipeline_mode = #tpu.pipeline_mode<synchronous>, transform_indices = @transform_15, window_bounds = array<i64: 128, 64>}, {pipeline_mode = #tpu.pipeline_mode<synchronous>, transform_indices = @transform_16, window_bounds = array<i64: 1, 64>}, {transform_indices = @transform_17, window_bounds = array<i64: 1, 16, 64>}]} {
    %c0 = arith.constant 0 : index
    %c0_0 = arith.constant 0 : index
    %c0_1 = arith.constant 0 : index
    %0 = vector.load %arg1[%c0, %c0_0, %c0_1] : memref<1x16x64xf32, #tpu.memory_space<vmem>>, vector<1x16x64xf32>
    %1 = vector.shape_cast %0 : vector<1x16x64xf32> to vector<16x64xf32>
    %cst = arith.constant 0.000000e+00 : f32
    %2 = vector.broadcast %cst : f32 to vector<2x8xf32>
    %c0_2 = arith.constant 0 : index
    %c0_3 = arith.constant 0 : index
    %c0_4 = arith.constant 0 : index
    %3 = vector.load %arg2[%c0_2, %c0_3, %c0_4] : memref<8x64x8xf32, #tpu.memory_space<vmem>>, vector<1x64x8xf32>
    %4 = vector.shape_cast %3 : vector<1x64x8xf32> to vector<64x8xf32>
    %cst_5 = arith.constant dense<0.000000e+00> : vector<16x8xf32>
    %5 = tpu.matmul %1, %4, %cst_5 {dimension_numbers = #tpu.dot_dimension_numbers<[1], [0], [0], [1], [0, 0, 1, 1], [], []>} : vector<16x64xf32>, vector<64x8xf32>, vector<16x8xf32> -> vector<16x8xf32>
    %c0_6 = arith.constant 0 : index
    %c0_7 = arith.constant 0 : index
    %c0_8 = arith.constant 0 : index
    %6 = vector.load %arg3[%c0_6, %c0_7, %c0_8] : memref<8x1x8xf32, #tpu.memory_space<vmem>>, vector<1x1x8xf32>
    %7 = vector.shape_cast %6 : vector<1x1x8xf32> to vector<1x8xf32>
    %8 = vector.broadcast %7 : vector<1x8xf32> to vector<16x8xf32>
    %9 = arith.addf %5, %8 : vector<16x8xf32>
    %cst_9 = arith.constant 0.000000e+00 : f32
    %10 = vector.broadcast %cst_9 : f32 to vector<16x8xf32>
    %11 = arith.maximumf %9, %10 : vector<16x8xf32>
    %c0_10 = arith.constant 0 : index
    %c0_11 = arith.constant 0 : index
    %c0_12 = arith.constant 0 : index
    %12 = vector.load %arg4[%c0_10, %c0_11, %c0_12] : memref<8x1x8xf32, #tpu.memory_space<vmem>>, vector<1x1x8xf32>
    %13 = vector.shape_cast %12 : vector<1x1x8xf32> to vector<1x8xf32>
    %14 = vector.broadcast %13 : vector<1x8xf32> to vector<16x8xf32>
    %15 = arith.mulf %11, %14 : vector<16x8xf32>
    %c0_13 = arith.constant 0 : index
    %c0_14 = arith.constant 0 : index
    %c0_15 = arith.constant 0 : index
    %16 = vector.load %arg5[%c0_13, %c0_14, %c0_15] : memref<8x1x8xf32, #tpu.memory_space<vmem>>, vector<1x1x8xf32>
    %17 = vector.shape_cast %16 : vector<1x1x8xf32> to vector<1x8xf32>
    %18 = vector.broadcast %17 : vector<1x8xf32> to vector<16x8xf32>
    %19 = arith.addf %15, %18 : vector<16x8xf32>
    %20 = tpu.concatenate %2, %19, %2 in 0 : vector<2x8xf32>, vector<16x8xf32>, vector<2x8xf32> -> vector<20x8xf32>
    %21 = vector.extract_strided_slice %20 {offsets = [0, 0], sizes = [16, 8], strides = [1, 1]} : vector<20x8xf32> to vector<16x8xf32>
    %22 = vector.extract_strided_slice %20 {offsets = [2, 0], sizes = [16, 8], strides = [1, 1]} : vector<20x8xf32> to vector<16x8xf32>
    %23 = vector.extract_strided_slice %20 {offsets = [4, 0], sizes = [16, 8], strides = [1, 1]} : vector<20x8xf32> to vector<16x8xf32>
    %24 = tpu.concatenate %21, %22, %23 in 1 : vector<16x8xf32>, vector<16x8xf32>, vector<16x8xf32> -> vector<16x24xf32>
    %c0_16 = arith.constant 0 : index
    %c0_17 = arith.constant 0 : index
    %c0_18 = arith.constant 0 : index
    %25 = vector.load %arg6[%c0_16, %c0_17, %c0_18] : memref<7x24x8xf32, #tpu.memory_space<vmem>>, vector<1x24x8xf32>
    %26 = vector.shape_cast %25 : vector<1x24x8xf32> to vector<24x8xf32>
    %cst_19 = arith.constant dense<0.000000e+00> : vector<16x8xf32>
    %27 = tpu.matmul %24, %26, %cst_19 {dimension_numbers = #tpu.dot_dimension_numbers<[1], [0], [0], [1], [0, 0, 1, 1], [], []>} : vector<16x24xf32>, vector<24x8xf32>, vector<16x8xf32> -> vector<16x8xf32>
    %c0_20 = arith.constant 0 : index
    %c0_21 = arith.constant 0 : index
    %c0_22 = arith.constant 0 : index
    %28 = vector.load %arg7[%c0_20, %c0_21, %c0_22] : memref<7x1x8xf32, #tpu.memory_space<vmem>>, vector<1x1x8xf32>
    %29 = vector.shape_cast %28 : vector<1x1x8xf32> to vector<1x8xf32>
    %30 = vector.broadcast %29 : vector<1x8xf32> to vector<16x8xf32>
    %31 = arith.addf %27, %30 : vector<16x8xf32>
    %cst_23 = arith.constant 0.000000e+00 : f32
    %32 = vector.broadcast %cst_23 : f32 to vector<16x8xf32>
    %33 = arith.maximumf %31, %32 : vector<16x8xf32>
    %c0_24 = arith.constant 0 : index
    %c0_25 = arith.constant 0 : index
    %c0_26 = arith.constant 0 : index
    %34 = vector.load %arg8[%c0_24, %c0_25, %c0_26] : memref<7x1x8xf32, #tpu.memory_space<vmem>>, vector<1x1x8xf32>
    %35 = vector.shape_cast %34 : vector<1x1x8xf32> to vector<1x8xf32>
    %36 = vector.broadcast %35 : vector<1x8xf32> to vector<16x8xf32>
    %37 = arith.mulf %33, %36 : vector<16x8xf32>
    %c0_27 = arith.constant 0 : index
    %c0_28 = arith.constant 0 : index
    %c0_29 = arith.constant 0 : index
    %38 = vector.load %arg9[%c0_27, %c0_28, %c0_29] : memref<7x1x8xf32, #tpu.memory_space<vmem>>, vector<1x1x8xf32>
    %39 = vector.shape_cast %38 : vector<1x1x8xf32> to vector<1x8xf32>
    %40 = vector.broadcast %39 : vector<1x8xf32> to vector<16x8xf32>
    %41 = arith.addf %37, %40 : vector<16x8xf32>
    %c1 = arith.constant 1 : index
    %c0_30 = arith.constant 0 : index
    %c0_31 = arith.constant 0 : index
    %42 = vector.load %arg2[%c1, %c0_30, %c0_31] : memref<8x64x8xf32, #tpu.memory_space<vmem>>, vector<1x64x8xf32>
    %43 = vector.shape_cast %42 : vector<1x64x8xf32> to vector<64x8xf32>
    %cst_32 = arith.constant dense<0.000000e+00> : vector<16x8xf32>
    %44 = tpu.matmul %1, %43, %cst_32 {dimension_numbers = #tpu.dot_dimension_numbers<[1], [0], [0], [1], [0, 0, 1, 1], [], []>} : vector<16x64xf32>, vector<64x8xf32>, vector<16x8xf32> -> vector<16x8xf32>
    %c1_33 = arith.constant 1 : index
    %c0_34 = arith.constant 0 : index
    %c0_35 = arith.constant 0 : index
    %45 = vector.load %arg3[%c1_33, %c0_34, %c0_35] : memref<8x1x8xf32, #tpu.memory_space<vmem>>, vector<1x1x8xf32>
    %46 = vector.shape_cast %45 : vector<1x1x8xf32> to vector<1x8xf32>
    %47 = vector.broadcast %46 : vector<1x8xf32> to vector<16x8xf32>
    %48 = arith.addf %44, %47 : vector<16x8xf32>
    %cst_36 = arith.constant 0.000000e+00 : f32
    %49 = vector.broadcast %cst_36 : f32 to vector<16x8xf32>
    %50 = arith.maximumf %48, %49 : vector<16x8xf32>
    %c1_37 = arith.constant 1 : index
    %c0_38 = arith.constant 0 : index
    %c0_39 = arith.constant 0 : index
    %51 = vector.load %arg4[%c1_37, %c0_38, %c0_39] : memref<8x1x8xf32, #tpu.memory_space<vmem>>, vector<1x1x8xf32>
    %52 = vector.shape_cast %51 : vector<1x1x8xf32> to vector<1x8xf32>
    %53 = vector.broadcast %52 : vector<1x8xf32> to vector<16x8xf32>
    %54 = arith.mulf %50, %53 : vector<16x8xf32>
    %c1_40 = arith.constant 1 : index
    %c0_41 = arith.constant 0 : index
    %c0_42 = arith.constant 0 : index
    %55 = vector.load %arg5[%c1_40, %c0_41, %c0_42] : memref<8x1x8xf32, #tpu.memory_space<vmem>>, vector<1x1x8xf32>
    %56 = vector.shape_cast %55 : vector<1x1x8xf32> to vector<1x8xf32>
    %57 = vector.broadcast %56 : vector<1x8xf32> to vector<16x8xf32>
    %58 = arith.addf %54, %57 : vector<16x8xf32>
    %59 = arith.addf %41, %58 : vector<16x8xf32>
    %60 = tpu.concatenate %2, %59, %2 in 0 : vector<2x8xf32>, vector<16x8xf32>, vector<2x8xf32> -> vector<20x8xf32>
    %61 = vector.extract_strided_slice %60 {offsets = [0, 0], sizes = [16, 8], strides = [1, 1]} : vector<20x8xf32> to vector<16x8xf32>
    %62 = vector.extract_strided_slice %60 {offsets = [2, 0], sizes = [16, 8], strides = [1, 1]} : vector<20x8xf32> to vector<16x8xf32>
    %63 = vector.extract_strided_slice %60 {offsets = [4, 0], sizes = [16, 8], strides = [1, 1]} : vector<20x8xf32> to vector<16x8xf32>
    %64 = tpu.concatenate %61, %62, %63 in 1 : vector<16x8xf32>, vector<16x8xf32>, vector<16x8xf32> -> vector<16x24xf32>
    %c1_43 = arith.constant 1 : index
    %c0_44 = arith.constant 0 : index
    %c0_45 = arith.constant 0 : index
    %65 = vector.load %arg6[%c1_43, %c0_44, %c0_45] : memref<7x24x8xf32, #tpu.memory_space<vmem>>, vector<1x24x8xf32>
    %66 = vector.shape_cast %65 : vector<1x24x8xf32> to vector<24x8xf32>
    %cst_46 = arith.constant dense<0.000000e+00> : vector<16x8xf32>
    %67 = tpu.matmul %64, %66, %cst_46 {dimension_numbers = #tpu.dot_dimension_numbers<[1], [0], [0], [1], [0, 0, 1, 1], [], []>} : vector<16x24xf32>, vector<24x8xf32>, vector<16x8xf32> -> vector<16x8xf32>
    %c1_47 = arith.constant 1 : index
    %c0_48 = arith.constant 0 : index
    %c0_49 = arith.constant 0 : index
    %68 = vector.load %arg7[%c1_47, %c0_48, %c0_49] : memref<7x1x8xf32, #tpu.memory_space<vmem>>, vector<1x1x8xf32>
    %69 = vector.shape_cast %68 : vector<1x1x8xf32> to vector<1x8xf32>
    %70 = vector.broadcast %69 : vector<1x8xf32> to vector<16x8xf32>
    %71 = arith.addf %67, %70 : vector<16x8xf32>
    %cst_50 = arith.constant 0.000000e+00 : f32
    %72 = vector.broadcast %cst_50 : f32 to vector<16x8xf32>
    %73 = arith.maximumf %71, %72 : vector<16x8xf32>
    %c1_51 = arith.constant 1 : index
    %c0_52 = arith.constant 0 : index
    %c0_53 = arith.constant 0 : index
    %74 = vector.load %arg8[%c1_51, %c0_52, %c0_53] : memref<7x1x8xf32, #tpu.memory_space<vmem>>, vector<1x1x8xf32>
    %75 = vector.shape_cast %74 : vector<1x1x8xf32> to vector<1x8xf32>
    %76 = vector.broadcast %75 : vector<1x8xf32> to vector<16x8xf32>
    %77 = arith.mulf %73, %76 : vector<16x8xf32>
    %c1_54 = arith.constant 1 : index
    %c0_55 = arith.constant 0 : index
    %c0_56 = arith.constant 0 : index
    %78 = vector.load %arg9[%c1_54, %c0_55, %c0_56] : memref<7x1x8xf32, #tpu.memory_space<vmem>>, vector<1x1x8xf32>
    %79 = vector.shape_cast %78 : vector<1x1x8xf32> to vector<1x8xf32>
    %80 = vector.broadcast %79 : vector<1x8xf32> to vector<16x8xf32>
    %81 = arith.addf %77, %80 : vector<16x8xf32>
    %c2 = arith.constant 2 : index
    %c0_57 = arith.constant 0 : index
    %c0_58 = arith.constant 0 : index
    %82 = vector.load %arg2[%c2, %c0_57, %c0_58] : memref<8x64x8xf32, #tpu.memory_space<vmem>>, vector<1x64x8xf32>
    %83 = vector.shape_cast %82 : vector<1x64x8xf32> to vector<64x8xf32>
    %cst_59 = arith.constant dense<0.000000e+00> : vector<16x8xf32>
    %84 = tpu.matmul %1, %83, %cst_59 {dimension_numbers = #tpu.dot_dimension_numbers<[1], [0], [0], [1], [0, 0, 1, 1], [], []>} : vector<16x64xf32>, vector<64x8xf32>, vector<16x8xf32> -> vector<16x8xf32>
    %c2_60 = arith.constant 2 : index
    %c0_61 = arith.constant 0 : index
    %c0_62 = arith.constant 0 : index
    %85 = vector.load %arg3[%c2_60, %c0_61, %c0_62] : memref<8x1x8xf32, #tpu.memory_space<vmem>>, vector<1x1x8xf32>
    %86 = vector.shape_cast %85 : vector<1x1x8xf32> to vector<1x8xf32>
    %87 = vector.broadcast %86 : vector<1x8xf32> to vector<16x8xf32>
    %88 = arith.addf %84, %87 : vector<16x8xf32>
    %cst_63 = arith.constant 0.000000e+00 : f32
    %89 = vector.broadcast %cst_63 : f32 to vector<16x8xf32>
    %90 = arith.maximumf %88, %89 : vector<16x8xf32>
    %c2_64 = arith.constant 2 : index
    %c0_65 = arith.constant 0 : index
    %c0_66 = arith.constant 0 : index
    %91 = vector.load %arg4[%c2_64, %c0_65, %c0_66] : memref<8x1x8xf32, #tpu.memory_space<vmem>>, vector<1x1x8xf32>
    %92 = vector.shape_cast %91 : vector<1x1x8xf32> to vector<1x8xf32>
    %93 = vector.broadcast %92 : vector<1x8xf32> to vector<16x8xf32>
    %94 = arith.mulf %90, %93 : vector<16x8xf32>
    %c2_67 = arith.constant 2 : index
    %c0_68 = arith.constant 0 : index
    %c0_69 = arith.constant 0 : index
    %95 = vector.load %arg5[%c2_67, %c0_68, %c0_69] : memref<8x1x8xf32, #tpu.memory_space<vmem>>, vector<1x1x8xf32>
    %96 = vector.shape_cast %95 : vector<1x1x8xf32> to vector<1x8xf32>
    %97 = vector.broadcast %96 : vector<1x8xf32> to vector<16x8xf32>
    %98 = arith.addf %94, %97 : vector<16x8xf32>
    %99 = arith.addf %81, %98 : vector<16x8xf32>
    %100 = tpu.concatenate %2, %99, %2 in 0 : vector<2x8xf32>, vector<16x8xf32>, vector<2x8xf32> -> vector<20x8xf32>
    %101 = vector.extract_strided_slice %100 {offsets = [0, 0], sizes = [16, 8], strides = [1, 1]} : vector<20x8xf32> to vector<16x8xf32>
    %102 = vector.extract_strided_slice %100 {offsets = [2, 0], sizes = [16, 8], strides = [1, 1]} : vector<20x8xf32> to vector<16x8xf32>
    %103 = vector.extract_strided_slice %100 {offsets = [4, 0], sizes = [16, 8], strides = [1, 1]} : vector<20x8xf32> to vector<16x8xf32>
    %104 = tpu.concatenate %101, %102, %103 in 1 : vector<16x8xf32>, vector<16x8xf32>, vector<16x8xf32> -> vector<16x24xf32>
    %c2_70 = arith.constant 2 : index
    %c0_71 = arith.constant 0 : index
    %c0_72 = arith.constant 0 : index
    %105 = vector.load %arg6[%c2_70, %c0_71, %c0_72] : memref<7x24x8xf32, #tpu.memory_space<vmem>>, vector<1x24x8xf32>
    %106 = vector.shape_cast %105 : vector<1x24x8xf32> to vector<24x8xf32>
    %cst_73 = arith.constant dense<0.000000e+00> : vector<16x8xf32>
    %107 = tpu.matmul %104, %106, %cst_73 {dimension_numbers = #tpu.dot_dimension_numbers<[1], [0], [0], [1], [0, 0, 1, 1], [], []>} : vector<16x24xf32>, vector<24x8xf32>, vector<16x8xf32> -> vector<16x8xf32>
    %c2_74 = arith.constant 2 : index
    %c0_75 = arith.constant 0 : index
    %c0_76 = arith.constant 0 : index
    %108 = vector.load %arg7[%c2_74, %c0_75, %c0_76] : memref<7x1x8xf32, #tpu.memory_space<vmem>>, vector<1x1x8xf32>
    %109 = vector.shape_cast %108 : vector<1x1x8xf32> to vector<1x8xf32>
    %110 = vector.broadcast %109 : vector<1x8xf32> to vector<16x8xf32>
    %111 = arith.addf %107, %110 : vector<16x8xf32>
    %cst_77 = arith.constant 0.000000e+00 : f32
    %112 = vector.broadcast %cst_77 : f32 to vector<16x8xf32>
    %113 = arith.maximumf %111, %112 : vector<16x8xf32>
    %c2_78 = arith.constant 2 : index
    %c0_79 = arith.constant 0 : index
    %c0_80 = arith.constant 0 : index
    %114 = vector.load %arg8[%c2_78, %c0_79, %c0_80] : memref<7x1x8xf32, #tpu.memory_space<vmem>>, vector<1x1x8xf32>
    %115 = vector.shape_cast %114 : vector<1x1x8xf32> to vector<1x8xf32>
    %116 = vector.broadcast %115 : vector<1x8xf32> to vector<16x8xf32>
    %117 = arith.mulf %113, %116 : vector<16x8xf32>
    %c2_81 = arith.constant 2 : index
    %c0_82 = arith.constant 0 : index
    %c0_83 = arith.constant 0 : index
    %118 = vector.load %arg9[%c2_81, %c0_82, %c0_83] : memref<7x1x8xf32, #tpu.memory_space<vmem>>, vector<1x1x8xf32>
    %119 = vector.shape_cast %118 : vector<1x1x8xf32> to vector<1x8xf32>
    %120 = vector.broadcast %119 : vector<1x8xf32> to vector<16x8xf32>
    %121 = arith.addf %117, %120 : vector<16x8xf32>
    %c3 = arith.constant 3 : index
    %c0_84 = arith.constant 0 : index
    %c0_85 = arith.constant 0 : index
    %122 = vector.load %arg2[%c3, %c0_84, %c0_85] : memref<8x64x8xf32, #tpu.memory_space<vmem>>, vector<1x64x8xf32>
    %123 = vector.shape_cast %122 : vector<1x64x8xf32> to vector<64x8xf32>
    %cst_86 = arith.constant dense<0.000000e+00> : vector<16x8xf32>
    %124 = tpu.matmul %1, %123, %cst_86 {dimension_numbers = #tpu.dot_dimension_numbers<[1], [0], [0], [1], [0, 0, 1, 1], [], []>} : vector<16x64xf32>, vector<64x8xf32>, vector<16x8xf32> -> vector<16x8xf32>
    %c3_87 = arith.constant 3 : index
    %c0_88 = arith.constant 0 : index
    %c0_89 = arith.constant 0 : index
    %125 = vector.load %arg3[%c3_87, %c0_88, %c0_89] : memref<8x1x8xf32, #tpu.memory_space<vmem>>, vector<1x1x8xf32>
    %126 = vector.shape_cast %125 : vector<1x1x8xf32> to vector<1x8xf32>
    %127 = vector.broadcast %126 : vector<1x8xf32> to vector<16x8xf32>
    %128 = arith.addf %124, %127 : vector<16x8xf32>
    %cst_90 = arith.constant 0.000000e+00 : f32
    %129 = vector.broadcast %cst_90 : f32 to vector<16x8xf32>
    %130 = arith.maximumf %128, %129 : vector<16x8xf32>
    %c3_91 = arith.constant 3 : index
    %c0_92 = arith.constant 0 : index
    %c0_93 = arith.constant 0 : index
    %131 = vector.load %arg4[%c3_91, %c0_92, %c0_93] : memref<8x1x8xf32, #tpu.memory_space<vmem>>, vector<1x1x8xf32>
    %132 = vector.shape_cast %131 : vector<1x1x8xf32> to vector<1x8xf32>
    %133 = vector.broadcast %132 : vector<1x8xf32> to vector<16x8xf32>
    %134 = arith.mulf %130, %133 : vector<16x8xf32>
    %c3_94 = arith.constant 3 : index
    %c0_95 = arith.constant 0 : index
    %c0_96 = arith.constant 0 : index
    %135 = vector.load %arg5[%c3_94, %c0_95, %c0_96] : memref<8x1x8xf32, #tpu.memory_space<vmem>>, vector<1x1x8xf32>
    %136 = vector.shape_cast %135 : vector<1x1x8xf32> to vector<1x8xf32>
    %137 = vector.broadcast %136 : vector<1x8xf32> to vector<16x8xf32>
    %138 = arith.addf %134, %137 : vector<16x8xf32>
    %139 = arith.addf %121, %138 : vector<16x8xf32>
    %140 = tpu.concatenate %2, %139, %2 in 0 : vector<2x8xf32>, vector<16x8xf32>, vector<2x8xf32> -> vector<20x8xf32>
    %141 = vector.extract_strided_slice %140 {offsets = [0, 0], sizes = [16, 8], strides = [1, 1]} : vector<20x8xf32> to vector<16x8xf32>
    %142 = vector.extract_strided_slice %140 {offsets = [2, 0], sizes = [16, 8], strides = [1, 1]} : vector<20x8xf32> to vector<16x8xf32>
    %143 = vector.extract_strided_slice %140 {offsets = [4, 0], sizes = [16, 8], strides = [1, 1]} : vector<20x8xf32> to vector<16x8xf32>
    %144 = tpu.concatenate %141, %142, %143 in 1 : vector<16x8xf32>, vector<16x8xf32>, vector<16x8xf32> -> vector<16x24xf32>
    %c3_97 = arith.constant 3 : index
    %c0_98 = arith.constant 0 : index
    %c0_99 = arith.constant 0 : index
    %145 = vector.load %arg6[%c3_97, %c0_98, %c0_99] : memref<7x24x8xf32, #tpu.memory_space<vmem>>, vector<1x24x8xf32>
    %146 = vector.shape_cast %145 : vector<1x24x8xf32> to vector<24x8xf32>
    %cst_100 = arith.constant dense<0.000000e+00> : vector<16x8xf32>
    %147 = tpu.matmul %144, %146, %cst_100 {dimension_numbers = #tpu.dot_dimension_numbers<[1], [0], [0], [1], [0, 0, 1, 1], [], []>} : vector<16x24xf32>, vector<24x8xf32>, vector<16x8xf32> -> vector<16x8xf32>
    %c3_101 = arith.constant 3 : index
    %c0_102 = arith.constant 0 : index
    %c0_103 = arith.constant 0 : index
    %148 = vector.load %arg7[%c3_101, %c0_102, %c0_103] : memref<7x1x8xf32, #tpu.memory_space<vmem>>, vector<1x1x8xf32>
    %149 = vector.shape_cast %148 : vector<1x1x8xf32> to vector<1x8xf32>
    %150 = vector.broadcast %149 : vector<1x8xf32> to vector<16x8xf32>
    %151 = arith.addf %147, %150 : vector<16x8xf32>
    %cst_104 = arith.constant 0.000000e+00 : f32
    %152 = vector.broadcast %cst_104 : f32 to vector<16x8xf32>
    %153 = arith.maximumf %151, %152 : vector<16x8xf32>
    %c3_105 = arith.constant 3 : index
    %c0_106 = arith.constant 0 : index
    %c0_107 = arith.constant 0 : index
    %154 = vector.load %arg8[%c3_105, %c0_106, %c0_107] : memref<7x1x8xf32, #tpu.memory_space<vmem>>, vector<1x1x8xf32>
    %155 = vector.shape_cast %154 : vector<1x1x8xf32> to vector<1x8xf32>
    %156 = vector.broadcast %155 : vector<1x8xf32> to vector<16x8xf32>
    %157 = arith.mulf %153, %156 : vector<16x8xf32>
    %c3_108 = arith.constant 3 : index
    %c0_109 = arith.constant 0 : index
    %c0_110 = arith.constant 0 : index
    %158 = vector.load %arg9[%c3_108, %c0_109, %c0_110] : memref<7x1x8xf32, #tpu.memory_space<vmem>>, vector<1x1x8xf32>
    %159 = vector.shape_cast %158 : vector<1x1x8xf32> to vector<1x8xf32>
    %160 = vector.broadcast %159 : vector<1x8xf32> to vector<16x8xf32>
    %161 = arith.addf %157, %160 : vector<16x8xf32>
    %c4 = arith.constant 4 : index
    %c0_111 = arith.constant 0 : index
    %c0_112 = arith.constant 0 : index
    %162 = vector.load %arg2[%c4, %c0_111, %c0_112] : memref<8x64x8xf32, #tpu.memory_space<vmem>>, vector<1x64x8xf32>
    %163 = vector.shape_cast %162 : vector<1x64x8xf32> to vector<64x8xf32>
    %cst_113 = arith.constant dense<0.000000e+00> : vector<16x8xf32>
    %164 = tpu.matmul %1, %163, %cst_113 {dimension_numbers = #tpu.dot_dimension_numbers<[1], [0], [0], [1], [0, 0, 1, 1], [], []>} : vector<16x64xf32>, vector<64x8xf32>, vector<16x8xf32> -> vector<16x8xf32>
    %c4_114 = arith.constant 4 : index
    %c0_115 = arith.constant 0 : index
    %c0_116 = arith.constant 0 : index
    %165 = vector.load %arg3[%c4_114, %c0_115, %c0_116] : memref<8x1x8xf32, #tpu.memory_space<vmem>>, vector<1x1x8xf32>
    %166 = vector.shape_cast %165 : vector<1x1x8xf32> to vector<1x8xf32>
    %167 = vector.broadcast %166 : vector<1x8xf32> to vector<16x8xf32>
    %168 = arith.addf %164, %167 : vector<16x8xf32>
    %cst_117 = arith.constant 0.000000e+00 : f32
    %169 = vector.broadcast %cst_117 : f32 to vector<16x8xf32>
    %170 = arith.maximumf %168, %169 : vector<16x8xf32>
    %c4_118 = arith.constant 4 : index
    %c0_119 = arith.constant 0 : index
    %c0_120 = arith.constant 0 : index
    %171 = vector.load %arg4[%c4_118, %c0_119, %c0_120] : memref<8x1x8xf32, #tpu.memory_space<vmem>>, vector<1x1x8xf32>
    %172 = vector.shape_cast %171 : vector<1x1x8xf32> to vector<1x8xf32>
    %173 = vector.broadcast %172 : vector<1x8xf32> to vector<16x8xf32>
    %174 = arith.mulf %170, %173 : vector<16x8xf32>
    %c4_121 = arith.constant 4 : index
    %c0_122 = arith.constant 0 : index
    %c0_123 = arith.constant 0 : index
    %175 = vector.load %arg5[%c4_121, %c0_122, %c0_123] : memref<8x1x8xf32, #tpu.memory_space<vmem>>, vector<1x1x8xf32>
    %176 = vector.shape_cast %175 : vector<1x1x8xf32> to vector<1x8xf32>
    %177 = vector.broadcast %176 : vector<1x8xf32> to vector<16x8xf32>
    %178 = arith.addf %174, %177 : vector<16x8xf32>
    %179 = arith.addf %161, %178 : vector<16x8xf32>
    %180 = tpu.concatenate %2, %179, %2 in 0 : vector<2x8xf32>, vector<16x8xf32>, vector<2x8xf32> -> vector<20x8xf32>
    %181 = vector.extract_strided_slice %180 {offsets = [0, 0], sizes = [16, 8], strides = [1, 1]} : vector<20x8xf32> to vector<16x8xf32>
    %182 = vector.extract_strided_slice %180 {offsets = [2, 0], sizes = [16, 8], strides = [1, 1]} : vector<20x8xf32> to vector<16x8xf32>
    %183 = vector.extract_strided_slice %180 {offsets = [4, 0], sizes = [16, 8], strides = [1, 1]} : vector<20x8xf32> to vector<16x8xf32>
    %184 = tpu.concatenate %181, %182, %183 in 1 : vector<16x8xf32>, vector<16x8xf32>, vector<16x8xf32> -> vector<16x24xf32>
    %c4_124 = arith.constant 4 : index
    %c0_125 = arith.constant 0 : index
    %c0_126 = arith.constant 0 : index
    %185 = vector.load %arg6[%c4_124, %c0_125, %c0_126] : memref<7x24x8xf32, #tpu.memory_space<vmem>>, vector<1x24x8xf32>
    %186 = vector.shape_cast %185 : vector<1x24x8xf32> to vector<24x8xf32>
    %cst_127 = arith.constant dense<0.000000e+00> : vector<16x8xf32>
    %187 = tpu.matmul %184, %186, %cst_127 {dimension_numbers = #tpu.dot_dimension_numbers<[1], [0], [0], [1], [0, 0, 1, 1], [], []>} : vector<16x24xf32>, vector<24x8xf32>, vector<16x8xf32> -> vector<16x8xf32>
    %c4_128 = arith.constant 4 : index
    %c0_129 = arith.constant 0 : index
    %c0_130 = arith.constant 0 : index
    %188 = vector.load %arg7[%c4_128, %c0_129, %c0_130] : memref<7x1x8xf32, #tpu.memory_space<vmem>>, vector<1x1x8xf32>
    %189 = vector.shape_cast %188 : vector<1x1x8xf32> to vector<1x8xf32>
    %190 = vector.broadcast %189 : vector<1x8xf32> to vector<16x8xf32>
    %191 = arith.addf %187, %190 : vector<16x8xf32>
    %cst_131 = arith.constant 0.000000e+00 : f32
    %192 = vector.broadcast %cst_131 : f32 to vector<16x8xf32>
    %193 = arith.maximumf %191, %192 : vector<16x8xf32>
    %c4_132 = arith.constant 4 : index
    %c0_133 = arith.constant 0 : index
    %c0_134 = arith.constant 0 : index
    %194 = vector.load %arg8[%c4_132, %c0_133, %c0_134] : memref<7x1x8xf32, #tpu.memory_space<vmem>>, vector<1x1x8xf32>
    %195 = vector.shape_cast %194 : vector<1x1x8xf32> to vector<1x8xf32>
    %196 = vector.broadcast %195 : vector<1x8xf32> to vector<16x8xf32>
    %197 = arith.mulf %193, %196 : vector<16x8xf32>
    %c4_135 = arith.constant 4 : index
    %c0_136 = arith.constant 0 : index
    %c0_137 = arith.constant 0 : index
    %198 = vector.load %arg9[%c4_135, %c0_136, %c0_137] : memref<7x1x8xf32, #tpu.memory_space<vmem>>, vector<1x1x8xf32>
    %199 = vector.shape_cast %198 : vector<1x1x8xf32> to vector<1x8xf32>
    %200 = vector.broadcast %199 : vector<1x8xf32> to vector<16x8xf32>
    %201 = arith.addf %197, %200 : vector<16x8xf32>
    %c5 = arith.constant 5 : index
    %c0_138 = arith.constant 0 : index
    %c0_139 = arith.constant 0 : index
    %202 = vector.load %arg2[%c5, %c0_138, %c0_139] : memref<8x64x8xf32, #tpu.memory_space<vmem>>, vector<1x64x8xf32>
    %203 = vector.shape_cast %202 : vector<1x64x8xf32> to vector<64x8xf32>
    %cst_140 = arith.constant dense<0.000000e+00> : vector<16x8xf32>
    %204 = tpu.matmul %1, %203, %cst_140 {dimension_numbers = #tpu.dot_dimension_numbers<[1], [0], [0], [1], [0, 0, 1, 1], [], []>} : vector<16x64xf32>, vector<64x8xf32>, vector<16x8xf32> -> vector<16x8xf32>
    %c5_141 = arith.constant 5 : index
    %c0_142 = arith.constant 0 : index
    %c0_143 = arith.constant 0 : index
    %205 = vector.load %arg3[%c5_141, %c0_142, %c0_143] : memref<8x1x8xf32, #tpu.memory_space<vmem>>, vector<1x1x8xf32>
    %206 = vector.shape_cast %205 : vector<1x1x8xf32> to vector<1x8xf32>
    %207 = vector.broadcast %206 : vector<1x8xf32> to vector<16x8xf32>
    %208 = arith.addf %204, %207 : vector<16x8xf32>
    %cst_144 = arith.constant 0.000000e+00 : f32
    %209 = vector.broadcast %cst_144 : f32 to vector<16x8xf32>
    %210 = arith.maximumf %208, %209 : vector<16x8xf32>
    %c5_145 = arith.constant 5 : index
    %c0_146 = arith.constant 0 : index
    %c0_147 = arith.constant 0 : index
    %211 = vector.load %arg4[%c5_145, %c0_146, %c0_147] : memref<8x1x8xf32, #tpu.memory_space<vmem>>, vector<1x1x8xf32>
    %212 = vector.shape_cast %211 : vector<1x1x8xf32> to vector<1x8xf32>
    %213 = vector.broadcast %212 : vector<1x8xf32> to vector<16x8xf32>
    %214 = arith.mulf %210, %213 : vector<16x8xf32>
    %c5_148 = arith.constant 5 : index
    %c0_149 = arith.constant 0 : index
    %c0_150 = arith.constant 0 : index
    %215 = vector.load %arg5[%c5_148, %c0_149, %c0_150] : memref<8x1x8xf32, #tpu.memory_space<vmem>>, vector<1x1x8xf32>
    %216 = vector.shape_cast %215 : vector<1x1x8xf32> to vector<1x8xf32>
    %217 = vector.broadcast %216 : vector<1x8xf32> to vector<16x8xf32>
    %218 = arith.addf %214, %217 : vector<16x8xf32>
    %219 = arith.addf %201, %218 : vector<16x8xf32>
    %220 = tpu.concatenate %2, %219, %2 in 0 : vector<2x8xf32>, vector<16x8xf32>, vector<2x8xf32> -> vector<20x8xf32>
    %221 = vector.extract_strided_slice %220 {offsets = [0, 0], sizes = [16, 8], strides = [1, 1]} : vector<20x8xf32> to vector<16x8xf32>
    %222 = vector.extract_strided_slice %220 {offsets = [2, 0], sizes = [16, 8], strides = [1, 1]} : vector<20x8xf32> to vector<16x8xf32>
    %223 = vector.extract_strided_slice %220 {offsets = [4, 0], sizes = [16, 8], strides = [1, 1]} : vector<20x8xf32> to vector<16x8xf32>
    %224 = tpu.concatenate %221, %222, %223 in 1 : vector<16x8xf32>, vector<16x8xf32>, vector<16x8xf32> -> vector<16x24xf32>
    %c5_151 = arith.constant 5 : index
    %c0_152 = arith.constant 0 : index
    %c0_153 = arith.constant 0 : index
    %225 = vector.load %arg6[%c5_151, %c0_152, %c0_153] : memref<7x24x8xf32, #tpu.memory_space<vmem>>, vector<1x24x8xf32>
    %226 = vector.shape_cast %225 : vector<1x24x8xf32> to vector<24x8xf32>
    %cst_154 = arith.constant dense<0.000000e+00> : vector<16x8xf32>
    %227 = tpu.matmul %224, %226, %cst_154 {dimension_numbers = #tpu.dot_dimension_numbers<[1], [0], [0], [1], [0, 0, 1, 1], [], []>} : vector<16x24xf32>, vector<24x8xf32>, vector<16x8xf32> -> vector<16x8xf32>
    %c5_155 = arith.constant 5 : index
    %c0_156 = arith.constant 0 : index
    %c0_157 = arith.constant 0 : index
    %228 = vector.load %arg7[%c5_155, %c0_156, %c0_157] : memref<7x1x8xf32, #tpu.memory_space<vmem>>, vector<1x1x8xf32>
    %229 = vector.shape_cast %228 : vector<1x1x8xf32> to vector<1x8xf32>
    %230 = vector.broadcast %229 : vector<1x8xf32> to vector<16x8xf32>
    %231 = arith.addf %227, %230 : vector<16x8xf32>
    %cst_158 = arith.constant 0.000000e+00 : f32
    %232 = vector.broadcast %cst_158 : f32 to vector<16x8xf32>
    %233 = arith.maximumf %231, %232 : vector<16x8xf32>
    %c5_159 = arith.constant 5 : index
    %c0_160 = arith.constant 0 : index
    %c0_161 = arith.constant 0 : index
    %234 = vector.load %arg8[%c5_159, %c0_160, %c0_161] : memref<7x1x8xf32, #tpu.memory_space<vmem>>, vector<1x1x8xf32>
    %235 = vector.shape_cast %234 : vector<1x1x8xf32> to vector<1x8xf32>
    %236 = vector.broadcast %235 : vector<1x8xf32> to vector<16x8xf32>
    %237 = arith.mulf %233, %236 : vector<16x8xf32>
    %c5_162 = arith.constant 5 : index
    %c0_163 = arith.constant 0 : index
    %c0_164 = arith.constant 0 : index
    %238 = vector.load %arg9[%c5_162, %c0_163, %c0_164] : memref<7x1x8xf32, #tpu.memory_space<vmem>>, vector<1x1x8xf32>
    %239 = vector.shape_cast %238 : vector<1x1x8xf32> to vector<1x8xf32>
    %240 = vector.broadcast %239 : vector<1x8xf32> to vector<16x8xf32>
    %241 = arith.addf %237, %240 : vector<16x8xf32>
    %c6 = arith.constant 6 : index
    %c0_165 = arith.constant 0 : index
    %c0_166 = arith.constant 0 : index
    %242 = vector.load %arg2[%c6, %c0_165, %c0_166] : memref<8x64x8xf32, #tpu.memory_space<vmem>>, vector<1x64x8xf32>
    %243 = vector.shape_cast %242 : vector<1x64x8xf32> to vector<64x8xf32>
    %cst_167 = arith.constant dense<0.000000e+00> : vector<16x8xf32>
    %244 = tpu.matmul %1, %243, %cst_167 {dimension_numbers = #tpu.dot_dimension_numbers<[1], [0], [0], [1], [0, 0, 1, 1], [], []>} : vector<16x64xf32>, vector<64x8xf32>, vector<16x8xf32> -> vector<16x8xf32>
    %c6_168 = arith.constant 6 : index
    %c0_169 = arith.constant 0 : index
    %c0_170 = arith.constant 0 : index
    %245 = vector.load %arg3[%c6_168, %c0_169, %c0_170] : memref<8x1x8xf32, #tpu.memory_space<vmem>>, vector<1x1x8xf32>
    %246 = vector.shape_cast %245 : vector<1x1x8xf32> to vector<1x8xf32>
    %247 = vector.broadcast %246 : vector<1x8xf32> to vector<16x8xf32>
    %248 = arith.addf %244, %247 : vector<16x8xf32>
    %cst_171 = arith.constant 0.000000e+00 : f32
    %249 = vector.broadcast %cst_171 : f32 to vector<16x8xf32>
    %250 = arith.maximumf %248, %249 : vector<16x8xf32>
    %c6_172 = arith.constant 6 : index
    %c0_173 = arith.constant 0 : index
    %c0_174 = arith.constant 0 : index
    %251 = vector.load %arg4[%c6_172, %c0_173, %c0_174] : memref<8x1x8xf32, #tpu.memory_space<vmem>>, vector<1x1x8xf32>
    %252 = vector.shape_cast %251 : vector<1x1x8xf32> to vector<1x8xf32>
    %253 = vector.broadcast %252 : vector<1x8xf32> to vector<16x8xf32>
    %254 = arith.mulf %250, %253 : vector<16x8xf32>
    %c6_175 = arith.constant 6 : index
    %c0_176 = arith.constant 0 : index
    %c0_177 = arith.constant 0 : index
    %255 = vector.load %arg5[%c6_175, %c0_176, %c0_177] : memref<8x1x8xf32, #tpu.memory_space<vmem>>, vector<1x1x8xf32>
    %256 = vector.shape_cast %255 : vector<1x1x8xf32> to vector<1x8xf32>
    %257 = vector.broadcast %256 : vector<1x8xf32> to vector<16x8xf32>
    %258 = arith.addf %254, %257 : vector<16x8xf32>
    %259 = arith.addf %241, %258 : vector<16x8xf32>
    %260 = tpu.concatenate %2, %259, %2 in 0 : vector<2x8xf32>, vector<16x8xf32>, vector<2x8xf32> -> vector<20x8xf32>
    %261 = vector.extract_strided_slice %260 {offsets = [0, 0], sizes = [16, 8], strides = [1, 1]} : vector<20x8xf32> to vector<16x8xf32>
    %262 = vector.extract_strided_slice %260 {offsets = [2, 0], sizes = [16, 8], strides = [1, 1]} : vector<20x8xf32> to vector<16x8xf32>
    %263 = vector.extract_strided_slice %260 {offsets = [4, 0], sizes = [16, 8], strides = [1, 1]} : vector<20x8xf32> to vector<16x8xf32>
    %264 = tpu.concatenate %261, %262, %263 in 1 : vector<16x8xf32>, vector<16x8xf32>, vector<16x8xf32> -> vector<16x24xf32>
    %c6_178 = arith.constant 6 : index
    %c0_179 = arith.constant 0 : index
    %c0_180 = arith.constant 0 : index
    %265 = vector.load %arg6[%c6_178, %c0_179, %c0_180] : memref<7x24x8xf32, #tpu.memory_space<vmem>>, vector<1x24x8xf32>
    %266 = vector.shape_cast %265 : vector<1x24x8xf32> to vector<24x8xf32>
    %cst_181 = arith.constant dense<0.000000e+00> : vector<16x8xf32>
    %267 = tpu.matmul %264, %266, %cst_181 {dimension_numbers = #tpu.dot_dimension_numbers<[1], [0], [0], [1], [0, 0, 1, 1], [], []>} : vector<16x24xf32>, vector<24x8xf32>, vector<16x8xf32> -> vector<16x8xf32>
    %c6_182 = arith.constant 6 : index
    %c0_183 = arith.constant 0 : index
    %c0_184 = arith.constant 0 : index
    %268 = vector.load %arg7[%c6_182, %c0_183, %c0_184] : memref<7x1x8xf32, #tpu.memory_space<vmem>>, vector<1x1x8xf32>
    %269 = vector.shape_cast %268 : vector<1x1x8xf32> to vector<1x8xf32>
    %270 = vector.broadcast %269 : vector<1x8xf32> to vector<16x8xf32>
    %271 = arith.addf %267, %270 : vector<16x8xf32>
    %cst_185 = arith.constant 0.000000e+00 : f32
    %272 = vector.broadcast %cst_185 : f32 to vector<16x8xf32>
    %273 = arith.maximumf %271, %272 : vector<16x8xf32>
    %c6_186 = arith.constant 6 : index
    %c0_187 = arith.constant 0 : index
    %c0_188 = arith.constant 0 : index
    %274 = vector.load %arg8[%c6_186, %c0_187, %c0_188] : memref<7x1x8xf32, #tpu.memory_space<vmem>>, vector<1x1x8xf32>
    %275 = vector.shape_cast %274 : vector<1x1x8xf32> to vector<1x8xf32>
    %276 = vector.broadcast %275 : vector<1x8xf32> to vector<16x8xf32>
    %277 = arith.mulf %273, %276 : vector<16x8xf32>
    %c6_189 = arith.constant 6 : index
    %c0_190 = arith.constant 0 : index
    %c0_191 = arith.constant 0 : index
    %278 = vector.load %arg9[%c6_189, %c0_190, %c0_191] : memref<7x1x8xf32, #tpu.memory_space<vmem>>, vector<1x1x8xf32>
    %279 = vector.shape_cast %278 : vector<1x1x8xf32> to vector<1x8xf32>
    %280 = vector.broadcast %279 : vector<1x8xf32> to vector<16x8xf32>
    %281 = arith.addf %277, %280 : vector<16x8xf32>
    %c7 = arith.constant 7 : index
    %c0_192 = arith.constant 0 : index
    %c0_193 = arith.constant 0 : index
    %282 = vector.load %arg2[%c7, %c0_192, %c0_193] : memref<8x64x8xf32, #tpu.memory_space<vmem>>, vector<1x64x8xf32>
    %283 = vector.shape_cast %282 : vector<1x64x8xf32> to vector<64x8xf32>
    %cst_194 = arith.constant dense<0.000000e+00> : vector<16x8xf32>
    %284 = tpu.matmul %1, %283, %cst_194 {dimension_numbers = #tpu.dot_dimension_numbers<[1], [0], [0], [1], [0, 0, 1, 1], [], []>} : vector<16x64xf32>, vector<64x8xf32>, vector<16x8xf32> -> vector<16x8xf32>
    %c7_195 = arith.constant 7 : index
    %c0_196 = arith.constant 0 : index
    %c0_197 = arith.constant 0 : index
    %285 = vector.load %arg3[%c7_195, %c0_196, %c0_197] : memref<8x1x8xf32, #tpu.memory_space<vmem>>, vector<1x1x8xf32>
    %286 = vector.shape_cast %285 : vector<1x1x8xf32> to vector<1x8xf32>
    %287 = vector.broadcast %286 : vector<1x8xf32> to vector<16x8xf32>
    %288 = arith.addf %284, %287 : vector<16x8xf32>
    %cst_198 = arith.constant 0.000000e+00 : f32
    %289 = vector.broadcast %cst_198 : f32 to vector<16x8xf32>
    %290 = arith.maximumf %288, %289 : vector<16x8xf32>
    %c7_199 = arith.constant 7 : index
    %c0_200 = arith.constant 0 : index
    %c0_201 = arith.constant 0 : index
    %291 = vector.load %arg4[%c7_199, %c0_200, %c0_201] : memref<8x1x8xf32, #tpu.memory_space<vmem>>, vector<1x1x8xf32>
    %292 = vector.shape_cast %291 : vector<1x1x8xf32> to vector<1x8xf32>
    %293 = vector.broadcast %292 : vector<1x8xf32> to vector<16x8xf32>
    %294 = arith.mulf %290, %293 : vector<16x8xf32>
    %c7_202 = arith.constant 7 : index
    %c0_203 = arith.constant 0 : index
    %c0_204 = arith.constant 0 : index
    %295 = vector.load %arg5[%c7_202, %c0_203, %c0_204] : memref<8x1x8xf32, #tpu.memory_space<vmem>>, vector<1x1x8xf32>
    %296 = vector.shape_cast %295 : vector<1x1x8xf32> to vector<1x8xf32>
    %297 = vector.broadcast %296 : vector<1x8xf32> to vector<16x8xf32>
    %298 = arith.addf %294, %297 : vector<16x8xf32>
    %299 = tpu.concatenate %41, %81, %121, %161, %201, %241, %281, %298 in 1 : vector<16x8xf32>, vector<16x8xf32>, vector<16x8xf32>, vector<16x8xf32>, vector<16x8xf32>, vector<16x8xf32>, vector<16x8xf32>, vector<16x8xf32> -> vector<16x64xf32>
    %c0_205 = arith.constant 0 : index
    %c0_206 = arith.constant 0 : index
    %300 = vector.load %arg10[%c0_205, %c0_206] : memref<64x64xf32, #tpu.memory_space<vmem>>, vector<64x64xf32>
    %cst_207 = arith.constant dense<0.000000e+00> : vector<16x64xf32>
    %301 = tpu.matmul %299, %300, %cst_207 {dimension_numbers = #tpu.dot_dimension_numbers<[1], [0], [0], [1], [0, 0, 1, 1], [], []>} : vector<16x64xf32>, vector<64x64xf32>, vector<16x64xf32> -> vector<16x64xf32>
    %c0_208 = arith.constant 0 : index
    %c0_209 = arith.constant 0 : index
    %302 = vector.load %arg11[%c0_208, %c0_209] : memref<1x64xf32, #tpu.memory_space<vmem>>, vector<1x64xf32>
    %303 = vector.broadcast %302 : vector<1x64xf32> to vector<16x64xf32>
    %304 = arith.addf %301, %303 : vector<16x64xf32>
    %cst_210 = arith.constant 0.000000e+00 : f32
    %305 = vector.broadcast %cst_210 : f32 to vector<16x64xf32>
    %306 = arith.maximumf %304, %305 : vector<16x64xf32>
    %c0_211 = arith.constant 0 : index
    %c0_212 = arith.constant 0 : index
    %307 = vector.load %arg12[%c0_211, %c0_212] : memref<1x64xf32, #tpu.memory_space<vmem>>, vector<1x64xf32>
    %308 = vector.broadcast %307 : vector<1x64xf32> to vector<16x64xf32>
    %309 = arith.mulf %306, %308 : vector<16x64xf32>
    %c0_213 = arith.constant 0 : index
    %c0_214 = arith.constant 0 : index
    %310 = vector.load %arg13[%c0_213, %c0_214] : memref<1x64xf32, #tpu.memory_space<vmem>>, vector<1x64xf32>
    %311 = vector.broadcast %310 : vector<1x64xf32> to vector<16x64xf32>
    %312 = arith.addf %309, %311 : vector<16x64xf32>
    %cst_215 = arith.constant dense<0.000000e+00> : vector<64xf32>
    %313 = vector.multi_reduction <add>, %312, %cst_215 [0] : vector<16x64xf32> to vector<64xf32>
    %314 = vector.shape_cast %313 : vector<64xf32> to vector<1x64xf32>
    %cst_216 = arith.constant 1.600000e+01 : f32
    %315 = vector.broadcast %cst_216 : f32 to vector<1x64xf32>
    %316 = arith.divf %314, %315 : vector<1x64xf32>
    %c0_217 = arith.constant 0 : index
    %c0_218 = arith.constant 0 : index
    %317 = vector.load %arg14[%c0_217, %c0_218] : memref<64x128xf32, #tpu.memory_space<vmem>>, vector<64x128xf32>
    %cst_219 = arith.constant dense<0.000000e+00> : vector<1x128xf32>
    %318 = tpu.matmul %316, %317, %cst_219 {dimension_numbers = #tpu.dot_dimension_numbers<[1], [0], [0], [1], [0, 0, 1, 1], [], []>} : vector<1x64xf32>, vector<64x128xf32>, vector<1x128xf32> -> vector<1x128xf32>
    %c0_220 = arith.constant 0 : index
    %c0_221 = arith.constant 0 : index
    %319 = vector.load %arg15[%c0_220, %c0_221] : memref<1x128xf32, #tpu.memory_space<vmem>>, vector<1x128xf32>
    %320 = arith.addf %318, %319 : vector<1x128xf32>
    %cst_222 = arith.constant 0.000000e+00 : f32
    %321 = vector.broadcast %cst_222 : f32 to vector<1x128xf32>
    %322 = arith.maximumf %320, %321 : vector<1x128xf32>
    %c0_223 = arith.constant 0 : index
    %c0_224 = arith.constant 0 : index
    %323 = vector.load %arg16[%c0_223, %c0_224] : memref<128x64xf32, #tpu.memory_space<vmem>>, vector<128x64xf32>
    %cst_225 = arith.constant dense<0.000000e+00> : vector<1x64xf32>
    %324 = tpu.matmul %322, %323, %cst_225 {dimension_numbers = #tpu.dot_dimension_numbers<[1], [0], [0], [1], [0, 0, 1, 1], [], []>} : vector<1x128xf32>, vector<128x64xf32>, vector<1x64xf32> -> vector<1x64xf32>
    %c0_226 = arith.constant 0 : index
    %c0_227 = arith.constant 0 : index
    %325 = vector.load %arg17[%c0_226, %c0_227] : memref<1x64xf32, #tpu.memory_space<vmem>>, vector<1x64xf32>
    %326 = arith.addf %324, %325 : vector<1x64xf32>
    %327 = arith.negf %326 : vector<1x64xf32>
    %328 = math.exp %327 : vector<1x64xf32>
    %cst_228 = arith.constant 1.000000e+00 : f32
    %329 = vector.broadcast %cst_228 : f32 to vector<1x64xf32>
    %330 = arith.addf %329, %328 : vector<1x64xf32>
    %331 = arith.divf %329, %330 : vector<1x64xf32>
    %332 = vector.broadcast %331 : vector<1x64xf32> to vector<16x64xf32>
    %333 = arith.mulf %312, %332 : vector<16x64xf32>
    %334 = arith.addf %333, %1 : vector<16x64xf32>
    %c0_229 = arith.constant 0 : index
    %c0_230 = arith.constant 0 : index
    %c0_231 = arith.constant 0 : index
    %335 = vector.load %arg18[%c0_229, %c0_230, %c0_231] : memref<1x16x64xf32, #tpu.memory_space<vmem>>, vector<1x16x64xf32>
    %336 = vector.shape_cast %335 : vector<1x16x64xf32> to vector<16x64xf32>
    %337 = vector.shape_cast %334 : vector<16x64xf32> to vector<1x16x64xf32>
    tpu.vector_store %arg18[%c0_229, %c0_230, %c0_231], %337 {strides = array<i32>} : memref<1x16x64xf32, #tpu.memory_space<vmem>>, vector<1x16x64xf32>,
    return
  }
  func.func @transform_0(%arg0: i32) -> (i32, i32, i32) {
    %c0_i32 = arith.constant 0 : i32
    %c0_i32_0 = arith.constant 0 : i32
    %c0_i32_1 = arith.constant 0 : i32
    return %arg0, %c0_i32, %c0_i32_0 : i32, i32, i32
  }
  func.func @transform_1(%arg0: i32) -> (i32, i32, i32) {
    %c0_i32 = arith.constant 0 : i32
    %c0_i32_0 = arith.constant 0 : i32
    %c0_i32_1 = arith.constant 0 : i32
    %c0_i32_2 = arith.constant 0 : i32
    return %c0_i32, %c0_i32_0, %c0_i32_1 : i32, i32, i32
  }
  func.func @transform_2(%arg0: i32) -> (i32, i32, i32) {
    %c0_i32 = arith.constant 0 : i32
    %c0_i32_0 = arith.constant 0 : i32
    %c0_i32_1 = arith.constant 0 : i32
    %c0_i32_2 = arith.constant 0 : i32
    return %c0_i32, %c0_i32_0, %c0_i32_1 : i32, i32, i32
  }
  func.func @transform_3(%arg0: i32) -> (i32, i32, i32) {
    %c0_i32 = arith.constant 0 : i32
    %c0_i32_0 = arith.constant 0 : i32
    %c0_i32_1 = arith.constant 0 : i32
    %c0_i32_2 = arith.constant 0 : i32
    return %c0_i32, %c0_i32_0, %c0_i32_1 : i32, i32, i32
  }
  func.func @transform_4(%arg0: i32) -> (i32, i32, i32) {
    %c0_i32 = arith.constant 0 : i32
    %c0_i32_0 = arith.constant 0 : i32
    %c0_i32_1 = arith.constant 0 : i32
    %c0_i32_2 = arith.constant 0 : i32
    return %c0_i32, %c0_i32_0, %c0_i32_1 : i32, i32, i32
  }
  func.func @transform_5(%arg0: i32) -> (i32, i32, i32) {
    %c0_i32 = arith.constant 0 : i32
    %c0_i32_0 = arith.constant 0 : i32
    %c0_i32_1 = arith.constant 0 : i32
    %c0_i32_2 = arith.constant 0 : i32
    return %c0_i32, %c0_i32_0, %c0_i32_1 : i32, i32, i32
  }
  func.func @transform_6(%arg0: i32) -> (i32, i32, i32) {
    %c0_i32 = arith.constant 0 : i32
    %c0_i32_0 = arith.constant 0 : i32
    %c0_i32_1 = arith.constant 0 : i32
    %c0_i32_2 = arith.constant 0 : i32
    return %c0_i32, %c0_i32_0, %c0_i32_1 : i32, i32, i32
  }
  func.func @transform_7(%arg0: i32) -> (i32, i32, i32) {
    %c0_i32 = arith.constant 0 : i32
    %c0_i32_0 = arith.constant 0 : i32
    %c0_i32_1 = arith.constant 0 : i32
    %c0_i32_2 = arith.constant 0 : i32
    return %c0_i32, %c0_i32_0, %c0_i32_1 : i32, i32, i32
  }
  func.func @transform_8(%arg0: i32) -> (i32, i32, i32) {
    %c0_i32 = arith.constant 0 : i32
    %c0_i32_0 = arith.constant 0 : i32
    %c0_i32_1 = arith.constant 0 : i32
    %c0_i32_2 = arith.constant 0 : i32
    return %c0_i32, %c0_i32_0, %c0_i32_1 : i32, i32, i32
  }
  func.func @transform_9(%arg0: i32) -> (i32, i32) {
    %c0_i32 = arith.constant 0 : i32
    %c0_i32_0 = arith.constant 0 : i32
    %c0_i32_1 = arith.constant 0 : i32
    return %c0_i32, %c0_i32_0 : i32, i32
  }
  func.func @transform_10(%arg0: i32) -> (i32, i32) {
    %c0_i32 = arith.constant 0 : i32
    %c0_i32_0 = arith.constant 0 : i32
    %c0_i32_1 = arith.constant 0 : i32
    return %c0_i32, %c0_i32_0 : i32, i32
  }
  func.func @transform_11(%arg0: i32) -> (i32, i32) {
    %c0_i32 = arith.constant 0 : i32
    %c0_i32_0 = arith.constant 0 : i32
    %c0_i32_1 = arith.constant 0 : i32
    return %c0_i32, %c0_i32_0 : i32, i32
  }
  func.func @transform_12(%arg0: i32) -> (i32, i32) {
    %c0_i32 = arith.constant 0 : i32
    %c0_i32_0 = arith.constant 0 : i32
    %c0_i32_1 = arith.constant 0 : i32
    return %c0_i32, %c0_i32_0 : i32, i32
  }
  func.func @transform_13(%arg0: i32) -> (i32, i32) {
    %c0_i32 = arith.constant 0 : i32
    %c0_i32_0 = arith.constant 0 : i32
    %c0_i32_1 = arith.constant 0 : i32
    return %c0_i32, %c0_i32_0 : i32, i32
  }
  func.func @transform_14(%arg0: i32) -> (i32, i32) {
    %c0_i32 = arith.constant 0 : i32
    %c0_i32_0 = arith.constant 0 : i32
    %c0_i32_1 = arith.constant 0 : i32
    return %c0_i32, %c0_i32_0 : i32, i32
  }
  func.func @transform_15(%arg0: i32) -> (i32, i32) {
    %c0_i32 = arith.constant 0 : i32
    %c0_i32_0 = arith.constant 0 : i32
    %c0_i32_1 = arith.constant 0 : i32
    return %c0_i32, %c0_i32_0 : i32, i32
  }
  func.func @transform_16(%arg0: i32) -> (i32, i32) {
    %c0_i32 = arith.constant 0 : i32
    %c0_i32_0 = arith.constant 0 : i32
    %c0_i32_1 = arith.constant 0 : i32
    return %c0_i32, %c0_i32_0 : i32, i32
  }
  func.func @transform_17(%arg0: i32) -> (i32, i32, i32) {
    %c0_i32 = arith.constant 0 : i32
    %c0_i32_0 = arith.constant 0 : i32
    %c0_i32_1 = arith.constant 0 : i32
    return %arg0, %c0_i32, %c0_i32_0 : i32, i32, i32
  }
}

</mosaic_0001>

<llo_original>
// kernel: tpu_custom_call.1
$region0: #{tpu_custom_call.1}
  #allocation0 [shape = 'u32[]', space=smem, size = 0x4, offset = 0x4, fixed_abs, tag = 'smem constant byte address 0x4 - core index']
  #allocation1 [shape = 'u32[144,128]{1,0:T(1,128)}', space=vmem, size = 0x12000, scoped, tag = 'internal scratch']
  %s0 = inlined_call_operand.vmem [shape: f32[2,16,64], index: 0, kind: input, shape index: {}]
  %s1 = inlined_call_operand.vmem [shape: f32[8,64,8], index: 1, kind: input, shape index: {}]
  %s2 = inlined_call_operand.vmem [shape: f32[8,1,8], index: 2, kind: input, shape index: {}]
  %s3 = inlined_call_operand.vmem [shape: f32[8,1,8], index: 3, kind: input, shape index: {}]
  %s4 = inlined_call_operand.vmem [shape: f32[8,1,8], index: 4, kind: input, shape index: {}]
  %s5 = inlined_call_operand.vmem [shape: f32[7,24,8], index: 5, kind: input, shape index: {}]
  %s6 = inlined_call_operand.vmem [shape: f32[7,1,8], index: 6, kind: input, shape index: {}]
  %s7 = inlined_call_operand.vmem [shape: f32[7,1,8], index: 7, kind: input, shape index: {}]
  %s8 = inlined_call_operand.vmem [shape: f32[7,1,8], index: 8, kind: input, shape index: {}]
  %s9 = inlined_call_operand.vmem [shape: f32[64,64], index: 9, kind: input, shape index: {}]
  %s10 = inlined_call_operand.vmem [shape: f32[1,64], index: 10, kind: input, shape index: {}]
  %s11 = inlined_call_operand.vmem [shape: f32[1,64], index: 11, kind: input, shape index: {}]
  %s12 = inlined_call_operand.vmem [shape: f32[1,64], index: 12, kind: input, shape index: {}]
  %s13 = inlined_call_operand.vmem [shape: f32[64,128], index: 13, kind: input, shape index: {}]
  %s14 = inlined_call_operand.vmem [shape: f32[1,128], index: 14, kind: input, shape index: {}]
  %s15 = inlined_call_operand.vmem [shape: f32[128,64], index: 15, kind: input, shape index: {}]
  %s16 = inlined_call_operand.vmem [shape: f32[1,64], index: 16, kind: input, shape index: {}]
  %s17 = inlined_call_operand.hbm [shape: f32[2,16,64], index: 17, kind: output, shape index: {}]
  %s18 = sld [smem:[#allocation0]]
  $region101: #{tpu_custom_call.1} parent=0
    _
  %s20 = ssub.s32 1, %s18
  %s21 = scalar_select 0, %s20, %s18
  $region1: #{tpu_custom_call.1} parent=0
    #allocation2 [shape = 'u8[16384]{0}', space=vmem, size = 0x4000, scoped, tag = 'output window, operand 0']
    #allocation3 [shape = 's32[2]{0}', space=sflag, size = 0x8, scoped, tag = 'scoped memory for tpu_custom_call.1']
    %22 = vsyncpa [#allocation3], 0
    %s23 = scalar_lea.sflag [#allocation3], 1
    %24 = vsyncpa %s23, 0
    loop: start=0, step=1, limit=4
    $region2: #{tpu_custom_call.1} parent=1 // loop_pre_header
      _
    $region3: #{tpu_custom_call.1} parent=1 // loop_header
      %s26 = sphi 0, %s30
      %p27 = scmp.ge.s32.totalorder %s26, 4
      %s36 = sphi 0, %s38
      %s39 = sphi 0, %s36
      %s40 = sphi 0, %s39
      %s56 = sphi 0, %s40
      %s60 = sphi 0, %s60
      %s62 = sphi 0, %s60
      %s63 = sphi 0, %s62
      %s77 = sphi 0, %s63
      %s81 = sphi 0, %s81
      %s83 = sphi 0, %s81
      %s84 = sphi 0, %s83
      %s98 = sphi 0, %s84
      %s102 = sphi 0, %s102
      %s104 = sphi 0, %s102
      %s105 = sphi 0, %s104
      %s119 = sphi 0, %s105
      %s123 = sphi 0, %s123
      %s125 = sphi 0, %s123
      %s126 = sphi 0, %s125
      %s140 = sphi 0, %s126
      %s144 = sphi 0, %s144
      %s146 = sphi 0, %s144
      %s147 = sphi 0, %s146
      %s161 = sphi 0, %s147
      %s165 = sphi 0, %s165
      %s167 = sphi 0, %s165
      %s168 = sphi 0, %s167
      %s182 = sphi 0, %s168
      %s186 = sphi 0, %s186
      %s188 = sphi 0, %s186
      %s189 = sphi 0, %s188
      %s203 = sphi 0, %s189
      %s207 = sphi 0, %s207
      %s209 = sphi 0, %s207
      %s210 = sphi 0, %s209
      %s224 = sphi 0, %s210
      %s228 = sphi 0, %s228
      %s230 = sphi 0, %s228
      %s231 = sphi 0, %s230
      %s245 = sphi 0, %s231
      %s249 = sphi 0, %s249
      %s251 = sphi 0, %s249
      %s252 = sphi 0, %s251
      %s266 = sphi 0, %s252
      %s270 = sphi 0, %s270
      %s272 = sphi 0, %s270
      %s273 = sphi 0, %s272
      %s287 = sphi 0, %s273
      %s291 = sphi 0, %s291
      %s293 = sphi 0, %s291
      %s294 = sphi 0, %s293
      %s308 = sphi 0, %s294
      %s312 = sphi 0, %s312
      %s314 = sphi 0, %s312
      %s315 = sphi 0, %s314
      %s329 = sphi 0, %s315
      %s333 = sphi 0, %s333
      %s335 = sphi 0, %s333
      %s336 = sphi 0, %s335
      %s350 = sphi 0, %s336
      %s354 = sphi 0, %s354
      %s356 = sphi 0, %s354
      %s357 = sphi 0, %s356
      %s371 = sphi 0, %s357
      %s375 = sphi 0, %s375
      %s377 = sphi 0, %s375
      %s378 = sphi 0, %s377
      %s392 = sphi 0, %s378
      %s398 = sphi 0, %s400
      %s401 = sphi 0, %s398
      %s402 = sphi 0, %s401
      %s418 = sphi 0, %s402
    $region4: #{tpu_custom_call.1} parent=1 // loop_header_branch
      %29 = sbr.rel (%p27) target = $region8
    $region5: #{tpu_custom_call.1} parent=1 // loop_body
      %s31 = ssub.s32 %s26, 1
      %s32 = ssub.s32 %s26, 2
      %s33 = sadd.s32 %s26, 1
      %s34 = ssub.s32 %s26, %s33
      %p35 = scmp.eq.s32.totalorder %s34, 0
      %s37 = sadd.s32 %s36, 1
      %s38 = scalar_select %p35, %s36, %s37
      %p41 = pneg %p35
      %p42 = scmp.eq.s32.totalorder %s26, 1
      %p43 = por %p41, %p42
      %p44 = scmp.ne.s32.totalorder %s36, %s39
      %p45 = scmp.eq.s32.totalorder %s26, 0
      %p46 = por %p44, %p45
      %p47 = scmp.ne.s32.totalorder %s36, %s39
      %p48 = scmp.eq.s32.totalorder %s31, 1
      %p49 = por %p47, %p48
      %p50 = scmp.ne.s32.totalorder %s39, %s40
      %p51 = scmp.eq.s32.totalorder %s31, 0
      %p52 = por %p50, %p51
      %p53 = scmp.ne.s32.totalorder %s39, %s40
      %p54 = scmp.eq.s32.totalorder %s32, 1
      %p55 = por %p53, %p54
      %p57 = scmp.ne.s32.totalorder %s40, %s56
      %p58 = scmp.eq.s32.totalorder %s32, 0
      %p59 = por %p57, %p58
      %s61 = sadd.s32 %s60, 1
      %p64 = scmp.eq.s32.totalorder %s26, 1
      %p65 = scmp.ne.s32.totalorder %s60, %s62
      %p66 = scmp.eq.s32.totalorder %s26, 0
      %p67 = por %p65, %p66
      %p68 = scmp.ne.s32.totalorder %s60, %s62
      %p69 = scmp.eq.s32.totalorder %s31, 1
      %p70 = por %p68, %p69
      %p71 = scmp.ne.s32.totalorder %s62, %s63
      %p72 = scmp.eq.s32.totalorder %s31, 0
      %p73 = por %p71, %p72
      %p74 = scmp.ne.s32.totalorder %s62, %s63
      %p75 = scmp.eq.s32.totalorder %s32, 1
      %p76 = por %p74, %p75
      %p78 = scmp.ne.s32.totalorder %s63, %s77
      %p79 = scmp.eq.s32.totalorder %s32, 0
      %p80 = por %p78, %p79
      %s82 = sadd.s32 %s81, 1
      %p85 = scmp.eq.s32.totalorder %s26, 1
      %p86 = scmp.ne.s32.totalorder %s81, %s83
      %p87 = scmp.eq.s32.totalorder %s26, 0
      %p88 = por %p86, %p87
      %p89 = scmp.ne.s32.totalorder %s81, %s83
      %p90 = scmp.eq.s32.totalorder %s31, 1
      %p91 = por %p89, %p90
      %p92 = scmp.ne.s32.totalorder %s83, %s84
      %p93 = scmp.eq.s32.totalorder %s31, 0
      %p94 = por %p92, %p93
      %p95 = scmp.ne.s32.totalorder %s83, %s84
      %p96 = scmp.eq.s32.totalorder %s32, 1
      %p97 = por %p95, %p96
      %p99 = scmp.ne.s32.totalorder %s84, %s98
      %p100 = scmp.eq.s32.totalorder %s32, 0
      %p101 = por %p99, %p100
      %s103 = sadd.s32 %s102, 1
      %p106 = scmp.eq.s32.totalorder %s26, 1
      %p107 = scmp.ne.s32.totalorder %s102, %s104
      %p108 = scmp.eq.s32.totalorder %s26, 0
      %p109 = por %p107, %p108
      %p110 = scmp.ne.s32.totalorder %s102, %s104
      %p111 = scmp.eq.s32.totalorder %s31, 1
      %p112 = por %p110, %p111
      %p113 = scmp.ne.s32.totalorder %s104, %s105
      %p114 = scmp.eq.s32.totalorder %s31, 0
      %p115 = por %p113, %p114
      %p116 = scmp.ne.s32.totalorder %s104, %s105
      %p117 = scmp.eq.s32.totalorder %s32, 1
      %p118 = por %p116, %p117
      %p120 = scmp.ne.s32.totalorder %s105, %s119
      %p121 = scmp.eq.s32.totalorder %s32, 0
      %p122 = por %p120, %p121
      %s124 = sadd.s32 %s123, 1
      %p127 = scmp.eq.s32.totalorder %s26, 1
      %p128 = scmp.ne.s32.totalorder %s123, %s125
      %p129 = scmp.eq.s32.totalorder %s26, 0
      %p130 = por %p128, %p129
      %p131 = scmp.ne.s32.totalorder %s123, %s125
      %p132 = scmp.eq.s32.totalorder %s31, 1
      %p133 = por %p131, %p132
      %p134 = scmp.ne.s32.totalorder %s125, %s126
      %p135 = scmp.eq.s32.totalorder %s31, 0
      %p136 = por %p134, %p135
      %p137 = scmp.ne.s32.totalorder %s125, %s126
      %p138 = scmp.eq.s32.totalorder %s32, 1
      %p139 = por %p137, %p138
      %p141 = scmp.ne.s32.totalorder %s126, %s140
      %p142 = scmp.eq.s32.totalorder %s32, 0
      %p143 = por %p141, %p142
      %s145 = sadd.s32 %s144, 1
      %p148 = scmp.eq.s32.totalorder %s26, 1
      %p149 = scmp.ne.s32.totalorder %s144, %s146
      %p150 = scmp.eq.s32.totalorder %s26, 0
      %p151 = por %p149, %p150
      %p152 = scmp.ne.s32.totalorder %s144, %s146
      %p153 = scmp.eq.s32.totalorder %s31, 1
      %p154 = por %p152, %p153
      %p155 = scmp.ne.s32.totalorder %s146, %s147
      %p156 = scmp.eq.s32.totalorder %s31, 0
      %p157 = por %p155, %p156
      %p158 = scmp.ne.s32.totalorder %s146, %s147
      %p159 = scmp.eq.s32.totalorder %s32, 1
      %p160 = por %p158, %p159
      %p162 = scmp.ne.s32.totalorder %s147, %s161
      %p163 = scmp.eq.s32.totalorder %s32, 0
      %p164 = por %p162, %p163
      %s166 = sadd.s32 %s165, 1
      %p169 = scmp.eq.s32.totalorder %s26, 1
      %p170 = scmp.ne.s32.totalorder %s165, %s167
      %p171 = scmp.eq.s32.totalorder %s26, 0
      %p172 = por %p170, %p171
      %p173 = scmp.ne.s32.totalorder %s165, %s167
      %p174 = scmp.eq.s32.totalorder %s31, 1
      %p175 = por %p173, %p174
      %p176 = scmp.ne.s32.totalorder %s167, %s168
      %p177 = scmp.eq.s32.totalorder %s31, 0
      %p178 = por %p176, %p177
      %p179 = scmp.ne.s32.totalorder %s167, %s168
      %p180 = scmp.eq.s32.totalorder %s32, 1
      %p181 = por %p179, %p180
      %p183 = scmp.ne.s32.totalorder %s168, %s182
      %p184 = scmp.eq.s32.totalorder %s32, 0
      %p185 = por %p183, %p184
      %s187 = sadd.s32 %s186, 1
      %p190 = scmp.eq.s32.totalorder %s26, 1
      %p191 = scmp.ne.s32.totalorder %s186, %s188
      %p192 = scmp.eq.s32.totalorder %s26, 0
      %p193 = por %p191, %p192
      %p194 = scmp.ne.s32.totalorder %s186, %s188
      %p195 = scmp.eq.s32.totalorder %s31, 1
      %p196 = por %p194, %p195
      %p197 = scmp.ne.s32.totalorder %s188, %s189
      %p198 = scmp.eq.s32.totalorder %s31, 0
      %p199 = por %p197, %p198
      %p200 = scmp.ne.s32.totalorder %s188, %s189
      %p201 = scmp.eq.s32.totalorder %s32, 1
      %p202 = por %p200, %p201
      %p204 = scmp.ne.s32.totalorder %s189, %s203
      %p205 = scmp.eq.s32.totalorder %s32, 0
      %p206 = por %p204, %p205
      %s208 = sadd.s32 %s207, 1
      %p211 = scmp.eq.s32.totalorder %s26, 1
      %p212 = scmp.ne.s32.totalorder %s207, %s209
      %p213 = scmp.eq.s32.totalorder %s26, 0
      %p214 = por %p212, %p213
      %p215 = scmp.ne.s32.totalorder %s207, %s209
      %p216 = scmp.eq.s32.totalorder %s31, 1
      %p217 = por %p215, %p216
      %p218 = scmp.ne.s32.totalorder %s209, %s210
      %p219 = scmp.eq.s32.totalorder %s31, 0
      %p220 = por %p218, %p219
      %p221 = scmp.ne.s32.totalorder %s209, %s210
      %p222 = scmp.eq.s32.totalorder %s32, 1
      %p223 = por %p221, %p222
      %p225 = scmp.ne.s32.totalorder %s210, %s224
      %p226 = scmp.eq.s32.totalorder %s32, 0
      %p227 = por %p225, %p226
      %s229 = sadd.s32 %s228, 1
      %p232 = scmp.eq.s32.totalorder %s26, 1
      %p233 = scmp.ne.s32.totalorder %s228, %s230
      %p234 = scmp.eq.s32.totalorder %s26, 0
      %p235 = por %p233, %p234
      %p236 = scmp.ne.s32.totalorder %s228, %s230
      %p237 = scmp.eq.s32.totalorder %s31, 1
      %p238 = por %p236, %p237
      %p239 = scmp.ne.s32.totalorder %s230, %s231
      %p240 = scmp.eq.s32.totalorder %s31, 0
      %p241 = por %p239, %p240
      %p242 = scmp.ne.s32.totalorder %s230, %s231
      %p243 = scmp.eq.s32.totalorder %s32, 1
      %p244 = por %p242, %p243
      %p246 = scmp.ne.s32.totalorder %s231, %s245
      %p247 = scmp.eq.s32.totalorder %s32, 0
      %p248 = por %p246, %p247
      %s250 = sadd.s32 %s249, 1
      %p253 = scmp.eq.s32.totalorder %s26, 1
      %p254 = scmp.ne.s32.totalorder %s249, %s251
      %p255 = scmp.eq.s32.totalorder %s26, 0
      %p256 = por %p254, %p255
      %p257 = scmp.ne.s32.totalorder %s249, %s251
      %p258 = scmp.eq.s32.totalorder %s31, 1
      %p259 = por %p257, %p258
      %p260 = scmp.ne.s32.totalorder %s251, %s252
      %p261 = scmp.eq.s32.totalorder %s31, 0
      %p262 = por %p260, %p261
      %p263 = scmp.ne.s32.totalorder %s251, %s252
      %p264 = scmp.eq.s32.totalorder %s32, 1
      %p265 = por %p263, %p264
      %p267 = scmp.ne.s32.totalorder %s252, %s266
      %p268 = scmp.eq.s32.totalorder %s32, 0
      %p269 = por %p267, %p268
      %s271 = sadd.s32 %s270, 1
      %p274 = scmp.eq.s32.totalorder %s26, 1
      %p275 = scmp.ne.s32.totalorder %s270, %s272
      %p276 = scmp.eq.s32.totalorder %s26, 0
      %p277 = por %p275, %p276
      %p278 = scmp.ne.s32.totalorder %s270, %s272
      %p279 = scmp.eq.s32.totalorder %s31, 1
      %p280 = por %p278, %p279
      %p281 = scmp.ne.s32.totalorder %s272, %s273
      %p282 = scmp.eq.s32.totalorder %s31, 0
      %p283 = por %p281, %p282
      %p284 = scmp.ne.s32.totalorder %s272, %s273
      %p285 = scmp.eq.s32.totalorder %s32, 1
      %p286 = por %p284, %p285
      %p288 = scmp.ne.s32.totalorder %s273, %s287
      %p289 = scmp.eq.s32.totalorder %s32, 0
      %p290 = por %p288, %p289
      %s292 = sadd.s32 %s291, 1
      %p295 = scmp.eq.s32.totalorder %s26, 1
      %p296 = scmp.ne.s32.totalorder %s291, %s293
      %p297 = scmp.eq.s32.totalorder %s26, 0
      %p298 = por %p296, %p297
      %p299 = scmp.ne.s32.totalorder %s291, %s293
      %p300 = scmp.eq.s32.totalorder %s31, 1
      %p301 = por %p299, %p300
      %p302 = scmp.ne.s32.totalorder %s293, %s294
      %p303 = scmp.eq.s32.totalorder %s31, 0
      %p304 = por %p302, %p303
      %p305 = scmp.ne.s32.totalorder %s293, %s294
      %p306 = scmp.eq.s32.totalorder %s32, 1
      %p307 = por %p305, %p306
      %p309 = scmp.ne.s32.totalorder %s294, %s308
      %p310 = scmp.eq.s32.totalorder %s32, 0
      %p311 = por %p309, %p310
      %s313 = sadd.s32 %s312, 1
      %p316 = scmp.eq.s32.totalorder %s26, 1
      %p317 = scmp.ne.s32.totalorder %s312, %s314
      %p318 = scmp.eq.s32.totalorder %s26, 0
      %p319 = por %p317, %p318
      %p320 = scmp.ne.s32.totalorder %s312, %s314
      %p321 = scmp.eq.s32.totalorder %s31, 1
      %p322 = por %p320, %p321
      %p323 = scmp.ne.s32.totalorder %s314, %s315
      %p324 = scmp.eq.s32.totalorder %s31, 0
      %p325 = por %p323, %p324
      %p326 = scmp.ne.s32.totalorder %s314, %s315
      %p327 = scmp.eq.s32.totalorder %s32, 1
      %p328 = por %p326, %p327
      %p330 = scmp.ne.s32.totalorder %s315, %s329
      %p331 = scmp.eq.s32.totalorder %s32, 0
      %p332 = por %p330, %p331
      %s334 = sadd.s32 %s333, 1
      %p337 = scmp.eq.s32.totalorder %s26, 1
      %p338 = scmp.ne.s32.totalorder %s333, %s335
      %p339 = scmp.eq.s32.totalorder %s26, 0
      %p340 = por %p338, %p339
      %p341 = scmp.ne.s32.totalorder %s333, %s335
      %p342 = scmp.eq.s32.totalorder %s31, 1
      %p343 = por %p341, %p342
      %p344 = scmp.ne.s32.totalorder %s335, %s336
      %p345 = scmp.eq.s32.totalorder %s31, 0
      %p346 = por %p344, %p345
      %p347 = scmp.ne.s32.totalorder %s335, %s336
      %p348 = scmp.eq.s32.totalorder %s32, 1
      %p349 = por %p347, %p348
      %p351 = scmp.ne.s32.totalorder %s336, %s350
      %p352 = scmp.eq.s32.totalorder %s32, 0
      %p353 = por %p351, %p352
      %s355 = sadd.s32 %s354, 1
      %p358 = scmp.eq.s32.totalorder %s26, 1
      %p359 = scmp.ne.s32.totalorder %s354, %s356
      %p360 = scmp.eq.s32.totalorder %s26, 0
      %p361 = por %p359, %p360
      %p362 = scmp.ne.s32.totalorder %s354, %s356
      %p363 = scmp.eq.s32.totalorder %s31, 1
      %p364 = por %p362, %p363
      %p365 = scmp.ne.s32.totalorder %s356, %s357
      %p366 = scmp.eq.s32.totalorder %s31, 0
      %p367 = por %p365, %p366
      %p368 = scmp.ne.s32.totalorder %s356, %s357
      %p369 = scmp.eq.s32.totalorder %s32, 1
      %p370 = por %p368, %p369
      %p372 = scmp.ne.s32.totalorder %s357, %s371
      %p373 = scmp.eq.s32.totalorder %s32, 0
      %p374 = por %p372, %p373
      %s376 = sadd.s32 %s375, 1
      %p379 = scmp.eq.s32.totalorder %s26, 1
      %p380 = scmp.ne.s32.totalorder %s375, %s377
      %p381 = scmp.eq.s32.totalorder %s26, 0
      %p382 = por %p380, %p381
      %p383 = scmp.ne.s32.totalorder %s375, %s377
      %p384 = scmp.eq.s32.totalorder %s31, 1
      %p385 = por %p383, %p384
      %p386 = scmp.ne.s32.totalorder %s377, %s378
      %p387 = scmp.eq.s32.totalorder %s31, 0
      %p388 = por %p386, %p387
      %p389 = scmp.ne.s32.totalorder %s377, %s378
      %p390 = scmp.eq.s32.totalorder %s32, 1
      %p391 = por %p389, %p390
      %p393 = scmp.ne.s32.totalorder %s378, %s392
      %p394 = scmp.eq.s32.totalorder %s32, 0
      %p395 = por %p393, %p394
      %s396 = ssub.s32 %s26, %s33
      %p397 = scmp.eq.s32.totalorder %s396, 0
      %s399 = sadd.s32 %s398, 1
      %s400 = scalar_select %p397, %s398, %s399
      %p403 = pneg %p397
      %p404 = scmp.eq.s32.totalorder %s26, 1
      %p405 = por %p403, %p404
      %p406 = scmp.ne.s32.totalorder %s398, %s401
      %p407 = scmp.eq.s32.totalorder %s26, 0
      %p408 = por %p406, %p407
      %p409 = scmp.ne.s32.totalorder %s398, %s401
      %p410 = scmp.eq.s32.totalorder %s31, 1
      %p411 = por %p409, %p410
      %p412 = scmp.ne.s32.totalorder %s401, %s402
      %p413 = scmp.eq.s32.totalorder %s31, 0
      %p414 = por %p412, %p413
      %p415 = scmp.ne.s32.totalorder %s401, %s402
      %p416 = scmp.eq.s32.totalorder %s32, 1
      %p417 = por %p415, %p416
      %p419 = scmp.ne.s32.totalorder %s402, %s418
      %p420 = scmp.eq.s32.totalorder %s32, 0
      %p421 = por %p419, %p420
      %p422 = scmp.le.s32.totalorder 1, %s26
      %p423 = scmp.lt.s32.totalorder %s26, 3
      %p424 = pnand %p422, %p423
      %p425 = pneg %p424
      // Predicated region
      $region9: #{tpu_custom_call.1} parent=5 // pred_check
        _
      $region10: #{tpu_custom_call.1} parent=5 // pred_check_branch
        %427 = sbr.rel (%p424) target = $region12
      $region11: #{tpu_custom_call.1} parent=5 // pred_region
        %s428 = ssub.s32 %s26, 1
        // Predicated region
        $region13: #{tpu_custom_call.1} parent=11 // pred_check
          %p429 = pneg %p73
        $region14: #{tpu_custom_call.1} parent=11 // pred_check_branch
          %431 = sbr.rel (%p429) target = $region16
        $region15: #{tpu_custom_call.1} parent=11 // pred_region
          _
        $region16: #{tpu_custom_call.1} parent=11 // pred_fallthru
          _
        // Predicated region
        $region17: #{tpu_custom_call.1} parent=11 // pred_check
          %p432 = pneg %p94
        $region18: #{tpu_custom_call.1} parent=11 // pred_check_branch
          %434 = sbr.rel (%p432) target = $region20
        $region19: #{tpu_custom_call.1} parent=11 // pred_region
          _
        $region20: #{tpu_custom_call.1} parent=11 // pred_fallthru
          _
        // Predicated region
        $region21: #{tpu_custom_call.1} parent=11 // pred_check
          %p435 = pneg %p115
        $region22: #{tpu_custom_call.1} parent=11 // pred_check_branch
          %437 = sbr.rel (%p435) target = $region24
        $region23: #{tpu_custom_call.1} parent=11 // pred_region
          _
        $region24: #{tpu_custom_call.1} parent=11 // pred_fallthru
          _
        // Predicated region
        $region25: #{tpu_custom_call.1} parent=11 // pred_check
          %p438 = pneg %p136
        $region26: #{tpu_custom_call.1} parent=11 // pred_check_branch
          %440 = sbr.rel (%p438) target = $region28
        $region27: #{tpu_custom_call.1} parent=11 // pred_region
          _
        $region28: #{tpu_custom_call.1} parent=11 // pred_fallthru
          _
        // Predicated region
        $region29: #{tpu_custom_call.1} parent=11 // pred_check
          %p441 = pneg %p157
        $region30: #{tpu_custom_call.1} parent=11 // pred_check_branch
          %443 = sbr.rel (%p441) target = $region32
        $region31: #{tpu_custom_call.1} parent=11 // pred_region
          _
        $region32: #{tpu_custom_call.1} parent=11 // pred_fallthru
          _
        // Predicated region
        $region33: #{tpu_custom_call.1} parent=11 // pred_check
          %p444 = pneg %p178
        $region34: #{tpu_custom_call.1} parent=11 // pred_check_branch
          %446 = sbr.rel (%p444) target = $region36
        $region35: #{tpu_custom_call.1} parent=11 // pred_region
          _
        $region36: #{tpu_custom_call.1} parent=11 // pred_fallthru
          _
        // Predicated region
        $region37: #{tpu_custom_call.1} parent=11 // pred_check
          %p447 = pneg %p199
        $region38: #{tpu_custom_call.1} parent=11 // pred_check_branch
          %449 = sbr.rel (%p447) target = $region40
        $region39: #{tpu_custom_call.1} parent=11 // pred_region
          _
        $region40: #{tpu_custom_call.1} parent=11 // pred_fallthru
          _
        // Predicated region
        $region41: #{tpu_custom_call.1} parent=11 // pred_check
          %p450 = pneg %p220
        $region42: #{tpu_custom_call.1} parent=11 // pred_check_branch
          %452 = sbr.rel (%p450) target = $region44
        $region43: #{tpu_custom_call.1} parent=11 // pred_region
          _
        $region44: #{tpu_custom_call.1} parent=11 // pred_fallthru
          _
        // Predicated region
        $region45: #{tpu_custom_call.1} parent=11 // pred_check
          %p453 = pneg %p241
        $region46: #{tpu_custom_call.1} parent=11 // pred_check_branch
          %455 = sbr.rel (%p453) target = $region48
        $region47: #{tpu_custom_call.1} parent=11 // pred_region
          _
        $region48: #{tpu_custom_call.1} parent=11 // pred_fallthru
          _
        // Predicated region
        $region49: #{tpu_custom_call.1} parent=11 // pred_check
          %p456 = pneg %p262
        $region50: #{tpu_custom_call.1} parent=11 // pred_check_branch
          %458 = sbr.rel (%p456) target = $region52
        $region51: #{tpu_custom_call.1} parent=11 // pred_region
          _
        $region52: #{tpu_custom_call.1} parent=11 // pred_fallthru
          _
        // Predicated region
        $region53: #{tpu_custom_call.1} parent=11 // pred_check
          %p459 = pneg %p283
        $region54: #{tpu_custom_call.1} parent=11 // pred_check_branch
          %461 = sbr.rel (%p459) target = $region56
        $region55: #{tpu_custom_call.1} parent=11 // pred_region
          _
        $region56: #{tpu_custom_call.1} parent=11 // pred_fallthru
          _
        // Predicated region
        $region57: #{tpu_custom_call.1} parent=11 // pred_check
          %p462 = pneg %p304
        $region58: #{tpu_custom_call.1} parent=11 // pred_check_branch
          %464 = sbr.rel (%p462) target = $region60
        $region59: #{tpu_custom_call.1} parent=11 // pred_region
          _
        $region60: #{tpu_custom_call.1} parent=11 // pred_fallthru
          _
        // Predicated region
        $region61: #{tpu_custom_call.1} parent=11 // pred_check
          %p465 = pneg %p325
        $region62: #{tpu_custom_call.1} parent=11 // pred_check_branch
          %467 = sbr.rel (%p465) target = $region64
        $region63: #{tpu_custom_call.1} parent=11 // pred_region
          _
        $region64: #{tpu_custom_call.1} parent=11 // pred_fallthru
          _
        // Predicated region
        $region65: #{tpu_custom_call.1} parent=11 // pred_check
          %p468 = pneg %p346
        $region66: #{tpu_custom_call.1} parent=11 // pred_check_branch
          %470 = sbr.rel (%p468) target = $region68
        $region67: #{tpu_custom_call.1} parent=11 // pred_region
          _
        $region68: #{tpu_custom_call.1} parent=11 // pred_fallthru
          _
        // Predicated region
        $region69: #{tpu_custom_call.1} parent=11 // pred_check
          %p471 = pneg %p367
        $region70: #{tpu_custom_call.1} parent=11 // pred_check_branch
          %473 = sbr.rel (%p471) target = $region72
        $region71: #{tpu_custom_call.1} parent=11 // pred_region
          _
        $region72: #{tpu_custom_call.1} parent=11 // pred_fallthru
          _
        // Predicated region
        $region73: #{tpu_custom_call.1} parent=11 // pred_check
          %p474 = pneg %p388
        $region74: #{tpu_custom_call.1} parent=11 // pred_check_branch
          %476 = sbr.rel (%p474) target = $region76
        $region75: #{tpu_custom_call.1} parent=11 // pred_region
          _
        $region76: #{tpu_custom_call.1} parent=11 // pred_fallthru
          _
      $region12: #{tpu_custom_call.1} parent=5 // pred_fallthru
        _
      %p477 = scmp.lt.s32.totalorder %s26, 2
      // Predicated region
      $region77: #{tpu_custom_call.1} parent=5 // pred_check
        %p478 = pneg %p477
      $region78: #{tpu_custom_call.1} parent=5 // pred_check_branch
        %480 = sbr.rel (%p478) target = $region80
      $region79: #{tpu_custom_call.1} parent=5 // pred_region
        // Predicated region
        $region81: #{tpu_custom_call.1} parent=79 // pred_check
          %p481 = pneg %p46
        $region82: #{tpu_custom_call.1} parent=79 // pred_check_branch
          %483 = sbr.rel (%p481) target = $region84
        $region83: #{tpu_custom_call.1} parent=79 // pred_region
          %p484 = scmp.lt.s32.totalorder %s26, 1
          %s485 = scalar_select %p484, %s26, 1
          %s486 = smul.addr %s485, 2
          %s487 = smul.addr %s486, 8
          %s488 = scalar_lea.vmem %s0, %s487
        $region84: #{tpu_custom_call.1} parent=79 // pred_fallthru
          _
      $region80: #{tpu_custom_call.1} parent=5 // pred_fallthru
        _
      %p489 = scmp.le.s32.totalorder 1, %s26
      %p490 = scmp.lt.s32.totalorder %s26, 3
      %p491 = pnand %p489, %p490
      %p492 = pneg %p491
      // Predicated region
      $region85: #{tpu_custom_call.1} parent=5 // pred_check
        _
      $region86: #{tpu_custom_call.1} parent=5 // pred_check_branch
        %494 = sbr.rel (%p491) target = $region88
      $region87: #{tpu_custom_call.1} parent=5 // pred_region
        %s495 = ssub.s32 %s26, 1
        %p496 = scmp.lt.s32.totalorder %s31, 1
        %s497 = scalar_select %p496, %s31, 1
        %s498 = smul.addr %s497, 2
        %s499 = smul.addr %s498, 8
        %s500 = scalar_lea.vmem %s0, %s499
        %p501 = pneg %p52
        %p502 = pneg %p49
        %p503 = pneg %p73
        %p504 = pneg %p70
        %p505 = pneg %p94
        %p506 = pneg %p91
        %p507 = pneg %p115
        %p508 = pneg %p112
        %p509 = pneg %p136
        %p510 = pneg %p133
        %p511 = pneg %p157
        %p512 = pneg %p154
        %p513 = pneg %p178
        %p514 = pneg %p175
        %p515 = pneg %p199
        %p516 = pneg %p196
        %p517 = pneg %p220
        %p518 = pneg %p217
        %p519 = pneg %p241
        %p520 = pneg %p238
        %p521 = pneg %p262
        %p522 = pneg %p259
        %p523 = pneg %p283
        %p524 = pneg %p280
        %p525 = pneg %p304
        %p526 = pneg %p301
        %p527 = pneg %p325
        %p528 = pneg %p322
        %p529 = pneg %p346
        %p530 = pneg %p343
        %p531 = pneg %p367
        %p532 = pneg %p364
        %p533 = pneg %p388
        %p534 = pneg %p385
        %p535 = pneg %p414
        %p536 = pneg %p411
        %s537 = sand.u32 %s401, 1
        %s538 = scalar_lea.sflag [#allocation3], %s537
        %s539 = sand.u32 %s401, 1
        %s540 = smul.addr %s539, 16
        %s541 = scalar_lea.vmem [#allocation2], %s540
        %p542 = scmp.lt.s32.totalorder %s31, 1
        %s543 = scalar_select %p542, %s31, 1
        %s544 = smul.addr %s543, 2
        %s545 = smul.addr %s544, 8
        %s546 = scalar_lea.vmem %s0, %s545
        %v547 = vld [vmem:[%s546] sm:$0xff]
        %v548 = vld [vmem:[%s546 + $0x8] sm:$0xff]
        %v549 = vld [vmem:[%s1] sm:$0xff]
        %v550 = vld [vmem:[%s1 + $0x8] sm:$0xff]
        %v551 = vld [vmem:[%s1 + $0x10] sm:$0xff]
        %v552 = vld [vmem:[%s1 + $0x18] sm:$0xff]
        %v553 = vld [vmem:[%s1 + $0x20] sm:$0xff]
        %v554 = vld [vmem:[%s1 + $0x28] sm:$0xff]
        %v555 = vld [vmem:[%s1 + $0x30] sm:$0xff]
        %v556 = vld [vmem:[%s1 + $0x38] sm:$0xff]
        %v557 = vld [vmem:[%s2] sm:$0x1]
        %v559 = vlaneseq
        %v560 = vshrl.u32 %v559, 7
        %v561 = vsub.s32 0, %v560
        %v562 = vrot.slane %v557, %v561
        %vm564 = vcmask 523264
        %v566 = vsel %vm564, %v547, 0
        %v569 = vsel %vm564, %v548, 0
        %571 = vmatprep.subr.mxu0 0.0
        %572 = vmatpush1.msra.mxu0 %v549
        %573 = vmatprep.subr.mxu0 0.0
        %574 = vmatpush1.msra.mxu0 %v550
        %575 = vmatprep.subr.mxu0 0.0
        %576 = vmatpush1.msra.mxu0 %v551
        %577 = vmatprep.subr.mxu0 0.0
        %578 = vmatpush1.msra.mxu0 %v552
        %579 = vmatprep.subr.mxu0 0.0
        %580 = vmatpush1.msra.mxu0 %v553
        %581 = vmatprep.subr.mxu0 0.0
        %582 = vmatpush1.msra.mxu0 %v554
        %583 = vmatprep.subr.mxu0 0.0
        %584 = vmatpush1.msra.mxu0 %v555
        %585 = vmatprep.subr.mxu0 0.0
        %586 = vmatpush1.msra.mxu0 %v556
        %587 = vmatprep.subr.mxu0 0.0
        %588 = vmatpush1.msra.mxu0 0.0
        %589 = vmatprep.subr.mxu0 0.0
        %590 = vmatpush1.msra.mxu0 0.0
        %591 = vmatprep.subr.mxu0 0.0
        %592 = vmatpush1.msra.mxu0 0.0
        %593 = vmatprep.subr.mxu0 0.0
        %594 = vmatpush1.msra.mxu0 0.0
        %595 = vmatprep.subr.mxu0 0.0
        %596 = vmatpush1.msra.mxu0 0.0
        %597 = vmatprep.subr.mxu0 0.0
        %598 = vmatpush1.msra.mxu0 0.0
        %599 = vmatprep.subr.mxu0 0.0
        %600 = vmatpush1.msra.mxu0 0.0
        %601 = vmatprep.subr.mxu0 0.0
        %602 = vmatpush1.msra.mxu0 0.0
        %603 = vmatprep.subr.mxu0 0.0
        %604 = vmatpush1.msra.mxu0 0.0
        %605 = vmatprep.subr.mxu0 0.0
        %606 = vmatpush1.msra.mxu0 0.0
        %607 = vmatprep.subr.mxu0 0.0
        %608 = vmatpush1.msra.mxu0 0.0
        %609 = vmatprep.subr.mxu0 0.0
        %610 = vmatpush1.msra.mxu0 0.0
        %611 = vmatprep.subr.mxu0 0.0
        %612 = vmatpush1.msra.mxu0 0.0
        %613 = vmatprep.subr.mxu0 0.0
        %614 = vmatpush1.msra.mxu0 0.0
        %615 = vmatprep.subr.mxu0 0.0
        %616 = vmatpush1.msra.mxu0 0.0
        %617 = vmatprep.subr.mxu0 0.0
        %618 = vmatpush1.msra.mxu0 0.0
        %619 = vmatprep.subr.mxu0 0.0
        %620 = vmatpush1.msra.mxu0 0.0
        %621 = vmatprep.subr.mxu0 0.0
        %622 = vmatpush1.msra.mxu0 0.0
        %623 = vmatprep.subr.mxu0 0.0
        %624 = vmatpush1.msra.mxu0 0.0
        %625 = vmatprep.subr.mxu0 0.0
        %626 = vmatpush1.msra.mxu0 0.0
        %627 = vmatprep.subr.mxu0 0.0
        %628 = vmatpush1.msra.mxu0 0.0
        %629 = vmatprep.subr.mxu0 0.0
        %630 = vmatpush1.msra.mxu0 0.0
        %631 = vmatprep.subr.mxu0 0.0
        %632 = vmatpush1.msra.mxu0 0.0
        %633 = vmatprep.subr.mxu0 0.0
        %634 = vmatpush1.msra.mxu0 0.0
        %635 = vmatprep.mubr.f32.mxu0 0.0
        %636 = vmatmul.mubr.f32.gmra.mrb[0].mxu0 %v566
        %v637 = vpop.f32.mrb[0].mxu0
        %v638 = vadd.f32 %v562, %v637
        %v639 = vpop.f32.mrb[0].mxu0
        %640 = vmatprep.mubr.f32.mxu0 0.0
        %641 = vmatmul.mubr.f32.gmra.mrb[0].mxu0 %v569
        %v642 = vpop.f32.mrb[0].mxu0
        %v643 = vadd.f32 %v562, %v642
        %v644 = vpop.f32.mrb[0].mxu0
        %645 = vdwg.mxu0
        %v646 = vmax.f32 %v638, 0.0
        %v647 = vmax.f32 %v643, 0.0
        %v648 = vld [vmem:[%s3] sm:$0x1]
        %v650 = vlaneseq
        %v651 = vshrl.u32 %v650, 7
        %v652 = vsub.s32 0, %v651
        %v653 = vrot.slane %v648, %v652
        %v655 = vmul.f32 %v646, %v653
        %v656 = vmul.f32 %v647, %v653
        %v657 = vld [vmem:[%s4] sm:$0x1]
        %v659 = vlaneseq
        %v660 = vshrl.u32 %v659, 7
        %v661 = vsub.s32 0, %v660
        %v662 = vrot.slane %v657, %v661
        %v664 = vadd.f32 %v655, %v662
        %v665 = vadd.f32 %v656, %v662
        %vm668 = vcmask 1041408
        %v669 = vrot.slane %v664, 6
        %v670 = vrot.slane %v665, 6
        %v671 = vsel %vm668, %v669, %v670
        %v675 = vsel %vm668, 0.0, %v669
        %v676 = vsel %vm668, %v670, 0.0
        %vm679 = vcmask 1045504
        %v680 = vrot.slane %v675, 2
        %v681 = vrot.slane %v671, 2
        %v682 = vsel %vm679, %v680, %v681
        %v683 = vrot.slane %v676, 2
        %v684 = vsel %vm679, %v681, %v683
        %685 = vrot.lane.b32.xlu0 %v682, 8
        %v686 = vpop.permute.xlu0 %685
        %687 = vrot.lane.b32.xlu0 %v684, 8
        %v688 = vpop.permute.xlu0 %687
        %vm691 = vcmask 1043456
        %v692 = vrot.slane %v675, 4
        %v693 = vrot.slane %v671, 4
        %v694 = vsel %vm691, %v692, %v693
        %v695 = vrot.slane %v676, 4
        %v696 = vsel %vm691, %v693, %v695
        %697 = vrot.lane.b32.xlu0 %v694, 16
        %v698 = vpop.permute.xlu0 %697
        %699 = vrot.lane.b32.xlu0 %v696, 16
        %v700 = vpop.permute.xlu0 %699
        %vm703 = vcmask 64512
        %v704 = vsel %vm703, %v675, %v686
        %v705 = vsel %vm703, %v671, %v688
        %vm706 = vcmask 130048
        %v707 = vsel %vm706, %v704, %v698
        %v708 = vsel %vm706, %v705, %v700
        %v709 = vld [vmem:[%s5] sm:$0xff]
        %v710 = vld [vmem:[%s5 + $0x8] sm:$0xff]
        %v711 = vld [vmem:[%s5 + $0x10] sm:$0xff]
        %v712 = vld [vmem:[%s6] sm:$0x1]
        %v714 = vlaneseq
        %v715 = vshrl.u32 %v714, 7
        %v716 = vsub.s32 0, %v715
        %v717 = vrot.slane %v712, %v716
        %vm719 = vcmask 195584
        %v721 = vsel %vm719, %v707, 0
        %v724 = vsel %vm719, %v708, 0
        %726 = vmatprep.subr.mxu0 0.0
        %727 = vmatpush1.msra.mxu0 %v709
        %728 = vmatprep.subr.mxu0 0.0
        %729 = vmatpush1.msra.mxu0 %v710
        %730 = vmatprep.subr.mxu0 0.0
        %731 = vmatpush1.msra.mxu0 %v711
        %732 = vmatprep.subr.mxu0 0.0
        %733 = vmatpush1.msra.mxu0 0.0
        %734 = vmatprep.subr.mxu0 0.0
        %735 = vmatpush1.msra.mxu0 0.0
        %736 = vmatprep.subr.mxu0 0.0
        %737 = vmatpush1.msra.mxu0 0.0
        %738 = vmatprep.subr.mxu0 0.0
        %739 = vmatpush1.msra.mxu0 0.0
        %740 = vmatprep.subr.mxu0 0.0
        %741 = vmatpush1.msra.mxu0 0.0
        %742 = vmatprep.subr.mxu0 0.0
        %743 = vmatpush1.msra.mxu0 0.0
        %744 = vmatprep.subr.mxu0 0.0
        %745 = vmatpush1.msra.mxu0 0.0
        %746 = vmatprep.subr.mxu0 0.0
        %747 = vmatpush1.msra.mxu0 0.0
        %748 = vmatprep.subr.mxu0 0.0
        %749 = vmatpush1.msra.mxu0 0.0
        %750 = vmatprep.subr.mxu0 0.0
        %751 = vmatpush1.msra.mxu0 0.0
        %752 = vmatprep.subr.mxu0 0.0
        %753 = vmatpush1.msra.mxu0 0.0
        %754 = vmatprep.subr.mxu0 0.0
        %755 = vmatpush1.msra.mxu0 0.0
        %756 = vmatprep.subr.mxu0 0.0
        %757 = vmatpush1.msra.mxu0 0.0
        %758 = vmatprep.subr.mxu0 0.0
        %759 = vmatpush1.msra.mxu0 0.0
        %760 = vmatprep.subr.mxu0 0.0
        %761 = vmatpush1.msra.mxu0 0.0
        %762 = vmatprep.subr.mxu0 0.0
        %763 = vmatpush1.msra.mxu0 0.0
        %764 = vmatprep.subr.mxu0 0.0
        %765 = vmatpush1.msra.mxu0 0.0
        %766 = vmatprep.subr.mxu0 0.0
        %767 = vmatpush1.msra.mxu0 0.0
        %768 = vmatprep.subr.mxu0 0.0
        %769 = vmatpush1.msra.mxu0 0.0
        %770 = vmatprep.subr.mxu0 0.0
        %771 = vmatpush1.msra.mxu0 0.0
        %772 = vmatprep.subr.mxu0 0.0
        %773 = vmatpush1.msra.mxu0 0.0
        %774 = vmatprep.subr.mxu0 0.0
        %775 = vmatpush1.msra.mxu0 0.0
        %776 = vmatprep.subr.mxu0 0.0
        %777 = vmatpush1.msra.mxu0 0.0
        %778 = vmatprep.subr.mxu0 0.0
        %779 = vmatpush1.msra.mxu0 0.0
        %780 = vmatprep.subr.mxu0 0.0
        %781 = vmatpush1.msra.mxu0 0.0
        %782 = vmatprep.subr.mxu0 0.0
        %783 = vmatpush1.msra.mxu0 0.0
        %784 = vmatprep.subr.mxu0 0.0
        %785 = vmatpush1.msra.mxu0 0.0
        %786 = vmatprep.subr.mxu0 0.0
        %787 = vmatpush1.msra.mxu0 0.0
        %788 = vmatprep.subr.mxu0 0.0
        %789 = vmatpush1.msra.mxu0 0.0
        %790 = vmatprep.mubr.f32.mxu0 0.0
        %791 = vmatmul.mubr.f32.gmra.mrb[0].mxu0 %v721
        %v792 = vpop.f32.mrb[0].mxu0
        %v793 = vadd.f32 %v717, %v792
        %v794 = vpop.f32.mrb[0].mxu0
        %795 = vmatprep.mubr.f32.mxu0 0.0
        %796 = vmatmul.mubr.f32.gmra.mrb[0].mxu0 %v724
        %v797 = vpop.f32.mrb[0].mxu0
        %v798 = vadd.f32 %v717, %v797
        %v799 = vpop.f32.mrb[0].mxu0
        %800 = vdwg.mxu0
        %v801 = vmax.f32 %v793, 0.0
        %v802 = vmax.f32 %v798, 0.0
        %v803 = vld [vmem:[%s7] sm:$0x1]
        %v805 = vlaneseq
        %v806 = vshrl.u32 %v805, 7
        %v807 = vsub.s32 0, %v806
        %v808 = vrot.slane %v803, %v807
        %v810 = vmul.f32 %v801, %v808
        %v811 = vmul.f32 %v802, %v808
        %v812 = vld [vmem:[%s8] sm:$0x1]
        %v814 = vlaneseq
        %v815 = vshrl.u32 %v814, 7
        %v816 = vsub.s32 0, %v815
        %v817 = vrot.slane %v812, %v816
        %v819 = vadd.f32 %v810, %v817
        %v820 = vadd.f32 %v811, %v817
        %s821 = scalar_lea.vmem %s1, 64
        %v822 = vld [vmem:[%s821] sm:$0xff]
        %v823 = vld [vmem:[%s821 + $0x8] sm:$0xff]
        %v824 = vld [vmem:[%s821 + $0x10] sm:$0xff]
        %v825 = vld [vmem:[%s821 + $0x18] sm:$0xff]
        %v826 = vld [vmem:[%s821 + $0x20] sm:$0xff]
        %v827 = vld [vmem:[%s821 + $0x28] sm:$0xff]
        %v828 = vld [vmem:[%s821 + $0x30] sm:$0xff]
        %v829 = vld [vmem:[%s821 + $0x38] sm:$0xff]
        %s830 = scalar_lea.vmem %s2, 1
        %v831 = vld [vmem:[%s830] sm:$0x1]
        %v833 = vlaneseq
        %v834 = vshrl.u32 %v833, 7
        %v835 = vsub.s32 0, %v834
        %v836 = vrot.slane %v831, %v835
        %838 = vmatprep.subr.mxu0 0.0
        %839 = vmatpush1.msra.mxu0 %v822
        %840 = vmatprep.subr.mxu0 0.0
        %841 = vmatpush1.msra.mxu0 %v823
        %842 = vmatprep.subr.mxu0 0.0
        %843 = vmatpush1.msra.mxu0 %v824
        %844 = vmatprep.subr.mxu0 0.0
        %845 = vmatpush1.msra.mxu0 %v825
        %846 = vmatprep.subr.mxu0 0.0
        %847 = vmatpush1.msra.mxu0 %v826
        %848 = vmatprep.subr.mxu0 0.0
        %849 = vmatpush1.msra.mxu0 %v827
        %850 = vmatprep.subr.mxu0 0.0
        %851 = vmatpush1.msra.mxu0 %v828
        %852 = vmatprep.subr.mxu0 0.0
        %853 = vmatpush1.msra.mxu0 %v829
        %854 = vmatprep.subr.mxu0 0.0
        %855 = vmatpush1.msra.mxu0 0.0
        %856 = vmatprep.subr.mxu0 0.0
        %857 = vmatpush1.msra.mxu0 0.0
        %858 = vmatprep.subr.mxu0 0.0
        %859 = vmatpush1.msra.mxu0 0.0
        %860 = vmatprep.subr.mxu0 0.0
        %861 = vmatpush1.msra.mxu0 0.0
        %862 = vmatprep.subr.mxu0 0.0
        %863 = vmatpush1.msra.mxu0 0.0
        %864 = vmatprep.subr.mxu0 0.0
        %865 = vmatpush1.msra.mxu0 0.0
        %866 = vmatprep.subr.mxu0 0.0
        %867 = vmatpush1.msra.mxu0 0.0
        %868 = vmatprep.subr.mxu0 0.0
        %869 = vmatpush1.msra.mxu0 0.0
        %870 = vmatprep.subr.mxu0 0.0
        %871 = vmatpush1.msra.mxu0 0.0
        %872 = vmatprep.subr.mxu0 0.0
        %873 = vmatpush1.msra.mxu0 0.0
        %874 = vmatprep.subr.mxu0 0.0
        %875 = vmatpush1.msra.mxu0 0.0
        %876 = vmatprep.subr.mxu0 0.0
        %877 = vmatpush1.msra.mxu0 0.0
        %878 = vmatprep.subr.mxu0 0.0
        %879 = vmatpush1.msra.mxu0 0.0
        %880 = vmatprep.subr.mxu0 0.0
        %881 = vmatpush1.msra.mxu0 0.0
        %882 = vmatprep.subr.mxu0 0.0
        %883 = vmatpush1.msra.mxu0 0.0
        %884 = vmatprep.subr.mxu0 0.0
        %885 = vmatpush1.msra.mxu0 0.0
        %886 = vmatprep.subr.mxu0 0.0
        %887 = vmatpush1.msra.mxu0 0.0
        %888 = vmatprep.subr.mxu0 0.0
        %889 = vmatpush1.msra.mxu0 0.0
        %890 = vmatprep.subr.mxu0 0.0
        %891 = vmatpush1.msra.mxu0 0.0
        %892 = vmatprep.subr.mxu0 0.0
        %893 = vmatpush1.msra.mxu0 0.0
        %894 = vmatprep.subr.mxu0 0.0
        %895 = vmatpush1.msra.mxu0 0.0
        %896 = vmatprep.subr.mxu0 0.0
        %897 = vmatpush1.msra.mxu0 0.0
        %898 = vmatprep.subr.mxu0 0.0
        %899 = vmatpush1.msra.mxu0 0.0
        %900 = vmatprep.subr.mxu0 0.0
        %901 = vmatpush1.msra.mxu0 0.0
        %902 = vmatprep.mubr.f32.mxu0 0.0
        %903 = vmatmul.mubr.f32.gmra.mrb[0].mxu0 %v566
        %v904 = vpop.f32.mrb[0].mxu0
        %v905 = vadd.f32 %v836, %v904
        %v906 = vpop.f32.mrb[0].mxu0
        %907 = vmatprep.mubr.f32.mxu0 0.0
        %908 = vmatmul.mubr.f32.gmra.mrb[0].mxu0 %v569
        %v909 = vpop.f32.mrb[0].mxu0
        %v910 = vadd.f32 %v836, %v909
        %v911 = vpop.f32.mrb[0].mxu0
        %912 = vdwg.mxu0
        %v913 = vmax.f32 %v905, 0.0
        %v914 = vmax.f32 %v910, 0.0
        %s915 = scalar_lea.vmem %s3, 1
        %v916 = vld [vmem:[%s915] sm:$0x1]
        %v918 = vlaneseq
        %v919 = vshrl.u32 %v918, 7
        %v920 = vsub.s32 0, %v919
        %v921 = vrot.slane %v916, %v920
        %v923 = vmul.f32 %v913, %v921
        %v924 = vmul.f32 %v914, %v921
        %s925 = scalar_lea.vmem %s4, 1
        %v926 = vld [vmem:[%s925] sm:$0x1]
        %v928 = vlaneseq
        %v929 = vshrl.u32 %v928, 7
        %v930 = vsub.s32 0, %v929
        %v931 = vrot.slane %v926, %v930
        %v933 = vadd.f32 %v923, %v931
        %v934 = vadd.f32 %v924, %v931
        %v935 = vadd.f32 %v819, %v933
        %v936 = vadd.f32 %v820, %v934
        %v939 = vrot.slane %v935, 6
        %v940 = vrot.slane %v936, 6
        %v941 = vsel %vm668, %v939, %v940
        %v945 = vsel %vm668, 0.0, %v939
        %v946 = vsel %vm668, %v940, 0.0
        %v949 = vrot.slane %v945, 2
        %v950 = vrot.slane %v941, 2
        %v951 = vsel %vm679, %v949, %v950
        %v952 = vrot.slane %v946, 2
        %v953 = vsel %vm679, %v950, %v952
        %954 = vrot.lane.b32.xlu0 %v951, 8
        %v955 = vpop.permute.xlu0 %954
        %956 = vrot.lane.b32.xlu0 %v953, 8
        %v957 = vpop.permute.xlu0 %956
        %v960 = vrot.slane %v945, 4
        %v961 = vrot.slane %v941, 4
        %v962 = vsel %vm691, %v960, %v961
        %v963 = vrot.slane %v946, 4
        %v964 = vsel %vm691, %v961, %v963
        %965 = vrot.lane.b32.xlu0 %v962, 16
        %v966 = vpop.permute.xlu0 %965
        %967 = vrot.lane.b32.xlu0 %v964, 16
        %v968 = vpop.permute.xlu0 %967
        %v971 = vsel %vm703, %v945, %v955
        %v972 = vsel %vm703, %v941, %v957
        %v973 = vsel %vm706, %v971, %v966
        %v974 = vsel %vm706, %v972, %v968
        %s975 = scalar_lea.vmem %s5, 24
        %v976 = vld [vmem:[%s975] sm:$0xff]
        %v977 = vld [vmem:[%s975 + $0x8] sm:$0xff]
        %v978 = vld [vmem:[%s975 + $0x10] sm:$0xff]
        %s979 = scalar_lea.vmem %s6, 1
        %v980 = vld [vmem:[%s979] sm:$0x1]
        %v982 = vlaneseq
        %v983 = vshrl.u32 %v982, 7
        %v984 = vsub.s32 0, %v983
        %v985 = vrot.slane %v980, %v984
        %v988 = vsel %vm719, %v973, 0
        %v991 = vsel %vm719, %v974, 0
        %993 = vmatprep.subr.mxu0 0.0
        %994 = vmatpush1.msra.mxu0 %v976
        %995 = vmatprep.subr.mxu0 0.0
        %996 = vmatpush1.msra.mxu0 %v977
        %997 = vmatprep.subr.mxu0 0.0
        %998 = vmatpush1.msra.mxu0 %v978
        %999 = vmatprep.subr.mxu0 0.0
        %1000 = vmatpush1.msra.mxu0 0.0
        %1001 = vmatprep.subr.mxu0 0.0
        %1002 = vmatpush1.msra.mxu0 0.0
        %1003 = vmatprep.subr.mxu0 0.0
        %1004 = vmatpush1.msra.mxu0 0.0
        %1005 = vmatprep.subr.mxu0 0.0
        %1006 = vmatpush1.msra.mxu0 0.0
        %1007 = vmatprep.subr.mxu0 0.0
        %1008 = vmatpush1.msra.mxu0 0.0
        %1009 = vmatprep.subr.mxu0 0.0
        %1010 = vmatpush1.msra.mxu0 0.0
        %1011 = vmatprep.subr.mxu0 0.0
        %1012 = vmatpush1.msra.mxu0 0.0
        %1013 = vmatprep.subr.mxu0 0.0
        %1014 = vmatpush1.msra.mxu0 0.0
        %1015 = vmatprep.subr.mxu0 0.0
        %1016 = vmatpush1.msra.mxu0 0.0
        %1017 = vmatprep.subr.mxu0 0.0
        %1018 = vmatpush1.msra.mxu0 0.0
        %1019 = vmatprep.subr.mxu0 0.0
        %1020 = vmatpush1.msra.mxu0 0.0
        %1021 = vmatprep.subr.mxu0 0.0
        %1022 = vmatpush1.msra.mxu0 0.0
        %1023 = vmatprep.subr.mxu0 0.0
        %1024 = vmatpush1.msra.mxu0 0.0
        %1025 = vmatprep.subr.mxu0 0.0
        %1026 = vmatpush1.msra.mxu0 0.0
        %1027 = vmatprep.subr.mxu0 0.0
        %1028 = vmatpush1.msra.mxu0 0.0
        %1029 = vmatprep.subr.mxu0 0.0
        %1030 = vmatpush1.msra.mxu0 0.0
        %1031 = vmatprep.subr.mxu0 0.0
        %1032 = vmatpush1.msra.mxu0 0.0
        %1033 = vmatprep.subr.mxu0 0.0
        %1034 = vmatpush1.msra.mxu0 0.0
        %1035 = vmatprep.subr.mxu0 0.0
        %1036 = vmatpush1.msra.mxu0 0.0
        %1037 = vmatprep.subr.mxu0 0.0
        %1038 = vmatpush1.msra.mxu0 0.0
        %1039 = vmatprep.subr.mxu0 0.0
        %1040 = vmatpush1.msra.mxu0 0.0
        %1041 = vmatprep.subr.mxu0 0.0
        %1042 = vmatpush1.msra.mxu0 0.0
        %1043 = vmatprep.subr.mxu0 0.0
        %1044 = vmatpush1.msra.mxu0 0.0
        %1045 = vmatprep.subr.mxu0 0.0
        %1046 = vmatpush1.msra.mxu0 0.0
        %1047 = vmatprep.subr.mxu0 0.0
        %1048 = vmatpush1.msra.mxu0 0.0
        %1049 = vmatprep.subr.mxu0 0.0
        %1050 = vmatpush1.msra.mxu0 0.0
        %1051 = vmatprep.subr.mxu0 0.0
        %1052 = vmatpush1.msra.mxu0 0.0
        %1053 = vmatprep.subr.mxu0 0.0
        %1054 = vmatpush1.msra.mxu0 0.0
        %1055 = vmatprep.subr.mxu0 0.0
        %1056 = vmatpush1.msra.mxu0 0.0
        %1057 = vmatprep.mubr.f32.mxu0 0.0
        %1058 = vmatmul.mubr.f32.gmra.mrb[0].mxu0 %v988
        %v1059 = vpop.f32.mrb[0].mxu0
        %v1060 = vadd.f32 %v985, %v1059
        %v1061 = vpop.f32.mrb[0].mxu0
        %1062 = vmatprep.mubr.f32.mxu0 0.0
        %1063 = vmatmul.mubr.f32.gmra.mrb[0].mxu0 %v991
        %v1064 = vpop.f32.mrb[0].mxu0
        %v1065 = vadd.f32 %v985, %v1064
        %v1066 = vpop.f32.mrb[0].mxu0
        %1067 = vdwg.mxu0
        %v1068 = vmax.f32 %v1060, 0.0
        %v1069 = vmax.f32 %v1065, 0.0
        %s1070 = scalar_lea.vmem %s7, 1
        %v1071 = vld [vmem:[%s1070] sm:$0x1]
        %v1073 = vlaneseq
        %v1074 = vshrl.u32 %v1073, 7
        %v1075 = vsub.s32 0, %v1074
        %v1076 = vrot.slane %v1071, %v1075
        %v1078 = vmul.f32 %v1068, %v1076
        %v1079 = vmul.f32 %v1069, %v1076
        %s1080 = scalar_lea.vmem %s8, 1
        %v1081 = vld [vmem:[%s1080] sm:$0x1]
        %v1083 = vlaneseq
        %v1084 = vshrl.u32 %v1083, 7
        %v1085 = vsub.s32 0, %v1084
        %v1086 = vrot.slane %v1081, %v1085
        %v1088 = vadd.f32 %v1078, %v1086
        %v1089 = vadd.f32 %v1079, %v1086
        %s1090 = scalar_lea.vmem %s1, 128
        %v1091 = vld [vmem:[%s1090] sm:$0xff]
        %v1092 = vld [vmem:[%s1090 + $0x8] sm:$0xff]
        %v1093 = vld [vmem:[%s1090 + $0x10] sm:$0xff]
        %v1094 = vld [vmem:[%s1090 + $0x18] sm:$0xff]
        %v1095 = vld [vmem:[%s1090 + $0x20] sm:$0xff]
        %v1096 = vld [vmem:[%s1090 + $0x28] sm:$0xff]
        %v1097 = vld [vmem:[%s1090 + $0x30] sm:$0xff]
        %v1098 = vld [vmem:[%s1090 + $0x38] sm:$0xff]
        %s1099 = scalar_lea.vmem %s2, 2
        %v1100 = vld [vmem:[%s1099] sm:$0x1]
        %v1102 = vlaneseq
        %v1103 = vshrl.u32 %v1102, 7
        %v1104 = vsub.s32 0, %v1103
        %v1105 = vrot.slane %v1100, %v1104
        %1107 = vmatprep.subr.mxu0 0.0
        %1108 = vmatpush1.msra.mxu0 %v1091
        %1109 = vmatprep.subr.mxu0 0.0
        %1110 = vmatpush1.msra.mxu0 %v1092
        %1111 = vmatprep.subr.mxu0 0.0
        %1112 = vmatpush1.msra.mxu0 %v1093
        %1113 = vmatprep.subr.mxu0 0.0
        %1114 = vmatpush1.msra.mxu0 %v1094
        %1115 = vmatprep.subr.mxu0 0.0
        %1116 = vmatpush1.msra.mxu0 %v1095
        %1117 = vmatprep.subr.mxu0 0.0
        %1118 = vmatpush1.msra.mxu0 %v1096
        %1119 = vmatprep.subr.mxu0 0.0
        %1120 = vmatpush1.msra.mxu0 %v1097
        %1121 = vmatprep.subr.mxu0 0.0
        %1122 = vmatpush1.msra.mxu0 %v1098
        %1123 = vmatprep.subr.mxu0 0.0
        %1124 = vmatpush1.msra.mxu0 0.0
        %1125 = vmatprep.subr.mxu0 0.0
        %1126 = vmatpush1.msra.mxu0 0.0
        %1127 = vmatprep.subr.mxu0 0.0
        %1128 = vmatpush1.msra.mxu0 0.0
        %1129 = vmatprep.subr.mxu0 0.0
        %1130 = vmatpush1.msra.mxu0 0.0
        %1131 = vmatprep.subr.mxu0 0.0
        %1132 = vmatpush1.msra.mxu0 0.0
        %1133 = vmatprep.subr.mxu0 0.0
        %1134 = vmatpush1.msra.mxu0 0.0
        %1135 = vmatprep.subr.mxu0 0.0
        %1136 = vmatpush1.msra.mxu0 0.0
        %1137 = vmatprep.subr.mxu0 0.0
        %1138 = vmatpush1.msra.mxu0 0.0
        %1139 = vmatprep.subr.mxu0 0.0
        %1140 = vmatpush1.msra.mxu0 0.0
        %1141 = vmatprep.subr.mxu0 0.0
        %1142 = vmatpush1.msra.mxu0 0.0
        %1143 = vmatprep.subr.mxu0 0.0
        %1144 = vmatpush1.msra.mxu0 0.0
        %1145 = vmatprep.subr.mxu0 0.0
        %1146 = vmatpush1.msra.mxu0 0.0
        %1147 = vmatprep.subr.mxu0 0.0
        %1148 = vmatpush1.msra.mxu0 0.0
        %1149 = vmatprep.subr.mxu0 0.0
        %1150 = vmatpush1.msra.mxu0 0.0
        %1151 = vmatprep.subr.mxu0 0.0
        %1152 = vmatpush1.msra.mxu0 0.0
        %1153 = vmatprep.subr.mxu0 0.0
        %1154 = vmatpush1.msra.mxu0 0.0
        %1155 = vmatprep.subr.mxu0 0.0
        %1156 = vmatpush1.msra.mxu0 0.0
        %1157 = vmatprep.subr.mxu0 0.0
        %1158 = vmatpush1.msra.mxu0 0.0
        %1159 = vmatprep.subr.mxu0 0.0
        %1160 = vmatpush1.msra.mxu0 0.0
        %1161 = vmatprep.subr.mxu0 0.0
        %1162 = vmatpush1.msra.mxu0 0.0
        %1163 = vmatprep.subr.mxu0 0.0
        %1164 = vmatpush1.msra.mxu0 0.0
        %1165 = vmatprep.subr.mxu0 0.0
        %1166 = vmatpush1.msra.mxu0 0.0
        %1167 = vmatprep.subr.mxu0 0.0
        %1168 = vmatpush1.msra.mxu0 0.0
        %1169 = vmatprep.subr.mxu0 0.0
        %1170 = vmatpush1.msra.mxu0 0.0
        %1171 = vmatprep.mubr.f32.mxu0 0.0
        %1172 = vmatmul.mubr.f32.gmra.mrb[0].mxu0 %v566
        %v1173 = vpop.f32.mrb[0].mxu0
        %v1174 = vadd.f32 %v1105, %v1173
        %v1175 = vpop.f32.mrb[0].mxu0
        %1176 = vmatprep.mubr.f32.mxu0 0.0
        %1177 = vmatmul.mubr.f32.gmra.mrb[0].mxu0 %v569
        %v1178 = vpop.f32.mrb[0].mxu0
        %v1179 = vadd.f32 %v1105, %v1178
        %v1180 = vpop.f32.mrb[0].mxu0
        %1181 = vdwg.mxu0
        %v1182 = vmax.f32 %v1174, 0.0
        %v1183 = vmax.f32 %v1179, 0.0
        %s1184 = scalar_lea.vmem %s3, 2
        %v1185 = vld [vmem:[%s1184] sm:$0x1]
        %v1187 = vlaneseq
        %v1188 = vshrl.u32 %v1187, 7
        %v1189 = vsub.s32 0, %v1188
        %v1190 = vrot.slane %v1185, %v1189
        %v1192 = vmul.f32 %v1182, %v1190
        %v1193 = vmul.f32 %v1183, %v1190
        %s1194 = scalar_lea.vmem %s4, 2
        %v1195 = vld [vmem:[%s1194] sm:$0x1]
        %v1197 = vlaneseq
        %v1198 = vshrl.u32 %v1197, 7
        %v1199 = vsub.s32 0, %v1198
        %v1200 = vrot.slane %v1195, %v1199
        %v1202 = vadd.f32 %v1192, %v1200
        %v1203 = vadd.f32 %v1193, %v1200
        %v1204 = vadd.f32 %v1088, %v1202
        %v1205 = vadd.f32 %v1089, %v1203
        %v1208 = vrot.slane %v1204, 6
        %v1209 = vrot.slane %v1205, 6
        %v1210 = vsel %vm668, %v1208, %v1209
        %v1214 = vsel %vm668, 0.0, %v1208
        %v1215 = vsel %vm668, %v1209, 0.0
        %v1218 = vrot.slane %v1214, 2
        %v1219 = vrot.slane %v1210, 2
        %v1220 = vsel %vm679, %v1218, %v1219
        %v1221 = vrot.slane %v1215, 2
        %v1222 = vsel %vm679, %v1219, %v1221
        %1223 = vrot.lane.b32.xlu0 %v1220, 8
        %v1224 = vpop.permute.xlu0 %1223
        %1225 = vrot.lane.b32.xlu0 %v1222, 8
        %v1226 = vpop.permute.xlu0 %1225
        %v1229 = vrot.slane %v1214, 4
        %v1230 = vrot.slane %v1210, 4
        %v1231 = vsel %vm691, %v1229, %v1230
        %v1232 = vrot.slane %v1215, 4
        %v1233 = vsel %vm691, %v1230, %v1232
        %1234 = vrot.lane.b32.xlu0 %v1231, 16
        %v1235 = vpop.permute.xlu0 %1234
        %1236 = vrot.lane.b32.xlu0 %v1233, 16
        %v1237 = vpop.permute.xlu0 %1236
        %v1240 = vsel %vm703, %v1214, %v1224
        %v1241 = vsel %vm703, %v1210, %v1226
        %v1242 = vsel %vm706, %v1240, %v1235
        %v1243 = vsel %vm706, %v1241, %v1237
        %s1244 = scalar_lea.vmem %s5, 48
        %v1245 = vld [vmem:[%s1244] sm:$0xff]
        %v1246 = vld [vmem:[%s1244 + $0x8] sm:$0xff]
        %v1247 = vld [vmem:[%s1244 + $0x10] sm:$0xff]
        %s1248 = scalar_lea.vmem %s6, 2
        %v1249 = vld [vmem:[%s1248] sm:$0x1]
        %v1251 = vlaneseq
        %v1252 = vshrl.u32 %v1251, 7
        %v1253 = vsub.s32 0, %v1252
        %v1254 = vrot.slane %v1249, %v1253
        %v1257 = vsel %vm719, %v1242, 0
        %v1260 = vsel %vm719, %v1243, 0
        %1262 = vmatprep.subr.mxu0 0.0
        %1263 = vmatpush1.msra.mxu0 %v1245
        %1264 = vmatprep.subr.mxu0 0.0
        %1265 = vmatpush1.msra.mxu0 %v1246
        %1266 = vmatprep.subr.mxu0 0.0
        %1267 = vmatpush1.msra.mxu0 %v1247
        %1268 = vmatprep.subr.mxu0 0.0
        %1269 = vmatpush1.msra.mxu0 0.0
        %1270 = vmatprep.subr.mxu0 0.0
        %1271 = vmatpush1.msra.mxu0 0.0
        %1272 = vmatprep.subr.mxu0 0.0
        %1273 = vmatpush1.msra.mxu0 0.0
        %1274 = vmatprep.subr.mxu0 0.0
        %1275 = vmatpush1.msra.mxu0 0.0
        %1276 = vmatprep.subr.mxu0 0.0
        %1277 = vmatpush1.msra.mxu0 0.0
        %1278 = vmatprep.subr.mxu0 0.0
        %1279 = vmatpush1.msra.mxu0 0.0
        %1280 = vmatprep.subr.mxu0 0.0
        %1281 = vmatpush1.msra.mxu0 0.0
        %1282 = vmatprep.subr.mxu0 0.0
        %1283 = vmatpush1.msra.mxu0 0.0
        %1284 = vmatprep.subr.mxu0 0.0
        %1285 = vmatpush1.msra.mxu0 0.0
        %1286 = vmatprep.subr.mxu0 0.0
        %1287 = vmatpush1.msra.mxu0 0.0
        %1288 = vmatprep.subr.mxu0 0.0
        %1289 = vmatpush1.msra.mxu0 0.0
        %1290 = vmatprep.subr.mxu0 0.0
        %1291 = vmatpush1.msra.mxu0 0.0
        %1292 = vmatprep.subr.mxu0 0.0
        %1293 = vmatpush1.msra.mxu0 0.0
        %1294 = vmatprep.subr.mxu0 0.0
        %1295 = vmatpush1.msra.mxu0 0.0
        %1296 = vmatprep.subr.mxu0 0.0
        %1297 = vmatpush1.msra.mxu0 0.0
        %1298 = vmatprep.subr.mxu0 0.0
        %1299 = vmatpush1.msra.mxu0 0.0
        %1300 = vmatprep.subr.mxu0 0.0
        %1301 = vmatpush1.msra.mxu0 0.0
        %1302 = vmatprep.subr.mxu0 0.0
        %1303 = vmatpush1.msra.mxu0 0.0
        %1304 = vmatprep.subr.mxu0 0.0
        %1305 = vmatpush1.msra.mxu0 0.0
        %1306 = vmatprep.subr.mxu0 0.0
        %1307 = vmatpush1.msra.mxu0 0.0
        %1308 = vmatprep.subr.mxu0 0.0
        %1309 = vmatpush1.msra.mxu0 0.0
        %1310 = vmatprep.subr.mxu0 0.0
        %1311 = vmatpush1.msra.mxu0 0.0
        %1312 = vmatprep.subr.mxu0 0.0
        %1313 = vmatpush1.msra.mxu0 0.0
        %1314 = vmatprep.subr.mxu0 0.0
        %1315 = vmatpush1.msra.mxu0 0.0
        %1316 = vmatprep.subr.mxu0 0.0
        %1317 = vmatpush1.msra.mxu0 0.0
        %1318 = vmatprep.subr.mxu0 0.0
        %1319 = vmatpush1.msra.mxu0 0.0
        %1320 = vmatprep.subr.mxu0 0.0
        %1321 = vmatpush1.msra.mxu0 0.0
        %1322 = vmatprep.subr.mxu0 0.0
        %1323 = vmatpush1.msra.mxu0 0.0
        %1324 = vmatprep.subr.mxu0 0.0
        %1325 = vmatpush1.msra.mxu0 0.0
        %1326 = vmatprep.mubr.f32.mxu0 0.0
        %1327 = vmatmul.mubr.f32.gmra.mrb[0].mxu0 %v1257
        %v1328 = vpop.f32.mrb[0].mxu0
        %v1329 = vadd.f32 %v1254, %v1328
        %v1330 = vpop.f32.mrb[0].mxu0
        %1331 = vmatprep.mubr.f32.mxu0 0.0
        %1332 = vmatmul.mubr.f32.gmra.mrb[0].mxu0 %v1260
        %v1333 = vpop.f32.mrb[0].mxu0
        %v1334 = vadd.f32 %v1254, %v1333
        %v1335 = vpop.f32.mrb[0].mxu0
        %1336 = vdwg.mxu0
        %v1337 = vmax.f32 %v1329, 0.0
        %v1338 = vmax.f32 %v1334, 0.0
        %s1339 = scalar_lea.vmem %s7, 2
        %v1340 = vld [vmem:[%s1339] sm:$0x1]
        %v1342 = vlaneseq
        %v1343 = vshrl.u32 %v1342, 7
        %v1344 = vsub.s32 0, %v1343
        %v1345 = vrot.slane %v1340, %v1344
        %v1347 = vmul.f32 %v1337, %v1345
        %v1348 = vmul.f32 %v1338, %v1345
        %s1349 = scalar_lea.vmem %s8, 2
        %v1350 = vld [vmem:[%s1349] sm:$0x1]
        %v1352 = vlaneseq
        %v1353 = vshrl.u32 %v1352, 7
        %v1354 = vsub.s32 0, %v1353
        %v1355 = vrot.slane %v1350, %v1354
        %v1357 = vadd.f32 %v1347, %v1355
        %v1358 = vadd.f32 %v1348, %v1355
        %s1359 = scalar_lea.vmem %s1, 192
        %v1360 = vld [vmem:[%s1359] sm:$0xff]
        %v1361 = vld [vmem:[%s1359 + $0x8] sm:$0xff]
        %v1362 = vld [vmem:[%s1359 + $0x10] sm:$0xff]
        %v1363 = vld [vmem:[%s1359 + $0x18] sm:$0xff]
        %v1364 = vld [vmem:[%s1359 + $0x20] sm:$0xff]
        %v1365 = vld [vmem:[%s1359 + $0x28] sm:$0xff]
        %v1366 = vld [vmem:[%s1359 + $0x30] sm:$0xff]
        %v1367 = vld [vmem:[%s1359 + $0x38] sm:$0xff]
        %s1368 = scalar_lea.vmem %s2, 3
        %v1369 = vld [vmem:[%s1368] sm:$0x1]
        %v1371 = vlaneseq
        %v1372 = vshrl.u32 %v1371, 7
        %v1373 = vsub.s32 0, %v1372
        %v1374 = vrot.slane %v1369, %v1373
        %1376 = vmatprep.subr.mxu0 0.0
        %1377 = vmatpush1.msra.mxu0 %v1360
        %1378 = vmatprep.subr.mxu0 0.0
        %1379 = vmatpush1.msra.mxu0 %v1361
        %1380 = vmatprep.subr.mxu0 0.0
        %1381 = vmatpush1.msra.mxu0 %v1362
        %1382 = vmatprep.subr.mxu0 0.0
        %1383 = vmatpush1.msra.mxu0 %v1363
        %1384 = vmatprep.subr.mxu0 0.0
        %1385 = vmatpush1.msra.mxu0 %v1364
        %1386 = vmatprep.subr.mxu0 0.0
        %1387 = vmatpush1.msra.mxu0 %v1365
        %1388 = vmatprep.subr.mxu0 0.0
        %1389 = vmatpush1.msra.mxu0 %v1366
        %1390 = vmatprep.subr.mxu0 0.0
        %1391 = vmatpush1.msra.mxu0 %v1367
        %1392 = vmatprep.subr.mxu0 0.0
        %1393 = vmatpush1.msra.mxu0 0.0
        %1394 = vmatprep.subr.mxu0 0.0
        %1395 = vmatpush1.msra.mxu0 0.0
        %1396 = vmatprep.subr.mxu0 0.0
        %1397 = vmatpush1.msra.mxu0 0.0
        %1398 = vmatprep.subr.mxu0 0.0
        %1399 = vmatpush1.msra.mxu0 0.0
        %1400 = vmatprep.subr.mxu0 0.0
        %1401 = vmatpush1.msra.mxu0 0.0
        %1402 = vmatprep.subr.mxu0 0.0
        %1403 = vmatpush1.msra.mxu0 0.0
        %1404 = vmatprep.subr.mxu0 0.0
        %1405 = vmatpush1.msra.mxu0 0.0
        %1406 = vmatprep.subr.mxu0 0.0
        %1407 = vmatpush1.msra.mxu0 0.0
        %1408 = vmatprep.subr.mxu0 0.0
        %1409 = vmatpush1.msra.mxu0 0.0
        %1410 = vmatprep.subr.mxu0 0.0
        %1411 = vmatpush1.msra.mxu0 0.0
        %1412 = vmatprep.subr.mxu0 0.0
        %1413 = vmatpush1.msra.mxu0 0.0
        %1414 = vmatprep.subr.mxu0 0.0
        %1415 = vmatpush1.msra.mxu0 0.0
        %1416 = vmatprep.subr.mxu0 0.0
        %1417 = vmatpush1.msra.mxu0 0.0
        %1418 = vmatprep.subr.mxu0 0.0
        %1419 = vmatpush1.msra.mxu0 0.0
        %1420 = vmatprep.subr.mxu0 0.0
        %1421 = vmatpush1.msra.mxu0 0.0
        %1422 = vmatprep.subr.mxu0 0.0
        %1423 = vmatpush1.msra.mxu0 0.0
        %1424 = vmatprep.subr.mxu0 0.0
        %1425 = vmatpush1.msra.mxu0 0.0
        %1426 = vmatprep.subr.mxu0 0.0
        %1427 = vmatpush1.msra.mxu0 0.0
        %1428 = vmatprep.subr.mxu0 0.0
        %1429 = vmatpush1.msra.mxu0 0.0
        %1430 = vmatprep.subr.mxu0 0.0
        %1431 = vmatpush1.msra.mxu0 0.0
        %1432 = vmatprep.subr.mxu0 0.0
        %1433 = vmatpush1.msra.mxu0 0.0
        %1434 = vmatprep.subr.mxu0 0.0
        %1435 = vmatpush1.msra.mxu0 0.0
        %1436 = vmatprep.subr.mxu0 0.0
        %1437 = vmatpush1.msra.mxu0 0.0
        %1438 = vmatprep.subr.mxu0 0.0
        %1439 = vmatpush1.msra.mxu0 0.0
        %1440 = vmatprep.mubr.f32.mxu0 0.0
        %1441 = vmatmul.mubr.f32.gmra.mrb[0].mxu0 %v566
        %v1442 = vpop.f32.mrb[0].mxu0
        %v1443 = vadd.f32 %v1374, %v1442
        %v1444 = vpop.f32.mrb[0].mxu0
        %1445 = vmatprep.mubr.f32.mxu0 0.0
        %1446 = vmatmul.mubr.f32.gmra.mrb[0].mxu0 %v569
        %v1447 = vpop.f32.mrb[0].mxu0
        %v1448 = vadd.f32 %v1374, %v1447
        %v1449 = vpop.f32.mrb[0].mxu0
        %1450 = vdwg.mxu0
        %v1451 = vmax.f32 %v1443, 0.0
        %v1452 = vmax.f32 %v1448, 0.0
        %s1453 = scalar_lea.vmem %s3, 3
        %v1454 = vld [vmem:[%s1453] sm:$0x1]
        %v1456 = vlaneseq
        %v1457 = vshrl.u32 %v1456, 7
        %v1458 = vsub.s32 0, %v1457
        %v1459 = vrot.slane %v1454, %v1458
        %v1461 = vmul.f32 %v1451, %v1459
        %v1462 = vmul.f32 %v1452, %v1459
        %s1463 = scalar_lea.vmem %s4, 3
        %v1464 = vld [vmem:[%s1463] sm:$0x1]
        %v1466 = vlaneseq
        %v1467 = vshrl.u32 %v1466, 7
        %v1468 = vsub.s32 0, %v1467
        %v1469 = vrot.slane %v1464, %v1468
        %v1471 = vadd.f32 %v1461, %v1469
        %v1472 = vadd.f32 %v1462, %v1469
        %v1473 = vadd.f32 %v1357, %v1471
        %v1474 = vadd.f32 %v1358, %v1472
        %v1477 = vrot.slane %v1473, 6
        %v1478 = vrot.slane %v1474, 6
        %v1479 = vsel %vm668, %v1477, %v1478
        %v1483 = vsel %vm668, 0.0, %v1477
        %v1484 = vsel %vm668, %v1478, 0.0
        %v1487 = vrot.slane %v1483, 2
        %v1488 = vrot.slane %v1479, 2
        %v1489 = vsel %vm679, %v1487, %v1488
        %v1490 = vrot.slane %v1484, 2
        %v1491 = vsel %vm679, %v1488, %v1490
        %1492 = vrot.lane.b32.xlu0 %v1489, 8
        %v1493 = vpop.permute.xlu0 %1492
        %1494 = vrot.lane.b32.xlu0 %v1491, 8
        %v1495 = vpop.permute.xlu0 %1494
        %v1498 = vrot.slane %v1483, 4
        %v1499 = vrot.slane %v1479, 4
        %v1500 = vsel %vm691, %v1498, %v1499
        %v1501 = vrot.slane %v1484, 4
        %v1502 = vsel %vm691, %v1499, %v1501
        %1503 = vrot.lane.b32.xlu0 %v1500, 16
        %v1504 = vpop.permute.xlu0 %1503
        %1505 = vrot.lane.b32.xlu0 %v1502, 16
        %v1506 = vpop.permute.xlu0 %1505
        %v1509 = vsel %vm703, %v1483, %v1493
        %v1510 = vsel %vm703, %v1479, %v1495
        %v1511 = vsel %vm706, %v1509, %v1504
        %v1512 = vsel %vm706, %v1510, %v1506
        %s1513 = scalar_lea.vmem %s5, 72
        %v1514 = vld [vmem:[%s1513] sm:$0xff]
        %v1515 = vld [vmem:[%s1513 + $0x8] sm:$0xff]
        %v1516 = vld [vmem:[%s1513 + $0x10] sm:$0xff]
        %s1517 = scalar_lea.vmem %s6, 3
        %v1518 = vld [vmem:[%s1517] sm:$0x1]
        %v1520 = vlaneseq
        %v1521 = vshrl.u32 %v1520, 7
        %v1522 = vsub.s32 0, %v1521
        %v1523 = vrot.slane %v1518, %v1522
        %v1526 = vsel %vm719, %v1511, 0
        %v1529 = vsel %vm719, %v1512, 0
        %1531 = vmatprep.subr.mxu0 0.0
        %1532 = vmatpush1.msra.mxu0 %v1514
        %1533 = vmatprep.subr.mxu0 0.0
        %1534 = vmatpush1.msra.mxu0 %v1515
        %1535 = vmatprep.subr.mxu0 0.0
        %1536 = vmatpush1.msra.mxu0 %v1516
        %1537 = vmatprep.subr.mxu0 0.0
        %1538 = vmatpush1.msra.mxu0 0.0
        %1539 = vmatprep.subr.mxu0 0.0
        %1540 = vmatpush1.msra.mxu0 0.0
        %1541 = vmatprep.subr.mxu0 0.0
        %1542 = vmatpush1.msra.mxu0 0.0
        %1543 = vmatprep.subr.mxu0 0.0
        %1544 = vmatpush1.msra.mxu0 0.0
        %1545 = vmatprep.subr.mxu0 0.0
        %1546 = vmatpush1.msra.mxu0 0.0
        %1547 = vmatprep.subr.mxu0 0.0
        %1548 = vmatpush1.msra.mxu0 0.0
        %1549 = vmatprep.subr.mxu0 0.0
        %1550 = vmatpush1.msra.mxu0 0.0
        %1551 = vmatprep.subr.mxu0 0.0
        %1552 = vmatpush1.msra.mxu0 0.0
        %1553 = vmatprep.subr.mxu0 0.0
        %1554 = vmatpush1.msra.mxu0 0.0
        %1555 = vmatprep.subr.mxu0 0.0
        %1556 = vmatpush1.msra.mxu0 0.0
        %1557 = vmatprep.subr.mxu0 0.0
        %1558 = vmatpush1.msra.mxu0 0.0
        %1559 = vmatprep.subr.mxu0 0.0
        %1560 = vmatpush1.msra.mxu0 0.0
        %1561 = vmatprep.subr.mxu0 0.0
        %1562 = vmatpush1.msra.mxu0 0.0
        %1563 = vmatprep.subr.mxu0 0.0
        %1564 = vmatpush1.msra.mxu0 0.0
        %1565 = vmatprep.subr.mxu0 0.0
        %1566 = vmatpush1.msra.mxu0 0.0
        %1567 = vmatprep.subr.mxu0 0.0
        %1568 = vmatpush1.msra.mxu0 0.0
        %1569 = vmatprep.subr.mxu0 0.0
        %1570 = vmatpush1.msra.mxu0 0.0
        %1571 = vmatprep.subr.mxu0 0.0
        %1572 = vmatpush1.msra.mxu0 0.0
        %1573 = vmatprep.subr.mxu0 0.0
        %1574 = vmatpush1.msra.mxu0 0.0
        %1575 = vmatprep.subr.mxu0 0.0
        %1576 = vmatpush1.msra.mxu0 0.0
        %1577 = vmatprep.subr.mxu0 0.0
        %1578 = vmatpush1.msra.mxu0 0.0
        %1579 = vmatprep.subr.mxu0 0.0
        %1580 = vmatpush1.msra.mxu0 0.0
        %1581 = vmatprep.subr.mxu0 0.0
        %1582 = vmatpush1.msra.mxu0 0.0
        %1583 = vmatprep.subr.mxu0 0.0
        %1584 = vmatpush1.msra.mxu0 0.0
        %1585 = vmatprep.subr.mxu0 0.0
        %1586 = vmatpush1.msra.mxu0 0.0
        %1587 = vmatprep.subr.mxu0 0.0
        %1588 = vmatpush1.msra.mxu0 0.0
        %1589 = vmatprep.subr.mxu0 0.0
        %1590 = vmatpush1.msra.mxu0 0.0
        %1591 = vmatprep.subr.mxu0 0.0
        %1592 = vmatpush1.msra.mxu0 0.0
        %1593 = vmatprep.subr.mxu0 0.0
        %1594 = vmatpush1.msra.mxu0 0.0
        %1595 = vmatprep.mubr.f32.mxu0 0.0
        %1596 = vmatmul.mubr.f32.gmra.mrb[0].mxu0 %v1526
        %v1597 = vpop.f32.mrb[0].mxu0
        %v1598 = vadd.f32 %v1523, %v1597
        %v1599 = vpop.f32.mrb[0].mxu0
        %1600 = vmatprep.mubr.f32.mxu0 0.0
        %1601 = vmatmul.mubr.f32.gmra.mrb[0].mxu0 %v1529
        %v1602 = vpop.f32.mrb[0].mxu0
        %v1603 = vadd.f32 %v1523, %v1602
        %v1604 = vpop.f32.mrb[0].mxu0
        %1605 = vdwg.mxu0
        %v1606 = vmax.f32 %v1598, 0.0
        %v1607 = vmax.f32 %v1603, 0.0
        %s1608 = scalar_lea.vmem %s7, 3
        %v1609 = vld [vmem:[%s1608] sm:$0x1]
        %v1611 = vlaneseq
        %v1612 = vshrl.u32 %v1611, 7
        %v1613 = vsub.s32 0, %v1612
        %v1614 = vrot.slane %v1609, %v1613
        %v1616 = vmul.f32 %v1606, %v1614
        %v1617 = vmul.f32 %v1607, %v1614
        %s1618 = scalar_lea.vmem %s8, 3
        %v1619 = vld [vmem:[%s1618] sm:$0x1]
        %v1621 = vlaneseq
        %v1622 = vshrl.u32 %v1621, 7
        %v1623 = vsub.s32 0, %v1622
        %v1624 = vrot.slane %v1619, %v1623
        %v1626 = vadd.f32 %v1616, %v1624
        %v1627 = vadd.f32 %v1617, %v1624
        %s1628 = scalar_lea.vmem %s1, 256
        %v1629 = vld [vmem:[%s1628] sm:$0xff]
        %v1630 = vld [vmem:[%s1628 + $0x8] sm:$0xff]
        %v1631 = vld [vmem:[%s1628 + $0x10] sm:$0xff]
        %v1632 = vld [vmem:[%s1628 + $0x18] sm:$0xff]
        %v1633 = vld [vmem:[%s1628 + $0x20] sm:$0xff]
        %v1634 = vld [vmem:[%s1628 + $0x28] sm:$0xff]
        %v1635 = vld [vmem:[%s1628 + $0x30] sm:$0xff]
        %v1636 = vld [vmem:[%s1628 + $0x38] sm:$0xff]
        %s1637 = scalar_lea.vmem %s2, 4
        %v1638 = vld [vmem:[%s1637] sm:$0x1]
        %v1640 = vlaneseq
        %v1641 = vshrl.u32 %v1640, 7
        %v1642 = vsub.s32 0, %v1641
        %v1643 = vrot.slane %v1638, %v1642
        %1645 = vmatprep.subr.mxu0 0.0
        %1646 = vmatpush1.msra.mxu0 %v1629
        %1647 = vmatprep.subr.mxu0 0.0
        %1648 = vmatpush1.msra.mxu0 %v1630
        %1649 = vmatprep.subr.mxu0 0.0
        %1650 = vmatpush1.msra.mxu0 %v1631
        %1651 = vmatprep.subr.mxu0 0.0
        %1652 = vmatpush1.msra.mxu0 %v1632
        %1653 = vmatprep.subr.mxu0 0.0
        %1654 = vmatpush1.msra.mxu0 %v1633
        %1655 = vmatprep.subr.mxu0 0.0
        %1656 = vmatpush1.msra.mxu0 %v1634
        %1657 = vmatprep.subr.mxu0 0.0
        %1658 = vmatpush1.msra.mxu0 %v1635
        %1659 = vmatprep.subr.mxu0 0.0
        %1660 = vmatpush1.msra.mxu0 %v1636
        %1661 = vmatprep.subr.mxu0 0.0
        %1662 = vmatpush1.msra.mxu0 0.0
        %1663 = vmatprep.subr.mxu0 0.0
        %1664 = vmatpush1.msra.mxu0 0.0
        %1665 = vmatprep.subr.mxu0 0.0
        %1666 = vmatpush1.msra.mxu0 0.0
        %1667 = vmatprep.subr.mxu0 0.0
        %1668 = vmatpush1.msra.mxu0 0.0
        %1669 = vmatprep.subr.mxu0 0.0
        %1670 = vmatpush1.msra.mxu0 0.0
        %1671 = vmatprep.subr.mxu0 0.0
        %1672 = vmatpush1.msra.mxu0 0.0
        %1673 = vmatprep.subr.mxu0 0.0
        %1674 = vmatpush1.msra.mxu0 0.0
        %1675 = vmatprep.subr.mxu0 0.0
        %1676 = vmatpush1.msra.mxu0 0.0
        %1677 = vmatprep.subr.mxu0 0.0
        %1678 = vmatpush1.msra.mxu0 0.0
        %1679 = vmatprep.subr.mxu0 0.0
        %1680 = vmatpush1.msra.mxu0 0.0
        %1681 = vmatprep.subr.mxu0 0.0
        %1682 = vmatpush1.msra.mxu0 0.0
        %1683 = vmatprep.subr.mxu0 0.0
        %1684 = vmatpush1.msra.mxu0 0.0
        %1685 = vmatprep.subr.mxu0 0.0
        %1686 = vmatpush1.msra.mxu0 0.0
        %1687 = vmatprep.subr.mxu0 0.0
        %1688 = vmatpush1.msra.mxu0 0.0
        %1689 = vmatprep.subr.mxu0 0.0
        %1690 = vmatpush1.msra.mxu0 0.0
        %1691 = vmatprep.subr.mxu0 0.0
        %1692 = vmatpush1.msra.mxu0 0.0
        %1693 = vmatprep.subr.mxu0 0.0
        %1694 = vmatpush1.msra.mxu0 0.0
        %1695 = vmatprep.subr.mxu0 0.0
        %1696 = vmatpush1.msra.mxu0 0.0
        %1697 = vmatprep.subr.mxu0 0.0
        %1698 = vmatpush1.msra.mxu0 0.0
        %1699 = vmatprep.subr.mxu0 0.0
        %1700 = vmatpush1.msra.mxu0 0.0
        %1701 = vmatprep.subr.mxu0 0.0
        %1702 = vmatpush1.msra.mxu0 0.0
        %1703 = vmatprep.subr.mxu0 0.0
        %1704 = vmatpush1.msra.mxu0 0.0
        %1705 = vmatprep.subr.mxu0 0.0
        %1706 = vmatpush1.msra.mxu0 0.0
        %1707 = vmatprep.subr.mxu0 0.0
        %1708 = vmatpush1.msra.mxu0 0.0
        %1709 = vmatprep.mubr.f32.mxu0 0.0
        %1710 = vmatmul.mubr.f32.gmra.mrb[0].mxu0 %v566
        %v1711 = vpop.f32.mrb[0].mxu0
        %v1712 = vadd.f32 %v1643, %v1711
        %v1713 = vpop.f32.mrb[0].mxu0
        %1714 = vmatprep.mubr.f32.mxu0 0.0
        %1715 = vmatmul.mubr.f32.gmra.mrb[0].mxu0 %v569
        %v1716 = vpop.f32.mrb[0].mxu0
        %v1717 = vadd.f32 %v1643, %v1716
        %v1718 = vpop.f32.mrb[0].mxu0
        %1719 = vdwg.mxu0
        %v1720 = vmax.f32 %v1712, 0.0
        %v1721 = vmax.f32 %v1717, 0.0
        %s1722 = scalar_lea.vmem %s3, 4
        %v1723 = vld [vmem:[%s1722] sm:$0x1]
        %v1725 = vlaneseq
        %v1726 = vshrl.u32 %v1725, 7
        %v1727 = vsub.s32 0, %v1726
        %v1728 = vrot.slane %v1723, %v1727
        %v1730 = vmul.f32 %v1720, %v1728
        %v1731 = vmul.f32 %v1721, %v1728
        %s1732 = scalar_lea.vmem %s4, 4
        %v1733 = vld [vmem:[%s1732] sm:$0x1]
        %v1735 = vlaneseq
        %v1736 = vshrl.u32 %v1735, 7
        %v1737 = vsub.s32 0, %v1736
        %v1738 = vrot.slane %v1733, %v1737
        %v1740 = vadd.f32 %v1730, %v1738
        %v1741 = vadd.f32 %v1731, %v1738
        %v1742 = vadd.f32 %v1626, %v1740
        %v1743 = vadd.f32 %v1627, %v1741
        %v1746 = vrot.slane %v1742, 6
        %v1747 = vrot.slane %v1743, 6
        %v1748 = vsel %vm668, %v1746, %v1747
        %v1752 = vsel %vm668, 0.0, %v1746
        %v1753 = vsel %vm668, %v1747, 0.0
        %v1756 = vrot.slane %v1752, 2
        %v1757 = vrot.slane %v1748, 2
        %v1758 = vsel %vm679, %v1756, %v1757
        %v1759 = vrot.slane %v1753, 2
        %v1760 = vsel %vm679, %v1757, %v1759
        %1761 = vrot.lane.b32.xlu0 %v1758, 8
        %v1762 = vpop.permute.xlu0 %1761
        %1763 = vrot.lane.b32.xlu0 %v1760, 8
        %v1764 = vpop.permute.xlu0 %1763
        %v1767 = vrot.slane %v1752, 4
        %v1768 = vrot.slane %v1748, 4
        %v1769 = vsel %vm691, %v1767, %v1768
        %v1770 = vrot.slane %v1753, 4
        %v1771 = vsel %vm691, %v1768, %v1770
        %1772 = vrot.lane.b32.xlu0 %v1769, 16
        %v1773 = vpop.permute.xlu0 %1772
        %1774 = vrot.lane.b32.xlu0 %v1771, 16
        %v1775 = vpop.permute.xlu0 %1774
        %v1778 = vsel %vm703, %v1752, %v1762
        %v1779 = vsel %vm703, %v1748, %v1764
        %v1780 = vsel %vm706, %v1778, %v1773
        %v1781 = vsel %vm706, %v1779, %v1775
        %s1782 = scalar_lea.vmem %s5, 96
        %v1783 = vld [vmem:[%s1782] sm:$0xff]
        %v1784 = vld [vmem:[%s1782 + $0x8] sm:$0xff]
        %v1785 = vld [vmem:[%s1782 + $0x10] sm:$0xff]
        %s1786 = scalar_lea.vmem %s6, 4
        %v1787 = vld [vmem:[%s1786] sm:$0x1]
        %v1789 = vlaneseq
        %v1790 = vshrl.u32 %v1789, 7
        %v1791 = vsub.s32 0, %v1790
        %v1792 = vrot.slane %v1787, %v1791
        %v1795 = vsel %vm719, %v1780, 0
        %v1798 = vsel %vm719, %v1781, 0
        %1800 = vmatprep.subr.mxu0 0.0
        %1801 = vmatpush1.msra.mxu0 %v1783
        %1802 = vmatprep.subr.mxu0 0.0
        %1803 = vmatpush1.msra.mxu0 %v1784
        %1804 = vmatprep.subr.mxu0 0.0
        %1805 = vmatpush1.msra.mxu0 %v1785
        %1806 = vmatprep.subr.mxu0 0.0
        %1807 = vmatpush1.msra.mxu0 0.0
        %1808 = vmatprep.subr.mxu0 0.0
        %1809 = vmatpush1.msra.mxu0 0.0
        %1810 = vmatprep.subr.mxu0 0.0
        %1811 = vmatpush1.msra.mxu0 0.0
        %1812 = vmatprep.subr.mxu0 0.0
        %1813 = vmatpush1.msra.mxu0 0.0
        %1814 = vmatprep.subr.mxu0 0.0
        %1815 = vmatpush1.msra.mxu0 0.0
        %1816 = vmatprep.subr.mxu0 0.0
        %1817 = vmatpush1.msra.mxu0 0.0
        %1818 = vmatprep.subr.mxu0 0.0
        %1819 = vmatpush1.msra.mxu0 0.0
        %1820 = vmatprep.subr.mxu0 0.0
        %1821 = vmatpush1.msra.mxu0 0.0
        %1822 = vmatprep.subr.mxu0 0.0
        %1823 = vmatpush1.msra.mxu0 0.0
        %1824 = vmatprep.subr.mxu0 0.0
        %1825 = vmatpush1.msra.mxu0 0.0
        %1826 = vmatprep.subr.mxu0 0.0
        %1827 = vmatpush1.msra.mxu0 0.0
        %1828 = vmatprep.subr.mxu0 0.0
        %1829 = vmatpush1.msra.mxu0 0.0
        %1830 = vmatprep.subr.mxu0 0.0
        %1831 = vmatpush1.msra.mxu0 0.0
        %1832 = vmatprep.subr.mxu0 0.0
        %1833 = vmatpush1.msra.mxu0 0.0
        %1834 = vmatprep.subr.mxu0 0.0
        %1835 = vmatpush1.msra.mxu0 0.0
        %1836 = vmatprep.subr.mxu0 0.0
        %1837 = vmatpush1.msra.mxu0 0.0
        %1838 = vmatprep.subr.mxu0 0.0
        %1839 = vmatpush1.msra.mxu0 0.0
        %1840 = vmatprep.subr.mxu0 0.0
        %1841 = vmatpush1.msra.mxu0 0.0
        %1842 = vmatprep.subr.mxu0 0.0
        %1843 = vmatpush1.msra.mxu0 0.0
        %1844 = vmatprep.subr.mxu0 0.0
        %1845 = vmatpush1.msra.mxu0 0.0
        %1846 = vmatprep.subr.mxu0 0.0
        %1847 = vmatpush1.msra.mxu0 0.0
        %1848 = vmatprep.subr.mxu0 0.0
        %1849 = vmatpush1.msra.mxu0 0.0
        %1850 = vmatprep.subr.mxu0 0.0
        %1851 = vmatpush1.msra.mxu0 0.0
        %1852 = vmatprep.subr.mxu0 0.0
        %1853 = vmatpush1.msra.mxu0 0.0
        %1854 = vmatprep.subr.mxu0 0.0
        %1855 = vmatpush1.msra.mxu0 0.0
        %1856 = vmatprep.subr.mxu0 0.0
        %1857 = vmatpush1.msra.mxu0 0.0
        %1858 = vmatprep.subr.mxu0 0.0
        %1859 = vmatpush1.msra.mxu0 0.0
        %1860 = vmatprep.subr.mxu0 0.0
        %1861 = vmatpush1.msra.mxu0 0.0
        %1862 = vmatprep.subr.mxu0 0.0
        %1863 = vmatpush1.msra.mxu0 0.0
        %1864 = vmatprep.mubr.f32.mxu0 0.0
        %1865 = vmatmul.mubr.f32.gmra.mrb[0].mxu0 %v1795
        %v1866 = vpop.f32.mrb[0].mxu0
        %v1867 = vadd.f32 %v1792, %v1866
        %v1868 = vpop.f32.mrb[0].mxu0
        %1869 = vmatprep.mubr.f32.mxu0 0.0
        %1870 = vmatmul.mubr.f32.gmra.mrb[0].mxu0 %v1798
        %v1871 = vpop.f32.mrb[0].mxu0
        %v1872 = vadd.f32 %v1792, %v1871
        %v1873 = vpop.f32.mrb[0].mxu0
        %1874 = vdwg.mxu0
        %v1875 = vmax.f32 %v1867, 0.0
        %v1876 = vmax.f32 %v1872, 0.0
        %s1877 = scalar_lea.vmem %s7, 4
        %v1878 = vld [vmem:[%s1877] sm:$0x1]
        %v1880 = vlaneseq
        %v1881 = vshrl.u32 %v1880, 7
        %v1882 = vsub.s32 0, %v1881
        %v1883 = vrot.slane %v1878, %v1882
        %v1885 = vmul.f32 %v1875, %v1883
        %v1886 = vmul.f32 %v1876, %v1883
        %s1887 = scalar_lea.vmem %s8, 4
        %v1888 = vld [vmem:[%s1887] sm:$0x1]
        %v1890 = vlaneseq
        %v1891 = vshrl.u32 %v1890, 7
        %v1892 = vsub.s32 0, %v1891
        %v1893 = vrot.slane %v1888, %v1892
        %v1895 = vadd.f32 %v1885, %v1893
        %v1896 = vadd.f32 %v1886, %v1893
        %s1897 = scalar_lea.vmem %s1, 320
        %v1898 = vld [vmem:[%s1897] sm:$0xff]
        %v1899 = vld [vmem:[%s1897 + $0x8] sm:$0xff]
        %v1900 = vld [vmem:[%s1897 + $0x10] sm:$0xff]
        %v1901 = vld [vmem:[%s1897 + $0x18] sm:$0xff]
        %v1902 = vld [vmem:[%s1897 + $0x20] sm:$0xff]
        %v1903 = vld [vmem:[%s1897 + $0x28] sm:$0xff]
        %v1904 = vld [vmem:[%s1897 + $0x30] sm:$0xff]
        %v1905 = vld [vmem:[%s1897 + $0x38] sm:$0xff]
        %s1906 = scalar_lea.vmem %s2, 5
        %v1907 = vld [vmem:[%s1906] sm:$0x1]
        %v1909 = vlaneseq
        %v1910 = vshrl.u32 %v1909, 7
        %v1911 = vsub.s32 0, %v1910
        %v1912 = vrot.slane %v1907, %v1911
        %1914 = vmatprep.subr.mxu0 0.0
        %1915 = vmatpush1.msra.mxu0 %v1898
        %1916 = vmatprep.subr.mxu0 0.0
        %1917 = vmatpush1.msra.mxu0 %v1899
        %1918 = vmatprep.subr.mxu0 0.0
        %1919 = vmatpush1.msra.mxu0 %v1900
        %1920 = vmatprep.subr.mxu0 0.0
        %1921 = vmatpush1.msra.mxu0 %v1901
        %1922 = vmatprep.subr.mxu0 0.0
        %1923 = vmatpush1.msra.mxu0 %v1902
        %1924 = vmatprep.subr.mxu0 0.0
        %1925 = vmatpush1.msra.mxu0 %v1903
        %1926 = vmatprep.subr.mxu0 0.0
        %1927 = vmatpush1.msra.mxu0 %v1904
        %1928 = vmatprep.subr.mxu0 0.0
        %1929 = vmatpush1.msra.mxu0 %v1905
        %1930 = vmatprep.subr.mxu0 0.0
        %1931 = vmatpush1.msra.mxu0 0.0
        %1932 = vmatprep.subr.mxu0 0.0
        %1933 = vmatpush1.msra.mxu0 0.0
        %1934 = vmatprep.subr.mxu0 0.0
        %1935 = vmatpush1.msra.mxu0 0.0
        %1936 = vmatprep.subr.mxu0 0.0
        %1937 = vmatpush1.msra.mxu0 0.0
        %1938 = vmatprep.subr.mxu0 0.0
        %1939 = vmatpush1.msra.mxu0 0.0
        %1940 = vmatprep.subr.mxu0 0.0
        %1941 = vmatpush1.msra.mxu0 0.0
        %1942 = vmatprep.subr.mxu0 0.0
        %1943 = vmatpush1.msra.mxu0 0.0
        %1944 = vmatprep.subr.mxu0 0.0
        %1945 = vmatpush1.msra.mxu0 0.0
        %1946 = vmatprep.subr.mxu0 0.0
        %1947 = vmatpush1.msra.mxu0 0.0
        %1948 = vmatprep.subr.mxu0 0.0
        %1949 = vmatpush1.msra.mxu0 0.0
        %1950 = vmatprep.subr.mxu0 0.0
        %1951 = vmatpush1.msra.mxu0 0.0
        %1952 = vmatprep.subr.mxu0 0.0
        %1953 = vmatpush1.msra.mxu0 0.0
        %1954 = vmatprep.subr.mxu0 0.0
        %1955 = vmatpush1.msra.mxu0 0.0
        %1956 = vmatprep.subr.mxu0 0.0
        %1957 = vmatpush1.msra.mxu0 0.0
        %1958 = vmatprep.subr.mxu0 0.0
        %1959 = vmatpush1.msra.mxu0 0.0
        %1960 = vmatprep.subr.mxu0 0.0
        %1961 = vmatpush1.msra.mxu0 0.0
        %1962 = vmatprep.subr.mxu0 0.0
        %1963 = vmatpush1.msra.mxu0 0.0
        %1964 = vmatprep.subr.mxu0 0.0
        %1965 = vmatpush1.msra.mxu0 0.0
        %1966 = vmatprep.subr.mxu0 0.0
        %1967 = vmatpush1.msra.mxu0 0.0
        %1968 = vmatprep.subr.mxu0 0.0
        %1969 = vmatpush1.msra.mxu0 0.0
        %1970 = vmatprep.subr.mxu0 0.0
        %1971 = vmatpush1.msra.mxu0 0.0
        %1972 = vmatprep.subr.mxu0 0.0
        %1973 = vmatpush1.msra.mxu0 0.0
        %1974 = vmatprep.subr.mxu0 0.0
        %1975 = vmatpush1.msra.mxu0 0.0
        %1976 = vmatprep.subr.mxu0 0.0
        %1977 = vmatpush1.msra.mxu0 0.0
        %1978 = vmatprep.mubr.f32.mxu0 0.0
        %1979 = vmatmul.mubr.f32.gmra.mrb[0].mxu0 %v566
        %v1980 = vpop.f32.mrb[0].mxu0
        %v1981 = vadd.f32 %v1912, %v1980
        %v1982 = vpop.f32.mrb[0].mxu0
        %1983 = vmatprep.mubr.f32.mxu0 0.0
        %1984 = vmatmul.mubr.f32.gmra.mrb[0].mxu0 %v569
        %v1985 = vpop.f32.mrb[0].mxu0
        %v1986 = vadd.f32 %v1912, %v1985
        %v1987 = vpop.f32.mrb[0].mxu0
        %1988 = vdwg.mxu0
        %v1989 = vmax.f32 %v1981, 0.0
        %v1990 = vmax.f32 %v1986, 0.0
        %s1991 = scalar_lea.vmem %s3, 5
        %v1992 = vld [vmem:[%s1991] sm:$0x1]
        %v1994 = vlaneseq
        %v1995 = vshrl.u32 %v1994, 7
        %v1996 = vsub.s32 0, %v1995
        %v1997 = vrot.slane %v1992, %v1996
        %v1999 = vmul.f32 %v1989, %v1997
        %v2000 = vmul.f32 %v1990, %v1997
        %s2001 = scalar_lea.vmem %s4, 5
        %v2002 = vld [vmem:[%s2001] sm:$0x1]
        %v2004 = vlaneseq
        %v2005 = vshrl.u32 %v2004, 7
        %v2006 = vsub.s32 0, %v2005
        %v2007 = vrot.slane %v2002, %v2006
        %v2009 = vadd.f32 %v1999, %v2007
        %v2010 = vadd.f32 %v2000, %v2007
        %v2011 = vadd.f32 %v1895, %v2009
        %v2012 = vadd.f32 %v1896, %v2010
        %v2015 = vrot.slane %v2011, 6
        %v2016 = vrot.slane %v2012, 6
        %v2017 = vsel %vm668, %v2015, %v2016
        %v2021 = vsel %vm668, 0.0, %v2015
        %v2022 = vsel %vm668, %v2016, 0.0
        %v2025 = vrot.slane %v2021, 2
        %v2026 = vrot.slane %v2017, 2
        %v2027 = vsel %vm679, %v2025, %v2026
        %v2028 = vrot.slane %v2022, 2
        %v2029 = vsel %vm679, %v2026, %v2028
        %2030 = vrot.lane.b32.xlu0 %v2027, 8
        %v2031 = vpop.permute.xlu0 %2030
        %2032 = vrot.lane.b32.xlu0 %v2029, 8
        %v2033 = vpop.permute.xlu0 %2032
        %v2036 = vrot.slane %v2021, 4
        %v2037 = vrot.slane %v2017, 4
        %v2038 = vsel %vm691, %v2036, %v2037
        %v2039 = vrot.slane %v2022, 4
        %v2040 = vsel %vm691, %v2037, %v2039
        %2041 = vrot.lane.b32.xlu0 %v2038, 16
        %v2042 = vpop.permute.xlu0 %2041
        %2043 = vrot.lane.b32.xlu0 %v2040, 16
        %v2044 = vpop.permute.xlu0 %2043
        %v2047 = vsel %vm703, %v2021, %v2031
        %v2048 = vsel %vm703, %v2017, %v2033
        %v2049 = vsel %vm706, %v2047, %v2042
        %v2050 = vsel %vm706, %v2048, %v2044
        %s2051 = scalar_lea.vmem %s5, 120
        %v2052 = vld [vmem:[%s2051] sm:$0xff]
        %v2053 = vld [vmem:[%s2051 + $0x8] sm:$0xff]
        %v2054 = vld [vmem:[%s2051 + $0x10] sm:$0xff]
        %s2055 = scalar_lea.vmem %s6, 5
        %v2056 = vld [vmem:[%s2055] sm:$0x1]
        %v2058 = vlaneseq
        %v2059 = vshrl.u32 %v2058, 7
        %v2060 = vsub.s32 0, %v2059
        %v2061 = vrot.slane %v2056, %v2060
        %v2064 = vsel %vm719, %v2049, 0
        %v2067 = vsel %vm719, %v2050, 0
        %2069 = vmatprep.subr.mxu0 0.0
        %2070 = vmatpush1.msra.mxu0 %v2052
        %2071 = vmatprep.subr.mxu0 0.0
        %2072 = vmatpush1.msra.mxu0 %v2053
        %2073 = vmatprep.subr.mxu0 0.0
        %2074 = vmatpush1.msra.mxu0 %v2054
        %2075 = vmatprep.subr.mxu0 0.0
        %2076 = vmatpush1.msra.mxu0 0.0
        %2077 = vmatprep.subr.mxu0 0.0
        %2078 = vmatpush1.msra.mxu0 0.0
        %2079 = vmatprep.subr.mxu0 0.0
        %2080 = vmatpush1.msra.mxu0 0.0
        %2081 = vmatprep.subr.mxu0 0.0
        %2082 = vmatpush1.msra.mxu0 0.0
        %2083 = vmatprep.subr.mxu0 0.0
        %2084 = vmatpush1.msra.mxu0 0.0
        %2085 = vmatprep.subr.mxu0 0.0
        %2086 = vmatpush1.msra.mxu0 0.0
        %2087 = vmatprep.subr.mxu0 0.0
        %2088 = vmatpush1.msra.mxu0 0.0
        %2089 = vmatprep.subr.mxu0 0.0
        %2090 = vmatpush1.msra.mxu0 0.0
        %2091 = vmatprep.subr.mxu0 0.0
        %2092 = vmatpush1.msra.mxu0 0.0
        %2093 = vmatprep.subr.mxu0 0.0
        %2094 = vmatpush1.msra.mxu0 0.0
        %2095 = vmatprep.subr.mxu0 0.0
        %2096 = vmatpush1.msra.mxu0 0.0
        %2097 = vmatprep.subr.mxu0 0.0
        %2098 = vmatpush1.msra.mxu0 0.0
        %2099 = vmatprep.subr.mxu0 0.0
        %2100 = vmatpush1.msra.mxu0 0.0
        %2101 = vmatprep.subr.mxu0 0.0
        %2102 = vmatpush1.msra.mxu0 0.0
        %2103 = vmatprep.subr.mxu0 0.0
        %2104 = vmatpush1.msra.mxu0 0.0
        %2105 = vmatprep.subr.mxu0 0.0
        %2106 = vmatpush1.msra.mxu0 0.0
        %2107 = vmatprep.subr.mxu0 0.0
        %2108 = vmatpush1.msra.mxu0 0.0
        %2109 = vmatprep.subr.mxu0 0.0
        %2110 = vmatpush1.msra.mxu0 0.0
        %2111 = vmatprep.subr.mxu0 0.0
        %2112 = vmatpush1.msra.mxu0 0.0
        %2113 = vmatprep.subr.mxu0 0.0
        %2114 = vmatpush1.msra.mxu0 0.0
        %2115 = vmatprep.subr.mxu0 0.0
        %2116 = vmatpush1.msra.mxu0 0.0
        %2117 = vmatprep.subr.mxu0 0.0
        %2118 = vmatpush1.msra.mxu0 0.0
        %2119 = vmatprep.subr.mxu0 0.0
        %2120 = vmatpush1.msra.mxu0 0.0
        %2121 = vmatprep.subr.mxu0 0.0
        %2122 = vmatpush1.msra.mxu0 0.0
        %2123 = vmatprep.subr.mxu0 0.0
        %2124 = vmatpush1.msra.mxu0 0.0
        %2125 = vmatprep.subr.mxu0 0.0
        %2126 = vmatpush1.msra.mxu0 0.0
        %2127 = vmatprep.subr.mxu0 0.0
        %2128 = vmatpush1.msra.mxu0 0.0
        %2129 = vmatprep.subr.mxu0 0.0
        %2130 = vmatpush1.msra.mxu0 0.0
        %2131 = vmatprep.subr.mxu0 0.0
        %2132 = vmatpush1.msra.mxu0 0.0
        %2133 = vmatprep.mubr.f32.mxu0 0.0
        %2134 = vmatmul.mubr.f32.gmra.mrb[0].mxu0 %v2064
        %v2135 = vpop.f32.mrb[0].mxu0
        %v2136 = vadd.f32 %v2061, %v2135
        %v2137 = vpop.f32.mrb[0].mxu0
        %2138 = vmatprep.mubr.f32.mxu0 0.0
        %2139 = vmatmul.mubr.f32.gmra.mrb[0].mxu0 %v2067
        %v2140 = vpop.f32.mrb[0].mxu0
        %v2141 = vadd.f32 %v2061, %v2140
        %v2142 = vpop.f32.mrb[0].mxu0
        %2143 = vdwg.mxu0
        %v2144 = vmax.f32 %v2136, 0.0
        %v2145 = vmax.f32 %v2141, 0.0
        %s2146 = scalar_lea.vmem %s7, 5
        %v2147 = vld [vmem:[%s2146] sm:$0x1]
        %v2149 = vlaneseq
        %v2150 = vshrl.u32 %v2149, 7
        %v2151 = vsub.s32 0, %v2150
        %v2152 = vrot.slane %v2147, %v2151
        %v2154 = vmul.f32 %v2144, %v2152
        %v2155 = vmul.f32 %v2145, %v2152
        %s2156 = scalar_lea.vmem %s8, 5
        %v2157 = vld [vmem:[%s2156] sm:$0x1]
        %v2159 = vlaneseq
        %v2160 = vshrl.u32 %v2159, 7
        %v2161 = vsub.s32 0, %v2160
        %v2162 = vrot.slane %v2157, %v2161
        %v2164 = vadd.f32 %v2154, %v2162
        %v2165 = vadd.f32 %v2155, %v2162
        %s2166 = scalar_lea.vmem %s1, 384
        %v2167 = vld [vmem:[%s2166] sm:$0xff]
        %v2168 = vld [vmem:[%s2166 + $0x8] sm:$0xff]
        %v2169 = vld [vmem:[%s2166 + $0x10] sm:$0xff]
        %v2170 = vld [vmem:[%s2166 + $0x18] sm:$0xff]
        %v2171 = vld [vmem:[%s2166 + $0x20] sm:$0xff]
        %v2172 = vld [vmem:[%s2166 + $0x28] sm:$0xff]
        %v2173 = vld [vmem:[%s2166 + $0x30] sm:$0xff]
        %v2174 = vld [vmem:[%s2166 + $0x38] sm:$0xff]
        %s2175 = scalar_lea.vmem %s2, 6
        %v2176 = vld [vmem:[%s2175] sm:$0x1]
        %v2178 = vlaneseq
        %v2179 = vshrl.u32 %v2178, 7
        %v2180 = vsub.s32 0, %v2179
        %v2181 = vrot.slane %v2176, %v2180
        %2183 = vmatprep.subr.mxu0 0.0
        %2184 = vmatpush1.msra.mxu0 %v2167
        %2185 = vmatprep.subr.mxu0 0.0
        %2186 = vmatpush1.msra.mxu0 %v2168
        %2187 = vmatprep.subr.mxu0 0.0
        %2188 = vmatpush1.msra.mxu0 %v2169
        %2189 = vmatprep.subr.mxu0 0.0
        %2190 = vmatpush1.msra.mxu0 %v2170
        %2191 = vmatprep.subr.mxu0 0.0
        %2192 = vmatpush1.msra.mxu0 %v2171
        %2193 = vmatprep.subr.mxu0 0.0
        %2194 = vmatpush1.msra.mxu0 %v2172
        %2195 = vmatprep.subr.mxu0 0.0
        %2196 = vmatpush1.msra.mxu0 %v2173
        %2197 = vmatprep.subr.mxu0 0.0
        %2198 = vmatpush1.msra.mxu0 %v2174
        %2199 = vmatprep.subr.mxu0 0.0
        %2200 = vmatpush1.msra.mxu0 0.0
        %2201 = vmatprep.subr.mxu0 0.0
        %2202 = vmatpush1.msra.mxu0 0.0
        %2203 = vmatprep.subr.mxu0 0.0
        %2204 = vmatpush1.msra.mxu0 0.0
        %2205 = vmatprep.subr.mxu0 0.0
        %2206 = vmatpush1.msra.mxu0 0.0
        %2207 = vmatprep.subr.mxu0 0.0
        %2208 = vmatpush1.msra.mxu0 0.0
        %2209 = vmatprep.subr.mxu0 0.0
        %2210 = vmatpush1.msra.mxu0 0.0
        %2211 = vmatprep.subr.mxu0 0.0
        %2212 = vmatpush1.msra.mxu0 0.0
        %2213 = vmatprep.subr.mxu0 0.0
        %2214 = vmatpush1.msra.mxu0 0.0
        %2215 = vmatprep.subr.mxu0 0.0
        %2216 = vmatpush1.msra.mxu0 0.0
        %2217 = vmatprep.subr.mxu0 0.0
        %2218 = vmatpush1.msra.mxu0 0.0
        %2219 = vmatprep.subr.mxu0 0.0
        %2220 = vmatpush1.msra.mxu0 0.0
        %2221 = vmatprep.subr.mxu0 0.0
        %2222 = vmatpush1.msra.mxu0 0.0
        %2223 = vmatprep.subr.mxu0 0.0
        %2224 = vmatpush1.msra.mxu0 0.0
        %2225 = vmatprep.subr.mxu0 0.0
        %2226 = vmatpush1.msra.mxu0 0.0
        %2227 = vmatprep.subr.mxu0 0.0
        %2228 = vmatpush1.msra.mxu0 0.0
        %2229 = vmatprep.subr.mxu0 0.0
        %2230 = vmatpush1.msra.mxu0 0.0
        %2231 = vmatprep.subr.mxu0 0.0
        %2232 = vmatpush1.msra.mxu0 0.0
        %2233 = vmatprep.subr.mxu0 0.0
        %2234 = vmatpush1.msra.mxu0 0.0
        %2235 = vmatprep.subr.mxu0 0.0
        %2236 = vmatpush1.msra.mxu0 0.0
        %2237 = vmatprep.subr.mxu0 0.0
        %2238 = vmatpush1.msra.mxu0 0.0
        %2239 = vmatprep.subr.mxu0 0.0
        %2240 = vmatpush1.msra.mxu0 0.0
        %2241 = vmatprep.subr.mxu0 0.0
        %2242 = vmatpush1.msra.mxu0 0.0
        %2243 = vmatprep.subr.mxu0 0.0
        %2244 = vmatpush1.msra.mxu0 0.0
        %2245 = vmatprep.subr.mxu0 0.0
        %2246 = vmatpush1.msra.mxu0 0.0
        %2247 = vmatprep.mubr.f32.mxu0 0.0
        %2248 = vmatmul.mubr.f32.gmra.mrb[0].mxu0 %v566
        %v2249 = vpop.f32.mrb[0].mxu0
        %v2250 = vadd.f32 %v2181, %v2249
        %v2251 = vpop.f32.mrb[0].mxu0
        %2252 = vmatprep.mubr.f32.mxu0 0.0
        %2253 = vmatmul.mubr.f32.gmra.mrb[0].mxu0 %v569
        %v2254 = vpop.f32.mrb[0].mxu0
        %v2255 = vadd.f32 %v2181, %v2254
        %v2256 = vpop.f32.mrb[0].mxu0
        %2257 = vdwg.mxu0
        %v2258 = vmax.f32 %v2250, 0.0
        %v2259 = vmax.f32 %v2255, 0.0
        %s2260 = scalar_lea.vmem %s3, 6
        %v2261 = vld [vmem:[%s2260] sm:$0x1]
        %v2263 = vlaneseq
        %v2264 = vshrl.u32 %v2263, 7
        %v2265 = vsub.s32 0, %v2264
        %v2266 = vrot.slane %v2261, %v2265
        %v2268 = vmul.f32 %v2258, %v2266
        %v2269 = vmul.f32 %v2259, %v2266
        %s2270 = scalar_lea.vmem %s4, 6
        %v2271 = vld [vmem:[%s2270] sm:$0x1]
        %v2273 = vlaneseq
        %v2274 = vshrl.u32 %v2273, 7
        %v2275 = vsub.s32 0, %v2274
        %v2276 = vrot.slane %v2271, %v2275
        %v2278 = vadd.f32 %v2268, %v2276
        %v2279 = vadd.f32 %v2269, %v2276
        %v2280 = vadd.f32 %v2164, %v2278
        %v2281 = vadd.f32 %v2165, %v2279
        %v2284 = vrot.slane %v2280, 6
        %v2285 = vrot.slane %v2281, 6
        %v2286 = vsel %vm668, %v2284, %v2285
        %v2290 = vsel %vm668, 0.0, %v2284
        %v2291 = vsel %vm668, %v2285, 0.0
        %v2294 = vrot.slane %v2290, 2
        %v2295 = vrot.slane %v2286, 2
        %v2296 = vsel %vm679, %v2294, %v2295
        %v2297 = vrot.slane %v2291, 2
        %v2298 = vsel %vm679, %v2295, %v2297
        %2299 = vrot.lane.b32.xlu0 %v2296, 8
        %v2300 = vpop.permute.xlu0 %2299
        %2301 = vrot.lane.b32.xlu0 %v2298, 8
        %v2302 = vpop.permute.xlu0 %2301
        %v2305 = vrot.slane %v2290, 4
        %v2306 = vrot.slane %v2286, 4
        %v2307 = vsel %vm691, %v2305, %v2306
        %v2308 = vrot.slane %v2291, 4
        %v2309 = vsel %vm691, %v2306, %v2308
        %2310 = vrot.lane.b32.xlu0 %v2307, 16
        %v2311 = vpop.permute.xlu0 %2310
        %2312 = vrot.lane.b32.xlu0 %v2309, 16
        %v2313 = vpop.permute.xlu0 %2312
        %v2316 = vsel %vm703, %v2290, %v2300
        %v2317 = vsel %vm703, %v2286, %v2302
        %v2318 = vsel %vm706, %v2316, %v2311
        %v2319 = vsel %vm706, %v2317, %v2313
        %s2320 = scalar_lea.vmem %s5, 144
        %v2321 = vld [vmem:[%s2320] sm:$0xff]
        %v2322 = vld [vmem:[%s2320 + $0x8] sm:$0xff]
        %v2323 = vld [vmem:[%s2320 + $0x10] sm:$0xff]
        %s2324 = scalar_lea.vmem %s6, 6
        %v2325 = vld [vmem:[%s2324] sm:$0x1]
        %v2327 = vlaneseq
        %v2328 = vshrl.u32 %v2327, 7
        %v2329 = vsub.s32 0, %v2328
        %v2330 = vrot.slane %v2325, %v2329
        %v2333 = vsel %vm719, %v2318, 0
        %v2336 = vsel %vm719, %v2319, 0
        %2338 = vmatprep.subr.mxu0 0.0
        %2339 = vmatpush1.msra.mxu0 %v2321
        %2340 = vmatprep.subr.mxu0 0.0
        %2341 = vmatpush1.msra.mxu0 %v2322
        %2342 = vmatprep.subr.mxu0 0.0
        %2343 = vmatpush1.msra.mxu0 %v2323
        %2344 = vmatprep.subr.mxu0 0.0
        %2345 = vmatpush1.msra.mxu0 0.0
        %2346 = vmatprep.subr.mxu0 0.0
        %2347 = vmatpush1.msra.mxu0 0.0
        %2348 = vmatprep.subr.mxu0 0.0
        %2349 = vmatpush1.msra.mxu0 0.0
        %2350 = vmatprep.subr.mxu0 0.0
        %2351 = vmatpush1.msra.mxu0 0.0
        %2352 = vmatprep.subr.mxu0 0.0
        %2353 = vmatpush1.msra.mxu0 0.0
        %2354 = vmatprep.subr.mxu0 0.0
        %2355 = vmatpush1.msra.mxu0 0.0
        %2356 = vmatprep.subr.mxu0 0.0
        %2357 = vmatpush1.msra.mxu0 0.0
        %2358 = vmatprep.subr.mxu0 0.0
        %2359 = vmatpush1.msra.mxu0 0.0
        %2360 = vmatprep.subr.mxu0 0.0
        %2361 = vmatpush1.msra.mxu0 0.0
        %2362 = vmatprep.subr.mxu0 0.0
        %2363 = vmatpush1.msra.mxu0 0.0
        %2364 = vmatprep.subr.mxu0 0.0
        %2365 = vmatpush1.msra.mxu0 0.0
        %2366 = vmatprep.subr.mxu0 0.0
        %2367 = vmatpush1.msra.mxu0 0.0
        %2368 = vmatprep.subr.mxu0 0.0
        %2369 = vmatpush1.msra.mxu0 0.0
        %2370 = vmatprep.subr.mxu0 0.0
        %2371 = vmatpush1.msra.mxu0 0.0
        %2372 = vmatprep.subr.mxu0 0.0
        %2373 = vmatpush1.msra.mxu0 0.0
        %2374 = vmatprep.subr.mxu0 0.0
        %2375 = vmatpush1.msra.mxu0 0.0
        %2376 = vmatprep.subr.mxu0 0.0
        %2377 = vmatpush1.msra.mxu0 0.0
        %2378 = vmatprep.subr.mxu0 0.0
        %2379 = vmatpush1.msra.mxu0 0.0
        %2380 = vmatprep.subr.mxu0 0.0
        %2381 = vmatpush1.msra.mxu0 0.0
        %2382 = vmatprep.subr.mxu0 0.0
        %2383 = vmatpush1.msra.mxu0 0.0
        %2384 = vmatprep.subr.mxu0 0.0
        %2385 = vmatpush1.msra.mxu0 0.0
        %2386 = vmatprep.subr.mxu0 0.0
        %2387 = vmatpush1.msra.mxu0 0.0
        %2388 = vmatprep.subr.mxu0 0.0
        %2389 = vmatpush1.msra.mxu0 0.0
        %2390 = vmatprep.subr.mxu0 0.0
        %2391 = vmatpush1.msra.mxu0 0.0
        %2392 = vmatprep.subr.mxu0 0.0
        %2393 = vmatpush1.msra.mxu0 0.0
        %2394 = vmatprep.subr.mxu0 0.0
        %2395 = vmatpush1.msra.mxu0 0.0
        %2396 = vmatprep.subr.mxu0 0.0
        %2397 = vmatpush1.msra.mxu0 0.0
        %2398 = vmatprep.subr.mxu0 0.0
        %2399 = vmatpush1.msra.mxu0 0.0
        %2400 = vmatprep.subr.mxu0 0.0
        %2401 = vmatpush1.msra.mxu0 0.0
        %2402 = vmatprep.mubr.f32.mxu0 0.0
        %2403 = vmatmul.mubr.f32.gmra.mrb[0].mxu0 %v2333
        %v2404 = vpop.f32.mrb[0].mxu0
        %v2405 = vadd.f32 %v2330, %v2404
        %v2406 = vpop.f32.mrb[0].mxu0
        %2407 = vmatprep.mubr.f32.mxu0 0.0
        %2408 = vmatmul.mubr.f32.gmra.mrb[0].mxu0 %v2336
        %v2409 = vpop.f32.mrb[0].mxu0
        %v2410 = vadd.f32 %v2330, %v2409
        %v2411 = vpop.f32.mrb[0].mxu0
        %2412 = vdwg.mxu0
        %v2413 = vmax.f32 %v2405, 0.0
        %v2414 = vmax.f32 %v2410, 0.0
        %s2415 = scalar_lea.vmem %s7, 6
        %v2416 = vld [vmem:[%s2415] sm:$0x1]
        %v2418 = vlaneseq
        %v2419 = vshrl.u32 %v2418, 7
        %v2420 = vsub.s32 0, %v2419
        %v2421 = vrot.slane %v2416, %v2420
        %v2423 = vmul.f32 %v2413, %v2421
        %v2424 = vmul.f32 %v2414, %v2421
        %s2425 = scalar_lea.vmem %s8, 6
        %v2426 = vld [vmem:[%s2425] sm:$0x1]
        %v2428 = vlaneseq
        %v2429 = vshrl.u32 %v2428, 7
        %v2430 = vsub.s32 0, %v2429
        %v2431 = vrot.slane %v2426, %v2430
        %v2433 = vadd.f32 %v2423, %v2431
        %v2434 = vadd.f32 %v2424, %v2431
        %s2435 = scalar_lea.vmem %s1, 448
        %v2436 = vld [vmem:[%s2435] sm:$0xff]
        %v2437 = vld [vmem:[%s2435 + $0x8] sm:$0xff]
        %v2438 = vld [vmem:[%s2435 + $0x10] sm:$0xff]
        %v2439 = vld [vmem:[%s2435 + $0x18] sm:$0xff]
        %v2440 = vld [vmem:[%s2435 + $0x20] sm:$0xff]
        %v2441 = vld [vmem:[%s2435 + $0x28] sm:$0xff]
        %v2442 = vld [vmem:[%s2435 + $0x30] sm:$0xff]
        %v2443 = vld [vmem:[%s2435 + $0x38] sm:$0xff]
        %s2444 = scalar_lea.vmem %s2, 7
        %v2445 = vld [vmem:[%s2444] sm:$0x1]
        %v2447 = vlaneseq
        %v2448 = vshrl.u32 %v2447, 7
        %v2449 = vsub.s32 0, %v2448
        %v2450 = vrot.slane %v2445, %v2449
        %2452 = vmatprep.subr.mxu0 0.0
        %2453 = vmatpush1.msra.mxu0 %v2436
        %2454 = vmatprep.subr.mxu0 0.0
        %2455 = vmatpush1.msra.mxu0 %v2437
        %2456 = vmatprep.subr.mxu0 0.0
        %2457 = vmatpush1.msra.mxu0 %v2438
        %2458 = vmatprep.subr.mxu0 0.0
        %2459 = vmatpush1.msra.mxu0 %v2439
        %2460 = vmatprep.subr.mxu0 0.0
        %2461 = vmatpush1.msra.mxu0 %v2440
        %2462 = vmatprep.subr.mxu0 0.0
        %2463 = vmatpush1.msra.mxu0 %v2441
        %2464 = vmatprep.subr.mxu0 0.0
        %2465 = vmatpush1.msra.mxu0 %v2442
        %2466 = vmatprep.subr.mxu0 0.0
        %2467 = vmatpush1.msra.mxu0 %v2443
        %2468 = vmatprep.subr.mxu0 0.0
        %2469 = vmatpush1.msra.mxu0 0.0
        %2470 = vmatprep.subr.mxu0 0.0
        %2471 = vmatpush1.msra.mxu0 0.0
        %2472 = vmatprep.subr.mxu0 0.0
        %2473 = vmatpush1.msra.mxu0 0.0
        %2474 = vmatprep.subr.mxu0 0.0
        %2475 = vmatpush1.msra.mxu0 0.0
        %2476 = vmatprep.subr.mxu0 0.0
        %2477 = vmatpush1.msra.mxu0 0.0
        %2478 = vmatprep.subr.mxu0 0.0
        %2479 = vmatpush1.msra.mxu0 0.0
        %2480 = vmatprep.subr.mxu0 0.0
        %2481 = vmatpush1.msra.mxu0 0.0
        %2482 = vmatprep.subr.mxu0 0.0
        %2483 = vmatpush1.msra.mxu0 0.0
        %2484 = vmatprep.subr.mxu0 0.0
        %2485 = vmatpush1.msra.mxu0 0.0
        %2486 = vmatprep.subr.mxu0 0.0
        %2487 = vmatpush1.msra.mxu0 0.0
        %2488 = vmatprep.subr.mxu0 0.0
        %2489 = vmatpush1.msra.mxu0 0.0
        %2490 = vmatprep.subr.mxu0 0.0
        %2491 = vmatpush1.msra.mxu0 0.0
        %2492 = vmatprep.subr.mxu0 0.0
        %2493 = vmatpush1.msra.mxu0 0.0
        %2494 = vmatprep.subr.mxu0 0.0
        %2495 = vmatpush1.msra.mxu0 0.0
        %2496 = vmatprep.subr.mxu0 0.0
        %2497 = vmatpush1.msra.mxu0 0.0
        %2498 = vmatprep.subr.mxu0 0.0
        %2499 = vmatpush1.msra.mxu0 0.0
        %2500 = vmatprep.subr.mxu0 0.0
        %2501 = vmatpush1.msra.mxu0 0.0
        %2502 = vmatprep.subr.mxu0 0.0
        %2503 = vmatpush1.msra.mxu0 0.0
        %2504 = vmatprep.subr.mxu0 0.0
        %2505 = vmatpush1.msra.mxu0 0.0
        %2506 = vmatprep.subr.mxu0 0.0
        %2507 = vmatpush1.msra.mxu0 0.0
        %2508 = vmatprep.subr.mxu0 0.0
        %2509 = vmatpush1.msra.mxu0 0.0
        %2510 = vmatprep.subr.mxu0 0.0
        %2511 = vmatpush1.msra.mxu0 0.0
        %2512 = vmatprep.subr.mxu0 0.0
        %2513 = vmatpush1.msra.mxu0 0.0
        %2514 = vmatprep.subr.mxu0 0.0
        %2515 = vmatpush1.msra.mxu0 0.0
        %2516 = vmatprep.mubr.f32.mxu0 0.0
        %2517 = vmatmul.mubr.f32.gmra.mrb[0].mxu0 %v566
        %v2518 = vpop.f32.mrb[0].mxu0
        %v2519 = vadd.f32 %v2450, %v2518
        %v2520 = vpop.f32.mrb[0].mxu0
        %2521 = vmatprep.mubr.f32.mxu0 0.0
        %2522 = vmatmul.mubr.f32.gmra.mrb[0].mxu0 %v569
        %v2523 = vpop.f32.mrb[0].mxu0
        %v2524 = vadd.f32 %v2450, %v2523
        %v2525 = vpop.f32.mrb[0].mxu0
        %2526 = vdwg.mxu0
        %v2527 = vmax.f32 %v2519, 0.0
        %v2528 = vmax.f32 %v2524, 0.0
        %s2529 = scalar_lea.vmem %s3, 7
        %v2530 = vld [vmem:[%s2529] sm:$0x1]
        %v2532 = vlaneseq
        %v2533 = vshrl.u32 %v2532, 7
        %v2534 = vsub.s32 0, %v2533
        %v2535 = vrot.slane %v2530, %v2534
        %v2537 = vmul.f32 %v2527, %v2535
        %v2538 = vmul.f32 %v2528, %v2535
        %s2539 = scalar_lea.vmem %s4, 7
        %v2540 = vld [vmem:[%s2539] sm:$0x1]
        %v2542 = vlaneseq
        %v2543 = vshrl.u32 %v2542, 7
        %v2544 = vsub.s32 0, %v2543
        %v2545 = vrot.slane %v2540, %v2544
        %v2547 = vadd.f32 %v2537, %v2545
        %v2548 = vadd.f32 %v2538, %v2545
        %2551 = vrot.lane.b32.xlu0 %v1088, 8
        %v2552 = vpop.permute.xlu0 %2551
        %2553 = vrot.lane.b32.xlu0 %v1089, 8
        %v2554 = vpop.permute.xlu0 %2553
        %2559 = vrot.lane.b32.xlu0 %v1357, 16
        %v2560 = vpop.permute.xlu0 %2559
        %2561 = vrot.lane.b32.xlu0 %v1358, 16
        %v2562 = vpop.permute.xlu0 %2561
        %2567 = vrot.lane.b32.xlu0 %v1626, 24
        %v2568 = vpop.permute.xlu0 %2567
        %2569 = vrot.lane.b32.xlu0 %v1627, 24
        %v2570 = vpop.permute.xlu0 %2569
        %2575 = vrot.lane.b32.xlu0 %v1895, 32
        %v2576 = vpop.permute.xlu0 %2575
        %2577 = vrot.lane.b32.xlu0 %v1896, 32
        %v2578 = vpop.permute.xlu0 %2577
        %2583 = vrot.lane.b32.xlu0 %v2164, 40
        %v2584 = vpop.permute.xlu0 %2583
        %2585 = vrot.lane.b32.xlu0 %v2165, 40
        %v2586 = vpop.permute.xlu0 %2585
        %2591 = vrot.lane.b32.xlu0 %v2433, 48
        %v2592 = vpop.permute.xlu0 %2591
        %2593 = vrot.lane.b32.xlu0 %v2434, 48
        %v2594 = vpop.permute.xlu0 %2593
        %2599 = vrot.lane.b32.xlu0 %v2547, 56
        %v2600 = vpop.permute.xlu0 %2599
        %2601 = vrot.lane.b32.xlu0 %v2548, 56
        %v2602 = vpop.permute.xlu0 %2601
        %v2605 = vsel %vm703, %v819, %v2552
        %v2606 = vsel %vm703, %v820, %v2554
        %v2607 = vsel %vm706, %v2605, %v2560
        %v2608 = vsel %vm706, %v2606, %v2562
        %v2609 = vsel %vm719, %v2607, %v2568
        %v2610 = vsel %vm719, %v2608, %v2570
        %vm2611 = vcmask 261120
        %v2612 = vsel %vm2611, %v2609, %v2576
        %v2613 = vsel %vm2611, %v2610, %v2578
        %vm2614 = vcmask 326656
        %v2615 = vsel %vm2614, %v2612, %v2584
        %v2616 = vsel %vm2614, %v2613, %v2586
        %vm2617 = vcmask 392192
        %v2618 = vsel %vm2617, %v2615, %v2592
        %v2619 = vsel %vm2617, %v2616, %v2594
        %vm2620 = vcmask 457728
        %v2621 = vsel %vm2620, %v2618, %v2600
        %v2622 = vsel %vm2620, %v2619, %v2602
        %v2623 = vld [vmem:[%s9] sm:$0xff]
        %v2624 = vld [vmem:[%s9 + $0x8] sm:$0xff]
        %v2625 = vld [vmem:[%s9 + $0x10] sm:$0xff]
        %v2626 = vld [vmem:[%s9 + $0x18] sm:$0xff]
        %v2627 = vld [vmem:[%s9 + $0x20] sm:$0xff]
        %v2628 = vld [vmem:[%s9 + $0x28] sm:$0xff]
        %v2629 = vld [vmem:[%s9 + $0x30] sm:$0xff]
        %v2630 = vld [vmem:[%s9 + $0x38] sm:$0xff]
        %v2631 = vld [vmem:[%s10] sm:$0x1]
        %v2633 = vlaneseq
        %v2634 = vshrl.u32 %v2633, 7
        %v2635 = vsub.s32 0, %v2634
        %v2636 = vrot.slane %v2631, %v2635
        %v2639 = vsel %vm564, %v2621, 0
        %v2642 = vsel %vm564, %v2622, 0
        %2644 = vmatprep.subr.mxu0 0.0
        %2645 = vmatpush1.msra.mxu0 %v2623
        %2646 = vmatprep.subr.mxu0 0.0
        %2647 = vmatpush1.msra.mxu0 %v2624
        %2648 = vmatprep.subr.mxu0 0.0
        %2649 = vmatpush1.msra.mxu0 %v2625
        %2650 = vmatprep.subr.mxu0 0.0
        %2651 = vmatpush1.msra.mxu0 %v2626
        %2652 = vmatprep.subr.mxu0 0.0
        %2653 = vmatpush1.msra.mxu0 %v2627
        %2654 = vmatprep.subr.mxu0 0.0
        %2655 = vmatpush1.msra.mxu0 %v2628
        %2656 = vmatprep.subr.mxu0 0.0
        %2657 = vmatpush1.msra.mxu0 %v2629
        %2658 = vmatprep.subr.mxu0 0.0
        %2659 = vmatpush1.msra.mxu0 %v2630
        %2660 = vmatprep.subr.mxu0 0.0
        %2661 = vmatpush1.msra.mxu0 0.0
        %2662 = vmatprep.subr.mxu0 0.0
        %2663 = vmatpush1.msra.mxu0 0.0
        %2664 = vmatprep.subr.mxu0 0.0
        %2665 = vmatpush1.msra.mxu0 0.0
        %2666 = vmatprep.subr.mxu0 0.0
        %2667 = vmatpush1.msra.mxu0 0.0
        %2668 = vmatprep.subr.mxu0 0.0
        %2669 = vmatpush1.msra.mxu0 0.0
        %2670 = vmatprep.subr.mxu0 0.0
        %2671 = vmatpush1.msra.mxu0 0.0
        %2672 = vmatprep.subr.mxu0 0.0
        %2673 = vmatpush1.msra.mxu0 0.0
        %2674 = vmatprep.subr.mxu0 0.0
        %2675 = vmatpush1.msra.mxu0 0.0
        %2676 = vmatprep.subr.mxu0 0.0
        %2677 = vmatpush1.msra.mxu0 0.0
        %2678 = vmatprep.subr.mxu0 0.0
        %2679 = vmatpush1.msra.mxu0 0.0
        %2680 = vmatprep.subr.mxu0 0.0
        %2681 = vmatpush1.msra.mxu0 0.0
        %2682 = vmatprep.subr.mxu0 0.0
        %2683 = vmatpush1.msra.mxu0 0.0
        %2684 = vmatprep.subr.mxu0 0.0
        %2685 = vmatpush1.msra.mxu0 0.0
        %2686 = vmatprep.subr.mxu0 0.0
        %2687 = vmatpush1.msra.mxu0 0.0
        %2688 = vmatprep.subr.mxu0 0.0
        %2689 = vmatpush1.msra.mxu0 0.0
        %2690 = vmatprep.subr.mxu0 0.0
        %2691 = vmatpush1.msra.mxu0 0.0
        %2692 = vmatprep.subr.mxu0 0.0
        %2693 = vmatpush1.msra.mxu0 0.0
        %2694 = vmatprep.subr.mxu0 0.0
        %2695 = vmatpush1.msra.mxu0 0.0
        %2696 = vmatprep.subr.mxu0 0.0
        %2697 = vmatpush1.msra.mxu0 0.0
        %2698 = vmatprep.subr.mxu0 0.0
        %2699 = vmatpush1.msra.mxu0 0.0
        %2700 = vmatprep.subr.mxu0 0.0
        %2701 = vmatpush1.msra.mxu0 0.0
        %2702 = vmatprep.subr.mxu0 0.0
        %2703 = vmatpush1.msra.mxu0 0.0
        %2704 = vmatprep.subr.mxu0 0.0
        %2705 = vmatpush1.msra.mxu0 0.0
        %2706 = vmatprep.subr.mxu0 0.0
        %2707 = vmatpush1.msra.mxu0 0.0
        %2708 = vmatprep.mubr.f32.mxu0 0.0
        %2709 = vmatmul.mubr.f32.gmra.mrb[0].mxu0 %v2639
        %v2710 = vpop.f32.mrb[0].mxu0
        %v2711 = vadd.f32 %v2636, %v2710
        %v2712 = vpop.f32.mrb[0].mxu0
        %2713 = vmatprep.mubr.f32.mxu0 0.0
        %2714 = vmatmul.mubr.f32.gmra.mrb[0].mxu0 %v2642
        %v2715 = vpop.f32.mrb[0].mxu0
        %v2716 = vadd.f32 %v2636, %v2715
        %v2717 = vpop.f32.mrb[0].mxu0
        %2718 = vdwg.mxu0
        %v2719 = vmax.f32 %v2711, 0.0
        %v2720 = vmax.f32 %v2716, 0.0
        %v2721 = vld [vmem:[%s11] sm:$0x1]
        %v2723 = vlaneseq
        %v2724 = vshrl.u32 %v2723, 7
        %v2725 = vsub.s32 0, %v2724
        %v2726 = vrot.slane %v2721, %v2725
        %v2728 = vmul.f32 %v2719, %v2726
        %v2729 = vmul.f32 %v2720, %v2726
        %v2730 = vld [vmem:[%s12] sm:$0x1]
        %v2732 = vlaneseq
        %v2733 = vshrl.u32 %v2732, 7
        %v2734 = vsub.s32 0, %v2733
        %v2735 = vrot.slane %v2730, %v2734
        %v2737 = vadd.f32 %v2728, %v2735
        %v2738 = vadd.f32 %v2729, %v2735
        %v2739 = vsel %vm564, %v2737, 0.0
        %v2740 = vsel %vm564, %v2738, 0.0
        %v2741 = vadd.f32 %v2739, %v2740
        %v2742 = vrot.slane %v2741, 4
        %v2743 = vadd.f32 %v2741, %v2742
        %v2744 = vrot.slane %v2743, 2
        %v2745 = vadd.f32 %v2743, %v2744
        %v2746 = vrot.slane %v2745, 1
        %v2747 = vadd.f32 %v2745, %v2746
        %v2748 = vrcp.pop 16.0
        %v2749 = vmul.f32 %v2747, %v2748
        %v2750 = vld [vmem:[%s13] sm:$0xff]
        %v2751 = vld [vmem:[%s13 + $0x8] sm:$0xff]
        %v2752 = vld [vmem:[%s13 + $0x10] sm:$0xff]
        %v2753 = vld [vmem:[%s13 + $0x18] sm:$0xff]
        %v2754 = vld [vmem:[%s13 + $0x20] sm:$0xff]
        %v2755 = vld [vmem:[%s13 + $0x28] sm:$0xff]
        %v2756 = vld [vmem:[%s13 + $0x30] sm:$0xff]
        %v2757 = vld [vmem:[%s13 + $0x38] sm:$0xff]
        %v2758 = vld [vmem:[%s14] sm:$0x1]
        %v2760 = vsel %vm564, %v2749, 0
        %2762 = vmatprep.subr.mxu0 0.0
        %2763 = vmatpush1.msra.mxu0 %v2750
        %2764 = vmatprep.subr.mxu0 0.0
        %2765 = vmatpush1.msra.mxu0 %v2751
        %2766 = vmatprep.subr.mxu0 0.0
        %2767 = vmatpush1.msra.mxu0 %v2752
        %2768 = vmatprep.subr.mxu0 0.0
        %2769 = vmatpush1.msra.mxu0 %v2753
        %2770 = vmatprep.subr.mxu0 0.0
        %2771 = vmatpush1.msra.mxu0 %v2754
        %2772 = vmatprep.subr.mxu0 0.0
        %2773 = vmatpush1.msra.mxu0 %v2755
        %2774 = vmatprep.subr.mxu0 0.0
        %2775 = vmatpush1.msra.mxu0 %v2756
        %2776 = vmatprep.subr.mxu0 0.0
        %2777 = vmatpush1.msra.mxu0 %v2757
        %2778 = vmatprep.subr.mxu0 0.0
        %2779 = vmatpush1.msra.mxu0 0.0
        %2780 = vmatprep.subr.mxu0 0.0
        %2781 = vmatpush1.msra.mxu0 0.0
        %2782 = vmatprep.subr.mxu0 0.0
        %2783 = vmatpush1.msra.mxu0 0.0
        %2784 = vmatprep.subr.mxu0 0.0
        %2785 = vmatpush1.msra.mxu0 0.0
        %2786 = vmatprep.subr.mxu0 0.0
        %2787 = vmatpush1.msra.mxu0 0.0
        %2788 = vmatprep.subr.mxu0 0.0
        %2789 = vmatpush1.msra.mxu0 0.0
        %2790 = vmatprep.subr.mxu0 0.0
        %2791 = vmatpush1.msra.mxu0 0.0
        %2792 = vmatprep.subr.mxu0 0.0
        %2793 = vmatpush1.msra.mxu0 0.0
        %2794 = vmatprep.subr.mxu0 0.0
        %2795 = vmatpush1.msra.mxu0 0.0
        %2796 = vmatprep.subr.mxu0 0.0
        %2797 = vmatpush1.msra.mxu0 0.0
        %2798 = vmatprep.subr.mxu0 0.0
        %2799 = vmatpush1.msra.mxu0 0.0
        %2800 = vmatprep.subr.mxu0 0.0
        %2801 = vmatpush1.msra.mxu0 0.0
        %2802 = vmatprep.subr.mxu0 0.0
        %2803 = vmatpush1.msra.mxu0 0.0
        %2804 = vmatprep.subr.mxu0 0.0
        %2805 = vmatpush1.msra.mxu0 0.0
        %2806 = vmatprep.subr.mxu0 0.0
        %2807 = vmatpush1.msra.mxu0 0.0
        %2808 = vmatprep.subr.mxu0 0.0
        %2809 = vmatpush1.msra.mxu0 0.0
        %2810 = vmatprep.subr.mxu0 0.0
        %2811 = vmatpush1.msra.mxu0 0.0
        %2812 = vmatprep.subr.mxu0 0.0
        %2813 = vmatpush1.msra.mxu0 0.0
        %2814 = vmatprep.subr.mxu0 0.0
        %2815 = vmatpush1.msra.mxu0 0.0
        %2816 = vmatprep.subr.mxu0 0.0
        %2817 = vmatpush1.msra.mxu0 0.0
        %2818 = vmatprep.subr.mxu0 0.0
        %2819 = vmatpush1.msra.mxu0 0.0
        %2820 = vmatprep.subr.mxu0 0.0
        %2821 = vmatpush1.msra.mxu0 0.0
        %2822 = vmatprep.subr.mxu0 0.0
        %2823 = vmatpush1.msra.mxu0 0.0
        %2824 = vmatprep.subr.mxu0 0.0
        %2825 = vmatpush1.msra.mxu0 0.0
        %2826 = vmatprep.mubr.f32.mxu0 0.0
        %2827 = vmatmul.mubr.f32.gmra.mrb[0].mxu0 %v2760
        %v2828 = vpop.f32.mrb[0].mxu0
        %v2829 = vadd.f32 %v2758, %v2828
        %v2830 = vpop.f32.mrb[0].mxu0
        %2831 = vdwg.mxu0
        %v2832 = vmax.f32 %v2829, 0.0
        %v2833 = vld [vmem:[%s15] sm:$0xff]
        %v2834 = vld [vmem:[%s15 + $0x8] sm:$0xff]
        %v2835 = vld [vmem:[%s15 + $0x10] sm:$0xff]
        %v2836 = vld [vmem:[%s15 + $0x18] sm:$0xff]
        %v2837 = vld [vmem:[%s15 + $0x20] sm:$0xff]
        %v2838 = vld [vmem:[%s15 + $0x28] sm:$0xff]
        %v2839 = vld [vmem:[%s15 + $0x30] sm:$0xff]
        %v2840 = vld [vmem:[%s15 + $0x38] sm:$0xff]
        %v2841 = vld [vmem:[%s15 + $0x40] sm:$0xff]
        %v2842 = vld [vmem:[%s15 + $0x48] sm:$0xff]
        %v2843 = vld [vmem:[%s15 + $0x50] sm:$0xff]
        %v2844 = vld [vmem:[%s15 + $0x58] sm:$0xff]
        %v2845 = vld [vmem:[%s15 + $0x60] sm:$0xff]
        %v2846 = vld [vmem:[%s15 + $0x68] sm:$0xff]
        %v2847 = vld [vmem:[%s15 + $0x70] sm:$0xff]
        %v2848 = vld [vmem:[%s15 + $0x78] sm:$0xff]
        %v2849 = vld [vmem:[%s16] sm:$0x1]
        %2850 = vmatprep.subr.mxu0 0.0
        %2851 = vmatpush1.msra.mxu0 %v2833
        %2852 = vmatprep.subr.mxu0 0.0
        %2853 = vmatpush1.msra.mxu0 %v2834
        %2854 = vmatprep.subr.mxu0 0.0
        %2855 = vmatpush1.msra.mxu0 %v2835
        %2856 = vmatprep.subr.mxu0 0.0
        %2857 = vmatpush1.msra.mxu0 %v2836
        %2858 = vmatprep.subr.mxu0 0.0
        %2859 = vmatpush1.msra.mxu0 %v2837
        %2860 = vmatprep.subr.mxu0 0.0
        %2861 = vmatpush1.msra.mxu0 %v2838
        %2862 = vmatprep.subr.mxu0 0.0
        %2863 = vmatpush1.msra.mxu0 %v2839
        %2864 = vmatprep.subr.mxu0 0.0
        %2865 = vmatpush1.msra.mxu0 %v2840
        %2866 = vmatprep.subr.mxu0 0.0
        %2867 = vmatpush1.msra.mxu0 %v2841
        %2868 = vmatprep.subr.mxu0 0.0
        %2869 = vmatpush1.msra.mxu0 %v2842
        %2870 = vmatprep.subr.mxu0 0.0
        %2871 = vmatpush1.msra.mxu0 %v2843
        %2872 = vmatprep.subr.mxu0 0.0
        %2873 = vmatpush1.msra.mxu0 %v2844
        %2874 = vmatprep.subr.mxu0 0.0
        %2875 = vmatpush1.msra.mxu0 %v2845
        %2876 = vmatprep.subr.mxu0 0.0
        %2877 = vmatpush1.msra.mxu0 %v2846
        %2878 = vmatprep.subr.mxu0 0.0
        %2879 = vmatpush1.msra.mxu0 %v2847
        %2880 = vmatprep.subr.mxu0 0.0
        %2881 = vmatpush1.msra.mxu0 %v2848
        %2882 = vmatprep.subr.mxu0 0.0
        %2883 = vmatpush1.msra.mxu0 0.0
        %2884 = vmatprep.subr.mxu0 0.0
        %2885 = vmatpush1.msra.mxu0 0.0
        %2886 = vmatprep.subr.mxu0 0.0
        %2887 = vmatpush1.msra.mxu0 0.0
        %2888 = vmatprep.subr.mxu0 0.0
        %2889 = vmatpush1.msra.mxu0 0.0
        %2890 = vmatprep.subr.mxu0 0.0
        %2891 = vmatpush1.msra.mxu0 0.0
        %2892 = vmatprep.subr.mxu0 0.0
        %2893 = vmatpush1.msra.mxu0 0.0
        %2894 = vmatprep.subr.mxu0 0.0
        %2895 = vmatpush1.msra.mxu0 0.0
        %2896 = vmatprep.subr.mxu0 0.0
        %2897 = vmatpush1.msra.mxu0 0.0
        %2898 = vmatprep.subr.mxu0 0.0
        %2899 = vmatpush1.msra.mxu0 0.0
        %2900 = vmatprep.subr.mxu0 0.0
        %2901 = vmatpush1.msra.mxu0 0.0
        %2902 = vmatprep.subr.mxu0 0.0
        %2903 = vmatpush1.msra.mxu0 0.0
        %2904 = vmatprep.subr.mxu0 0.0
        %2905 = vmatpush1.msra.mxu0 0.0
        %2906 = vmatprep.subr.mxu0 0.0
        %2907 = vmatpush1.msra.mxu0 0.0
        %2908 = vmatprep.subr.mxu0 0.0
        %2909 = vmatpush1.msra.mxu0 0.0
        %2910 = vmatprep.subr.mxu0 0.0
        %2911 = vmatpush1.msra.mxu0 0.0
        %2912 = vmatprep.subr.mxu0 0.0
        %2913 = vmatpush1.msra.mxu0 0.0
        %2914 = vmatprep.mubr.f32.mxu0 0.0
        %2915 = vmatmul.mubr.f32.gmra.mrb[0].mxu0 %v2832
        %v2916 = vpop.f32.mrb[0].mxu0
        %v2917 = vadd.f32 %v2849, %v2916
        %v2918 = vpop.f32.mrb[0].mxu0
        %2919 = vdwg.mxu0
        %v2920 = vxor.u32 %v2917, 2147483648
        %v2921 = vmul.f32 %v2920, 1.442695
        %v2922 = vpow.pop %v2921
        %v2923 = vadd.f32 %v2922, 1.0
        %v2924 = vrcp.pop %v2923
        %v2925 = vmul.f32 1.0, %v2924
        %v2926 = vlaneseq
        %v2927 = vshrl.u32 %v2926, 7
        %v2928 = vsub.s32 0, %v2927
        %v2929 = vrot.slane %v2925, %v2928
        %v2930 = vmul.f32 %v2737, %v2929
        %v2931 = vmul.f32 %v2738, %v2929
        %v2932 = vadd.f32 %v2930, %v547
        %v2933 = vadd.f32 %v2931, %v548
        %2934 = vst.msk [vmem:[%s541] sm:$0xff] %vm564, %v2932
        %2935 = vst.msk [vmem:[%s541 + $0x8] sm:$0xff] %vm564, %v2933
        %s2936 = sand.u32 %s401, 1
        %s2937 = scalar_lea.sflag [#allocation3], %s2936
        %s2938 = sand.u32 %s401, 1
        %s2939 = smul.addr %s2938, 16
        %s2940 = scalar_lea.vmem [#allocation2], %s2939
        // Predicated region
        $region89: #{tpu_custom_call.1} parent=87 // pred_check
          %p2941 = pneg %p411
        $region90: #{tpu_custom_call.1} parent=87 // pred_check_branch
          %2943 = sbr.rel (%p2941) target = $region92
        $region91: #{tpu_custom_call.1} parent=87 // pred_region
          %s2945 = ssub.s32 256, 256
          %2946 = vsyncadd %s2937, %s2945
          %s2947 = smul.addr %s31, 2
          %s2948 = smul.addr %s2947, 128
          %s2949 = scalar_lea.hbm %s17, %s2948
          %s2950 = sshll.u32 %s2940, 4
          %s2951 = int_to_ptr.vmem [resolvable:$true] %s2950
          %2956 = dma.vmem_to_hbm [thread:$0]  %s2951, 256, %s2949, %s2937, 128, 128, 8
        $region92: #{tpu_custom_call.1} parent=87 // pred_fallthru
          _
      $region88: #{tpu_custom_call.1} parent=5 // pred_fallthru
        _
      %p2957 = scmp.le.s32.totalorder 2, %s26
      // Predicated region
      $region93: #{tpu_custom_call.1} parent=5 // pred_check
        %p2958 = pneg %p2957
      $region94: #{tpu_custom_call.1} parent=5 // pred_check_branch
        %2960 = sbr.rel (%p2958) target = $region96
      $region95: #{tpu_custom_call.1} parent=5 // pred_region
        %s2961 = ssub.s32 %s26, 2
        // Predicated region
        $region97: #{tpu_custom_call.1} parent=95 // pred_check
          %p2962 = pneg %p417
        $region98: #{tpu_custom_call.1} parent=95 // pred_check_branch
          %2964 = sbr.rel (%p2962) target = $region100
        $region99: #{tpu_custom_call.1} parent=95 // pred_region
          %s2965 = sand.u32 %s402, 1
          %s2966 = scalar_lea.sflag [#allocation3], %s2965
          %s2967 = sand.u32 %s402, 1
          %s2968 = smul.addr %s2967, 16
          %s2969 = scalar_lea.vmem [#allocation2], %s2968
          %2970 = dma.done %s2966, 256
        $region100: #{tpu_custom_call.1} parent=95 // pred_fallthru
          _
      $region96: #{tpu_custom_call.1} parent=5 // pred_fallthru
        _
    $region6: #{tpu_custom_call.1} parent=1 // loop_footer
      %s30 = sadd.s32 1, %s26
    $region7: #{tpu_custom_call.1} parent=1 // loop_footer_branch
      %25 = sbr.rel target = $region3
    $region8: #{tpu_custom_call.1} parent=1 // loop_exit
      _
    %2971 = vsyncpa [#allocation3], 1
    %s2972 = scalar_lea.sflag [#allocation3], 1
    %2973 = vsyncpa %s2972, 1

</llo_original>
